<compile_context>
chip_gen: v7x
topology: tpu7x:2x2x1
jax: 0.10.0
libtpu: 0.0.40
codegen_flags: <defaults>
</compile_context>

<pallas_src>
import functools

import jax
import jax.numpy as jnp
from jax.experimental import pallas as pl
from jax.experimental.pallas import tpu as pltpu

HP = 128  # lane-padded block width (hidden / latent / action all padded to one 128-lane vreg)


# ----------------------------------------------------------------------------
# Fused per-timestep kernel (grid axis 0 = time, serial recurrence)
# ----------------------------------------------------------------------------
def _vrnn_seq_kernel(x_ref, a_ref,
                     w_enc_ref, b_enc_ref,
                     w_head_ref, b_head_ref,
                     w_in_ref, w_hh_ref, b_gate_ref,
                     w_out_ref, b_out_ref,
                     z_ref, pred_ref,
                     h_ref, c_ref,
                     *, nz_dis):
    t = pl.program_id(0)

    @pl.when(t == 0)
    def _init():
        # TODO(synk): reference passes an undefined `hs` at t==0; zeros match decode()'s hs=None.
        h_ref[...] = jnp.zeros_like(h_ref)
        c_ref[...] = jnp.zeros_like(c_ref)

    x = x_ref[0]      # (Bp, flat)   current frame, flattened
    act = a_ref[0]    # (Bp, 128)    action, zero-padded lanes

    # ---- encoder trunk + fused (z_pc | z_pd) heads: two wide MXU matmuls -----------
    e = jnp.tanh(jnp.dot(x, w_enc_ref[...], preferred_element_type=jnp.float32)
                 + b_enc_ref[...])
    heads = jnp.dot(e, w_head_ref[...], preferred_element_type=jnp.float32) + b_head_ref[...]
    pc = heads[:, :HP]            # [mu | raw_sigma | pad]    (128-lane aligned slice)
    alpha = heads[:, HP:2 * HP]   # [alpha logits | pad]

    # ---- eval-mode latent samples ---------------------------------------------------
    # continuous: sample_normal(train=False) == mu (lanes 0:nz_con of pc)
    # discrete:   gumbel-softmax without noise == softmax over the real categories
    lane = jax.lax.broadcasted_iota(jnp.int32, alpha.shape, 1)
    valid = lane < nz_dis
    a_m = jnp.where(valid, alpha, -1e30)
    a_max = jnp.max(a_m, axis=-1, keepdims=True)
    ex = jnp.where(valid, jnp.exp(a_m - a_max), 0.0)
    cat = ex * pl.reciprocal(jnp.sum(ex, axis=-1, keepdims=True), approx=True)

    # ---- recurrent decoder: fused LSTM gates (one K=384 matmul + one K=128 matmul) --
    xin = jnp.concatenate([pc, cat, act], axis=-1)                 # (Bp, 3*128)
    gates = (jnp.dot(xin, w_in_ref[...], preferred_element_type=jnp.float32)
             + jnp.dot(h_ref[...], w_hh_ref[...], preferred_element_type=jnp.float32)
             + b_gate_ref[...])                                    # (Bp, 4*128), gate blocks 128-aligned
    i_g = jax.nn.sigmoid(gates[:, 0 * HP:1 * HP])
    f_g = jax.nn.sigmoid(gates[:, 1 * HP:2 * HP])
    g_g = jnp.tanh(gates[:, 2 * HP:3 * HP])
    o_g = jax.nn.sigmoid(gates[:, 3 * HP:4 * HP])
    c_new = f_g * c_ref[...] + i_g * g_g
    h_new = o_g * jnp.tanh(c_new)
    c_ref[...] = c_new
    h_ref[...] = h_new

    # ---- image head (dense + sigmoid stand-in for the deconv decoder) ---------------
    pred = jax.nn.sigmoid(jnp.dot(h_new, w_out_ref[...], preferred_element_type=jnp.float32)
                          + b_out_ref[...])

    # constant output block index -> VMEM-resident; the last timestep's write wins,
    # matching the reference eval return of the final (z, pred).
    z_ref[...] = jnp.concatenate([pc, cat], axis=-1)
    pred_ref[...] = pred


# ----------------------------------------------------------------------------
# Wrapper: layout plumbing + single pallas_call over the whole sequence
# ----------------------------------------------------------------------------
def vrnn_forward(pp, imseq, actions, cfg):
    B, T = imseq.shape[0], imseq.shape[1]
    C, H, W = cfg['imdim']
    flat = C * H * W
    t_steps = T - 1
    nz_con = cfg['nz_con'][0]
    nz_dis = cfg['nz_dis'][0][0]
    n_act = cfg['n_actions']
    bp = max(8, ((B + 7) // 8) * 8)   # sublane-padded batch

    # time-major (T-1, Bp, feat); batch padded to 8 sublanes, actions to 128 lanes
    x = jnp.transpose(imseq.reshape(B, T, flat)[:, :t_steps].astype(jnp.float32), (1, 0, 2))
    x = jnp.pad(x, ((0, 0), (0, bp - B), (0, 0)))
    a = jnp.transpose(actions[:, :t_steps].astype(jnp.float32), (1, 0, 2))
    a = jnp.pad(a, ((0, 0), (0, bp - B), (0, HP - n_act)))

    kernel = functools.partial(_vrnn_seq_kernel, nz_dis=nz_dis)

    z_pack, pred = pl.pallas_call(
        kernel,
        out_shape=(jax.ShapeDtypeStruct((bp, 2 * HP), jnp.float32),
                   jax.ShapeDtypeStruct((bp, flat), jnp.float32)),
        grid_spec=pltpu.PrefetchScalarGridSpec(
            num_scalar_prefetch=0,
            grid=(t_steps,),
            in_specs=[
                # per-step streamed inputs
                pl.BlockSpec((1, bp, flat), lambda t: (t, 0, 0)),
                pl.BlockSpec((1, bp, HP), lambda t: (t, 0, 0)),
                # weights: constant block index -> fetched once, VMEM-resident
                pl.BlockSpec(pp['w_enc'].shape, lambda t: (0, 0)),
                pl.BlockSpec(pp['b_enc'].shape, lambda t: (0, 0)),
                pl.BlockSpec(pp['w_head'].shape, lambda t: (0, 0)),
                pl.BlockSpec(pp['b_head'].shape, lambda t: (0, 0)),
                pl.BlockSpec(pp['w_in'].shape, lambda t: (0, 0)),
                pl.BlockSpec(pp['w_hh'].shape, lambda t: (0, 0)),
                pl.BlockSpec(pp['b_gate'].shape, lambda t: (0, 0)),
                pl.BlockSpec(pp['w_out'].shape, lambda t: (0, 0)),
                pl.BlockSpec(pp['b_out'].shape, lambda t: (0, 0)),
            ],
            out_specs=(pl.BlockSpec((bp, 2 * HP), lambda t: (0, 0)),
                       pl.BlockSpec((bp, flat), lambda t: (0, 0))),
            scratch_shapes=[pltpu.VMEM((bp, HP), jnp.float32),    # LSTM h (persists over grid)
                            pltpu.VMEM((bp, HP), jnp.float32)],   # LSTM c
        ),
        compiler_params=pltpu.CompilerParams(
            dimension_semantics=("arbitrary",),   # time recurrence is inherently serial
            # Working set is ~4 MiB, well under v7x's 64 MiB VMEM; no vmem_limit override needed.
        ),
    )(x, a, pp['w_enc'], pp['b_enc'], pp['w_head'], pp['b_head'],
      pp['w_in'], pp['w_hh'], pp['b_gate'], pp['w_out'], pp['b_out'])

    # unpack z = cat([norm_sample, cat_sample]) from the padded lane layout
    z = jnp.concatenate([z_pack[:B, :nz_con], z_pack[:B, HP:HP + nz_dis]], axis=-1)
    return z, pred[:B]


# ----------------------------------------------------------------------------
# Parameters: logical (PyTorch-sized) weights + exact zero-padded kernel layout
# ----------------------------------------------------------------------------
def _uniform(key, shape, scale):
    return jax.random.uniform(key, shape, jnp.float32, -scale, scale)


def init_logical_params(key, cfg):
    C, H, W = cfg['imdim']
    flat = C * H * W
    edim = cfg['enc_dim']
    nz_con = cfg['nz_con'][0]
    nz_dis = cfg['nz_dis'][0][0]
    hid = cfg['hidden']
    n_act = cfg['n_actions']
    z_dim = nz_con + nz_dis

    ks = iter(jax.random.split(key, 13))
    se, sh, sl = 1.0 / flat ** 0.5, 1.0 / edim ** 0.5, 1.0 / hid ** 0.5
    return {
        'w_enc': _uniform(next(ks), (flat, edim), se),
        'b_enc': _uniform(next(ks), (edim,), se),
        'w_mu': _uniform(next(ks), (edim, nz_con), sh),
        'b_mu': _uniform(next(ks), (nz_con,), sh),
        'w_sig': _uniform(next(ks), (edim, nz_con), sh),   # z_pc sigma head (unused by eval sample)
        'b_sig': _uniform(next(ks), (nz_con,), sh),
        'w_alpha': _uniform(next(ks), (edim, nz_dis), sh),
        'b_alpha': _uniform(next(ks), (nz_dis,), sh),
        'w_ih': _uniform(next(ks), (z_dim + n_act, 4 * hid), sl),
        'w_hh': _uniform(next(ks), (hid, 4 * hid), sl),
        'b_lstm': _uniform(next(ks), (4 * hid,), sl),      # b_ih + b_hh folded into one bias
        'w_dec': _uniform(next(ks), (hid, flat), sl),
        'b_dec': _uniform(next(ks), (flat,), sl),
    }


def pad_params(lp, cfg):
    """Re-layout logical weights into 128-lane aligned blocks. Padded rows/cols are zero,
    and phantom hidden lanes provably stay zero, so the padded model is numerically exact."""
    nz_con = cfg['nz_con'][0]
    nz_dis = cfg['nz_dis'][0][0]
    hid = cfg['hidden']
    n_act = cfg['n_actions']
    edim = cfg['enc_dim']
    C, H, W = cfg['imdim']
    flat = C * H * W

    def gate_pad_cols(w):  # (..., 4*hid) -> (..., 4*HP): each gate block padded to 128 lanes
        out = jnp.zeros(w.shape[:-1] + (4 * HP,), jnp.float32)
        for g in range(4):
            out = out.at[..., g * HP:g * HP + hid].set(w[..., g * hid:(g + 1) * hid])
        return out

    # fused encoder heads: [ mu | sigma | pad ]  [ alpha | pad ]
    w_head = jnp.zeros((edim, 2 * HP), jnp.float32)
    w_head = w_head.at[:, 0:nz_con].set(lp['w_mu'])
    w_head = w_head.at[:, nz_con:2 * nz_con].set(lp['w_sig'])
    w_head = w_head.at[:, HP:HP + nz_dis].set(lp['w_alpha'])
    b_head = jnp.zeros((1, 2 * HP), jnp.float32)
    b_head = b_head.at[0, 0:nz_con].set(lp['b_mu'])
    b_head = b_head.at[0, nz_con:2 * nz_con].set(lp['b_sig'])
    b_head = b_head.at[0, HP:HP + nz_dis].set(lp['b_alpha'])

    # decoder LSTM input weights scattered into the [pc | cat | action] lane blocks
    w_ih_p = gate_pad_cols(lp['w_ih'])
    w_in = jnp.zeros((3 * HP, 4 * HP), jnp.float32)
    w_in = w_in.at[0:nz_con, :].set(w_ih_p[0:nz_con])
    w_in = w_in.at[HP:HP + nz_dis, :].set(w_ih_p[nz_con:nz_con + nz_dis])
    w_in = w_in.at[2 * HP:2 * HP + n_act, :].set(w_ih_p[nz_con + nz_dis:])

    w_hh = jnp.zeros((HP, 4 * HP), jnp.float32).at[0:hid, :].set(gate_pad_cols(lp['w_hh']))
    b_gate = gate_pad_cols(lp['b_lstm'][None, :])
    w_out = jnp.zeros((HP, flat), jnp.float32).at[0:hid, :].set(lp['w_dec'])

    # TODO(synk): weights could be stored bf16 on v6e/v7x to halve the one-time weight DMA.
    return {
        'w_enc': lp['w_enc'], 'b_enc': lp['b_enc'][None, :],
        'w_head': w_head, 'b_head': b_head,
        'w_in': w_in, 'w_hh': w_hh, 'b_gate': b_gate,
        'w_out': w_out, 'b_out': lp['b_dec'][None, :],
    }


# ----------------------------------------------------------------------------
# Pure-JAX reference (unpadded), used only to validate the kernel
# ----------------------------------------------------------------------------
def vrnn_reference(lp, imseq, actions, cfg):
    B, T = imseq.shape[0], imseq.shape[1]
    C, H, W = cfg['imdim']
    flat = C * H * W
    hid = cfg['hidden']
    x = imseq.reshape(B, T, flat).astype(jnp.float32)
    h = jnp.zeros((B, hid), jnp.float32)
    c = jnp.zeros((B, hid), jnp.float32)
    z = pred = None
    for t in range(T - 1):
        e = jnp.tanh(x[:, t] @ lp['w_enc'] + lp['b_enc'])
        mu = e @ lp['w_mu'] + lp['b_mu']
        alpha = e @ lp['w_alpha'] + lp['b_alpha']
        cat = jax.nn.softmax(alpha, axis=-1)
        z = jnp.concatenate([mu, cat], axis=-1)
        xin = jnp.concatenate([z, actions[:, t].astype(jnp.float32)], axis=-1)
        gates = xin @ lp['w_ih'] + h @ lp['w_hh'] + lp['b_lstm']
        i_g = jax.nn.sigmoid(gates[:, 0 * hid:1 * hid])
        f_g = jax.nn.sigmoid(gates[:, 1 * hid:2 * hid])
        g_g = jnp.tanh(gates[:, 2 * hid:3 * hid])
        o_g = jax.nn.sigmoid(gates[:, 3 * hid:4 * hid])
        c = f_g * c + i_g * g_g
        h = o_g * jnp.tanh(c)
        pred = jax.nn.sigmoid(h @ lp['w_dec'] + lp['b_dec'])
    return z, pred


# ----------------------------------------------------------------------------
if __name__ == "__main__":
    cfg = dict(
        imdim=(4, 16, 16),   # (C, H, W) -> flat = 1024 (lane-aligned)
        n_actions=3,
        nz_con=[8],          # continuous latent dim  (has_con)
        nz_dis=[[10]],       # one categorical group of 10 (has_dis)
        enc_dim=256,
        hidden=32,           # decoder LSTM hidden (lane-padded to 128 inside the kernel)
    )
    B, T = 2, 8
    flat = cfg['imdim'][0] * cfg['imdim'][1] * cfg['imdim'][2]

    key = jax.random.PRNGKey(0)
    k_img, k_act, k_prm = jax.random.split(key, 3)
    imseq = jax.nn.sigmoid(jax.random.normal(k_img, (B, T) + cfg['imdim'], jnp.float32))
    actions = jax.random.normal(k_act, (B, T, cfg['n_actions']), jnp.float32)

    lp = init_logical_params(k_prm, cfg)
    pp = pad_params(lp, cfg)

    fwd = jax.jit(lambda prm, x, a: vrnn_forward(prm, x, a, cfg))
    z, pred = fwd(pp, imseq, actions)
    jax.block_until_ready((z, pred))

    assert z.shape == (B, cfg['nz_con'][0] + cfg['nz_dis'][0][0])
    assert pred.shape == (B, flat)

    # numerical check against the unpadded pure-JAX reference
    z_ref, pred_ref = vrnn_reference(lp, imseq, actions, cfg)
    assert float(jnp.max(jnp.abs(z - z_ref))) < 5e-2
    assert float(jnp.max(jnp.abs(pred - pred_ref))) < 5e-2

    print("KERNEL_OK")
</pallas_src>

<mosaic_0001>
module attributes {stable_mosaic.version = 11 : i64} {
  func.func @_vrnn_seq_kernel(%arg0: i32, %arg1: memref<1x8x1024xf32, #tpu.memory_space<vmem>>, %arg2: memref<1x8x128xf32, #tpu.memory_space<vmem>>, %arg3: memref<1024x256xf32, #tpu.memory_space<vmem>>, %arg4: memref<1x256xf32, #tpu.memory_space<vmem>>, %arg5: memref<256x256xf32, #tpu.memory_space<vmem>>, %arg6: memref<1x256xf32, #tpu.memory_space<vmem>>, %arg7: memref<384x512xf32, #tpu.memory_space<vmem>>, %arg8: memref<128x512xf32, #tpu.memory_space<vmem>>, %arg9: memref<1x512xf32, #tpu.memory_space<vmem>>, %arg10: memref<128x1024xf32, #tpu.memory_space<vmem>>, %arg11: memref<1x1024xf32, #tpu.memory_space<vmem>>, %arg12: memref<8x256xf32, #tpu.memory_space<vmem>>, %arg13: memref<8x1024xf32, #tpu.memory_space<vmem>>, %arg14: memref<8x128xf32, #tpu.memory_space<vmem>>, %arg15: memref<8x128xf32, #tpu.memory_space<vmem>>) attributes {dimension_semantics = [#tpu.dimension_semantics<arbitrary>], iteration_bounds = array<i64: 7>, scalar_prefetch = 0 : i64, scratch_operands = 2 : i64, tpu.core_type = #tpu.core_type<tc>, window_params = [{transform_indices = @transform_0, window_bounds = array<i64: 1, 8, 1024>}, {transform_indices = @transform_1, window_bounds = array<i64: 1, 8, 128>}, {pipeline_mode = #tpu.pipeline_mode<synchronous>, transform_indices = @transform_2, window_bounds = array<i64: 1024, 256>}, {pipeline_mode = #tpu.pipeline_mode<synchronous>, transform_indices = @transform_3, window_bounds = array<i64: 1, 256>}, {pipeline_mode = #tpu.pipeline_mode<synchronous>, transform_indices = @transform_4, window_bounds = array<i64: 256, 256>}, {pipeline_mode = #tpu.pipeline_mode<synchronous>, transform_indices = @transform_5, window_bounds = array<i64: 1, 256>}, {pipeline_mode = #tpu.pipeline_mode<synchronous>, transform_indices = @transform_6, window_bounds = array<i64: 384, 512>}, {pipeline_mode = #tpu.pipeline_mode<synchronous>, transform_indices = @transform_7, window_bounds = array<i64: 128, 512>}, {pipeline_mode = #tpu.pipeline_mode<synchronous>, transform_indices = @transform_8, window_bounds = array<i64: 1, 512>}, {pipeline_mode = #tpu.pipeline_mode<synchronous>, transform_indices = @transform_9, window_bounds = array<i64: 128, 1024>}, {pipeline_mode = #tpu.pipeline_mode<synchronous>, transform_indices = @transform_10, window_bounds = array<i64: 1, 1024>}, {pipeline_mode = #tpu.pipeline_mode<synchronous>, transform_indices = @transform_11, window_bounds = array<i64: 8, 256>}, {pipeline_mode = #tpu.pipeline_mode<synchronous>, transform_indices = @transform_12, window_bounds = array<i64: 8, 1024>}]} {
    %c0_i32 = arith.constant 0 : i32
    %0 = arith.cmpi eq, %arg0, %c0_i32 : i32
    %1 = arith.extui %0 : i1 to i32
    %c0_i32_0 = arith.constant 0 : i32
    %2 = arith.cmpi ne, %1, %c0_i32_0 : i32
    scf.if %2 {
      %cst_48 = arith.constant 0.000000e+00 : f32
      %88 = vector.broadcast %cst_48 : f32 to vector<8x128xf32>
      %c0_49 = arith.constant 0 : index
      %c0_50 = arith.constant 0 : index
      %89 = vector.load %arg14[%c0_49, %c0_50] : memref<8x128xf32, #tpu.memory_space<vmem>>, vector<8x128xf32>
      tpu.vector_store %arg14[%c0_49, %c0_50], %88 {strides = array<i32>} : memref<8x128xf32, #tpu.memory_space<vmem>>, vector<8x128xf32>,
      %cst_51 = arith.constant 0.000000e+00 : f32
      %90 = vector.broadcast %cst_51 : f32 to vector<8x128xf32>
      %c0_52 = arith.constant 0 : index
      %c0_53 = arith.constant 0 : index
      %91 = vector.load %arg15[%c0_52, %c0_53] : memref<8x128xf32, #tpu.memory_space<vmem>>, vector<8x128xf32>
      tpu.vector_store %arg15[%c0_52, %c0_53], %90 {strides = array<i32>} : memref<8x128xf32, #tpu.memory_space<vmem>>, vector<8x128xf32>,
    } else {
    }
    %c0 = arith.constant 0 : index
    %c0_1 = arith.constant 0 : index
    %c0_2 = arith.constant 0 : index
    %3 = vector.load %arg1[%c0, %c0_1, %c0_2] : memref<1x8x1024xf32, #tpu.memory_space<vmem>>, vector<1x8x1024xf32>
    %4 = vector.shape_cast %3 : vector<1x8x1024xf32> to vector<8x1024xf32>
    %c0_3 = arith.constant 0 : index
    %c0_4 = arith.constant 0 : index
    %c0_5 = arith.constant 0 : index
    %5 = vector.load %arg2[%c0_3, %c0_4, %c0_5] : memref<1x8x128xf32, #tpu.memory_space<vmem>>, vector<1x8x128xf32>
    %6 = vector.shape_cast %5 : vector<1x8x128xf32> to vector<8x128xf32>
    %c0_6 = arith.constant 0 : index
    %c0_7 = arith.constant 0 : index
    %7 = vector.load %arg3[%c0_6, %c0_7] : memref<1024x256xf32, #tpu.memory_space<vmem>>, vector<1024x256xf32>
    %cst = arith.constant dense<0.000000e+00> : vector<8x256xf32>
    %8 = tpu.matmul %4, %7, %cst {dimension_numbers = #tpu.dot_dimension_numbers<[1], [0], [0], [1], [0, 0, 1, 1], [], []>} : vector<8x1024xf32>, vector<1024x256xf32>, vector<8x256xf32> -> vector<8x256xf32>
    %c0_8 = arith.constant 0 : index
    %c0_9 = arith.constant 0 : index
    %9 = vector.load %arg4[%c0_8, %c0_9] : memref<1x256xf32, #tpu.memory_space<vmem>>, vector<1x256xf32>
    %10 = vector.broadcast %9 : vector<1x256xf32> to vector<8x256xf32>
    %11 = arith.addf %8, %10 : vector<8x256xf32>
    %12 = math.tanh %11 : vector<8x256xf32>
    %c0_10 = arith.constant 0 : index
    %c0_11 = arith.constant 0 : index
    %13 = vector.load %arg5[%c0_10, %c0_11] : memref<256x256xf32, #tpu.memory_space<vmem>>, vector<256x256xf32>
    %cst_12 = arith.constant dense<0.000000e+00> : vector<8x256xf32>
    %14 = tpu.matmul %12, %13, %cst_12 {dimension_numbers = #tpu.dot_dimension_numbers<[1], [0], [0], [1], [0, 0, 1, 1], [], []>} : vector<8x256xf32>, vector<256x256xf32>, vector<8x256xf32> -> vector<8x256xf32>
    %c0_13 = arith.constant 0 : index
    %c0_14 = arith.constant 0 : index
    %15 = vector.load %arg6[%c0_13, %c0_14] : memref<1x256xf32, #tpu.memory_space<vmem>>, vector<1x256xf32>
    %16 = vector.broadcast %15 : vector<1x256xf32> to vector<8x256xf32>
    %17 = arith.addf %14, %16 : vector<8x256xf32>
    %18 = vector.extract_strided_slice %17 {offsets = [0, 0], sizes = [8, 128], strides = [1, 1]} : vector<8x256xf32> to vector<8x128xf32>
    %19 = vector.extract_strided_slice %17 {offsets = [0, 128], sizes = [8, 128], strides = [1, 1]} : vector<8x256xf32> to vector<8x128xf32>
    %20 = tpu.iota {dimensions = array<i32: 1>} : vector<8x128xi32>
    %c10_i32 = arith.constant 10 : i32
    %21 = vector.broadcast %c10_i32 : i32 to vector<8x128xi32>
    %22 = arith.cmpi slt, %20, %21 : vector<8x128xi32>
    %cst_15 = arith.constant -1.000000e+30 : f32
    %23 = vector.broadcast %cst_15 : f32 to vector<8x128xf32>
    %24 = arith.select %22, %19, %23 : vector<8x128xi1>, vector<8x128xf32>
    %cst_16 = arith.constant dense<0xFF800000> : vector<8xf32>
    %25 = vector.multi_reduction <maximumf>, %24, %cst_16 [1] : vector<8x128xf32> to vector<8xf32>
    %26 = vector.shape_cast %25 : vector<8xf32> to vector<8x1xf32>
    %27 = vector.broadcast %26 : vector<8x1xf32> to vector<8x128xf32>
    %28 = arith.subf %24, %27 : vector<8x128xf32>
    %29 = math.exp %28 : vector<8x128xf32>
    %cst_17 = arith.constant 0.000000e+00 : f32
    %30 = vector.broadcast %cst_17 : f32 to vector<8x128xf32>
    %31 = arith.select %22, %29, %30 : vector<8x128xi1>, vector<8x128xf32>
    %cst_18 = arith.constant dense<0.000000e+00> : vector<8xf32>
    %32 = vector.multi_reduction <add>, %31, %cst_18 [1] : vector<8x128xf32> to vector<8xf32>
    %33 = vector.shape_cast %32 : vector<8xf32> to vector<8x1xf32>
    %34 = tpu.reciprocal %33 {approx = true} : vector<8x1xf32> -> vector<8x1xf32>
    %35 = vector.broadcast %34 : vector<8x1xf32> to vector<8x128xf32>
    %36 = arith.mulf %31, %35 : vector<8x128xf32>
    %37 = tpu.concatenate %18, %36, %6 in 1 : vector<8x128xf32>, vector<8x128xf32>, vector<8x128xf32> -> vector<8x384xf32>
    %c0_19 = arith.constant 0 : index
    %c0_20 = arith.constant 0 : index
    %38 = vector.load %arg7[%c0_19, %c0_20] : memref<384x512xf32, #tpu.memory_space<vmem>>, vector<384x512xf32>
    %cst_21 = arith.constant dense<0.000000e+00> : vector<8x512xf32>
    %39 = tpu.matmul %37, %38, %cst_21 {dimension_numbers = #tpu.dot_dimension_numbers<[1], [0], [0], [1], [0, 0, 1, 1], [], []>} : vector<8x384xf32>, vector<384x512xf32>, vector<8x512xf32> -> vector<8x512xf32>
    %c0_22 = arith.constant 0 : index
    %c0_23 = arith.constant 0 : index
    %40 = vector.load %arg14[%c0_22, %c0_23] : memref<8x128xf32, #tpu.memory_space<vmem>>, vector<8x128xf32>
    %c0_24 = arith.constant 0 : index
    %c0_25 = arith.constant 0 : index
    %41 = vector.load %arg8[%c0_24, %c0_25] : memref<128x512xf32, #tpu.memory_space<vmem>>, vector<128x512xf32>
    %cst_26 = arith.constant dense<0.000000e+00> : vector<8x512xf32>
    %42 = tpu.matmul %40, %41, %cst_26 {dimension_numbers = #tpu.dot_dimension_numbers<[1], [0], [0], [1], [0, 0, 1, 1], [], []>} : vector<8x128xf32>, vector<128x512xf32>, vector<8x512xf32> -> vector<8x512xf32>
    %43 = arith.addf %39, %42 : vector<8x512xf32>
    %c0_27 = arith.constant 0 : index
    %c0_28 = arith.constant 0 : index
    %44 = vector.load %arg9[%c0_27, %c0_28] : memref<1x512xf32, #tpu.memory_space<vmem>>, vector<1x512xf32>
    %45 = vector.broadcast %44 : vector<1x512xf32> to vector<8x512xf32>
    %46 = arith.addf %43, %45 : vector<8x512xf32>
    %47 = vector.extract_strided_slice %46 {offsets = [0, 0], sizes = [8, 128], strides = [1, 1]} : vector<8x512xf32> to vector<8x128xf32>
    %48 = arith.negf %47 : vector<8x128xf32>
    %49 = math.exp %48 : vector<8x128xf32>
    %cst_29 = arith.constant 1.000000e+00 : f32
    %50 = vector.broadcast %cst_29 : f32 to vector<8x128xf32>
    %51 = arith.addf %50, %49 : vector<8x128xf32>
    %52 = arith.divf %50, %51 : vector<8x128xf32>
    %53 = vector.extract_strided_slice %46 {offsets = [0, 128], sizes = [8, 128], strides = [1, 1]} : vector<8x512xf32> to vector<8x128xf32>
    %54 = arith.negf %53 : vector<8x128xf32>
    %55 = math.exp %54 : vector<8x128xf32>
    %cst_30 = arith.constant 1.000000e+00 : f32
    %56 = vector.broadcast %cst_30 : f32 to vector<8x128xf32>
    %57 = arith.addf %56, %55 : vector<8x128xf32>
    %58 = arith.divf %56, %57 : vector<8x128xf32>
    %59 = vector.extract_strided_slice %46 {offsets = [0, 256], sizes = [8, 128], strides = [1, 1]} : vector<8x512xf32> to vector<8x128xf32>
    %60 = math.tanh %59 : vector<8x128xf32>
    %61 = vector.extract_strided_slice %46 {offsets = [0, 384], sizes = [8, 128], strides = [1, 1]} : vector<8x512xf32> to vector<8x128xf32>
    %62 = arith.negf %61 : vector<8x128xf32>
    %63 = math.exp %62 : vector<8x128xf32>
    %cst_31 = arith.constant 1.000000e+00 : f32
    %64 = vector.broadcast %cst_31 : f32 to vector<8x128xf32>
    %65 = arith.addf %64, %63 : vector<8x128xf32>
    %66 = arith.divf %64, %65 : vector<8x128xf32>
    %c0_32 = arith.constant 0 : index
    %c0_33 = arith.constant 0 : index
    %67 = vector.load %arg15[%c0_32, %c0_33] : memref<8x128xf32, #tpu.memory_space<vmem>>, vector<8x128xf32>
    %68 = arith.mulf %58, %67 : vector<8x128xf32>
    %69 = arith.mulf %52, %60 : vector<8x128xf32>
    %70 = arith.addf %68, %69 : vector<8x128xf32>
    %71 = math.tanh %70 : vector<8x128xf32>
    %72 = arith.mulf %66, %71 : vector<8x128xf32>
    %c0_34 = arith.constant 0 : index
    %c0_35 = arith.constant 0 : index
    %73 = vector.load %arg15[%c0_34, %c0_35] : memref<8x128xf32, #tpu.memory_space<vmem>>, vector<8x128xf32>
    tpu.vector_store %arg15[%c0_34, %c0_35], %70 {strides = array<i32>} : memref<8x128xf32, #tpu.memory_space<vmem>>, vector<8x128xf32>,
    %c0_36 = arith.constant 0 : index
    %c0_37 = arith.constant 0 : index
    %74 = vector.load %arg14[%c0_36, %c0_37] : memref<8x128xf32, #tpu.memory_space<vmem>>, vector<8x128xf32>
    tpu.vector_store %arg14[%c0_36, %c0_37], %72 {strides = array<i32>} : memref<8x128xf32, #tpu.memory_space<vmem>>, vector<8x128xf32>,
    %c0_38 = arith.constant 0 : index
    %c0_39 = arith.constant 0 : index
    %75 = vector.load %arg10[%c0_38, %c0_39] : memref<128x1024xf32, #tpu.memory_space<vmem>>, vector<128x1024xf32>
    %cst_40 = arith.constant dense<0.000000e+00> : vector<8x1024xf32>
    %76 = tpu.matmul %72, %75, %cst_40 {dimension_numbers = #tpu.dot_dimension_numbers<[1], [0], [0], [1], [0, 0, 1, 1], [], []>} : vector<8x128xf32>, vector<128x1024xf32>, vector<8x1024xf32> -> vector<8x1024xf32>
    %c0_41 = arith.constant 0 : index
    %c0_42 = arith.constant 0 : index
    %77 = vector.load %arg11[%c0_41, %c0_42] : memref<1x1024xf32, #tpu.memory_space<vmem>>, vector<1x1024xf32>
    %78 = vector.broadcast %77 : vector<1x1024xf32> to vector<8x1024xf32>
    %79 = arith.addf %76, %78 : vector<8x1024xf32>
    %80 = arith.negf %79 : vector<8x1024xf32>
    %81 = math.exp %80 : vector<8x1024xf32>
    %cst_43 = arith.constant 1.000000e+00 : f32
    %82 = vector.broadcast %cst_43 : f32 to vector<8x1024xf32>
    %83 = arith.addf %82, %81 : vector<8x1024xf32>
    %84 = arith.divf %82, %83 : vector<8x1024xf32>
    %85 = tpu.concatenate %18, %36 in 1 : vector<8x128xf32>, vector<8x128xf32> -> vector<8x256xf32>
    %c0_44 = arith.constant 0 : index
    %c0_45 = arith.constant 0 : index
    %86 = vector.load %arg12[%c0_44, %c0_45] : memref<8x256xf32, #tpu.memory_space<vmem>>, vector<8x256xf32>
    tpu.vector_store %arg12[%c0_44, %c0_45], %85 {strides = array<i32>} : memref<8x256xf32, #tpu.memory_space<vmem>>, vector<8x256xf32>,
    %c0_46 = arith.constant 0 : index
    %c0_47 = arith.constant 0 : index
    %87 = vector.load %arg13[%c0_46, %c0_47] : memref<8x1024xf32, #tpu.memory_space<vmem>>, vector<8x1024xf32>
    tpu.vector_store %arg13[%c0_46, %c0_47], %84 {strides = array<i32>} : memref<8x1024xf32, #tpu.memory_space<vmem>>, vector<8x1024xf32>,
    return
  }
  func.func @transform_0(%arg0: i32) -> (i32, i32, i32) {
    %c0_i32 = arith.constant 0 : i32
    %c0_i32_0 = arith.constant 0 : i32
    %c0_i32_1 = arith.constant 0 : i32
    return %arg0, %c0_i32, %c0_i32_0 : i32, i32, i32
  }
  func.func @transform_1(%arg0: i32) -> (i32, i32, i32) {
    %c0_i32 = arith.constant 0 : i32
    %c0_i32_0 = arith.constant 0 : i32
    %c0_i32_1 = arith.constant 0 : i32
    return %arg0, %c0_i32, %c0_i32_0 : i32, i32, i32
  }
  func.func @transform_2(%arg0: i32) -> (i32, i32) {
    %c0_i32 = arith.constant 0 : i32
    %c0_i32_0 = arith.constant 0 : i32
    %c0_i32_1 = arith.constant 0 : i32
    return %c0_i32, %c0_i32_0 : i32, i32
  }
  func.func @transform_3(%arg0: i32) -> (i32, i32) {
    %c0_i32 = arith.constant 0 : i32
    %c0_i32_0 = arith.constant 0 : i32
    %c0_i32_1 = arith.constant 0 : i32
    return %c0_i32, %c0_i32_0 : i32, i32
  }
  func.func @transform_4(%arg0: i32) -> (i32, i32) {
    %c0_i32 = arith.constant 0 : i32
    %c0_i32_0 = arith.constant 0 : i32
    %c0_i32_1 = arith.constant 0 : i32
    return %c0_i32, %c0_i32_0 : i32, i32
  }
  func.func @transform_5(%arg0: i32) -> (i32, i32) {
    %c0_i32 = arith.constant 0 : i32
    %c0_i32_0 = arith.constant 0 : i32
    %c0_i32_1 = arith.constant 0 : i32
    return %c0_i32, %c0_i32_0 : i32, i32
  }
  func.func @transform_6(%arg0: i32) -> (i32, i32) {
    %c0_i32 = arith.constant 0 : i32
    %c0_i32_0 = arith.constant 0 : i32
    %c0_i32_1 = arith.constant 0 : i32
    return %c0_i32, %c0_i32_0 : i32, i32
  }
  func.func @transform_7(%arg0: i32) -> (i32, i32) {
    %c0_i32 = arith.constant 0 : i32
    %c0_i32_0 = arith.constant 0 : i32
    %c0_i32_1 = arith.constant 0 : i32
    return %c0_i32, %c0_i32_0 : i32, i32
  }
  func.func @transform_8(%arg0: i32) -> (i32, i32) {
    %c0_i32 = arith.constant 0 : i32
    %c0_i32_0 = arith.constant 0 : i32
    %c0_i32_1 = arith.constant 0 : i32
    return %c0_i32, %c0_i32_0 : i32, i32
  }
  func.func @transform_9(%arg0: i32) -> (i32, i32) {
    %c0_i32 = arith.constant 0 : i32
    %c0_i32_0 = arith.constant 0 : i32
    %c0_i32_1 = arith.constant 0 : i32
    return %c0_i32, %c0_i32_0 : i32, i32
  }
  func.func @transform_10(%arg0: i32) -> (i32, i32) {
    %c0_i32 = arith.constant 0 : i32
    %c0_i32_0 = arith.constant 0 : i32
    %c0_i32_1 = arith.constant 0 : i32
    return %c0_i32, %c0_i32_0 : i32, i32
  }
  func.func @transform_11(%arg0: i32) -> (i32, i32) {
    %c0_i32 = arith.constant 0 : i32
    %c0_i32_0 = arith.constant 0 : i32
    %c0_i32_1 = arith.constant 0 : i32
    return %c0_i32, %c0_i32_0 : i32, i32
  }
  func.func @transform_12(%arg0: i32) -> (i32, i32) {
    %c0_i32 = arith.constant 0 : i32
    %c0_i32_0 = arith.constant 0 : i32
    %c0_i32_1 = arith.constant 0 : i32
    return %c0_i32, %c0_i32_0 : i32, i32
  }
}

</mosaic_0001>

<llo_original>
// kernel: _lambda_.1
$region0: #{_lambda_.1}
  #allocation0 [shape = 'u32[]', space=smem, size = 0x4, offset = 0x4, fixed_abs, tag = 'smem constant byte address 0x4 - core index']
  #allocation1 [shape = 'u32[144,128]{1,0:T(1,128)}', space=vmem, size = 0x12000, scoped, tag = 'internal scratch']
  #allocation2 [shape = 'f32[8,128]{1,0:T(8,128)}', space=vmem, size = 0x1000, scoped, tag = 'scratch operand']
  #allocation3 [shape = 'f32[8,128]{1,0:T(8,128)}', space=vmem, size = 0x1000, scoped, tag = 'scratch operand']
  %s0 = inlined_call_operand.vmem [shape: f32[7,8,1024], index: 0, kind: input, shape index: {}]
  %s1 = inlined_call_operand.vmem [shape: f32[7,8,128], index: 1, kind: input, shape index: {}]
  %s2 = inlined_call_operand.vmem [shape: f32[1024,256], index: 2, kind: input, shape index: {}]
  %s3 = inlined_call_operand.vmem [shape: f32[1,256], index: 3, kind: input, shape index: {}]
  %s4 = inlined_call_operand.hbm [shape: f32[256,256], index: 4, kind: input, shape index: {}]
  %s5 = inlined_call_operand.vmem [shape: f32[1,256], index: 5, kind: input, shape index: {}]
  %s6 = inlined_call_operand.hbm [shape: f32[384,512], index: 6, kind: input, shape index: {}]
  %s7 = inlined_call_operand.hbm [shape: f32[128,512], index: 7, kind: input, shape index: {}]
  %s8 = inlined_call_operand.vmem [shape: f32[1,512], index: 8, kind: input, shape index: {}]
  %s9 = inlined_call_operand.hbm [shape: f32[128,1024], index: 9, kind: input, shape index: {}]
  %s10 = inlined_call_operand.vmem [shape: f32[1,1024], index: 10, kind: input, shape index: {}]
  %s11 = inlined_call_operand.vmem [shape: f32[8,256], index: 11, kind: output, shape index: {0}]
  %s12 = inlined_call_operand.vmem [shape: f32[8,1024], index: 12, kind: output, shape index: {1}]
  %13 = xla_tuple %s11, %s12
  %s14 = sld [smem:[#allocation0]]
  $region105: #{_lambda_.1} parent=0
    _
  %s16 = ssub.s32 1, %s14
  %s17 = scalar_select 0, %s16, %s14
  $region1: #{_lambda_.1} parent=0
    #allocation4 [shape = 'u8[262144]{0}', space=vmem, size = 0x40000, scoped, tag = 'input window, operand 4, single buffered']
    #allocation5 [shape = 's32[2]{0}', space=sflag, size = 0x8, scoped, tag = 'scoped memory for _lambda_.1']
    #allocation6 [shape = 'u8[786432]{0}', space=vmem, size = 0xc0000, scoped, tag = 'input window, operand 6, single buffered']
    #allocation7 [shape = 's32[1]{0}', space=sflag, size = 0x4, scoped, tag = 'scoped memory for _lambda_.1']
    #allocation8 [shape = 'u8[262144]{0}', space=vmem, size = 0x40000, scoped, tag = 'input window, operand 7, single buffered']
    #allocation9 [shape = 'u8[524288]{0}', space=vmem, size = 0x80000, scoped, tag = 'input window, operand 9, single buffered']
    #allocation10 [shape = 's32[1]{0}', space=sflag, size = 0x4, scoped, tag = 'scoped memory for _lambda_.1']
    %18 = vsyncpa [#allocation5], 0
    %19 = vsyncpa [#allocation7], 0
    %20 = vsyncpa [#allocation10], 0
    loop: start=0, step=1, limit=9
    $region2: #{_lambda_.1} parent=1 // loop_pre_header
      _
    $region3: #{_lambda_.1} parent=1 // loop_header
      %s22 = sphi 0, %s26
      %p23 = scmp.ge.s32.totalorder %s22, 9
      %s32 = sphi 0, %s34
      %s35 = sphi 0, %s32
      %s36 = sphi 0, %s35
      %s52 = sphi 0, %s36
      %s58 = sphi 0, %s60
      %s61 = sphi 0, %s58
      %s62 = sphi 0, %s61
      %s78 = sphi 0, %s62
      %s82 = sphi 0, %s82
      %s84 = sphi 0, %s82
      %s85 = sphi 0, %s84
      %s99 = sphi 0, %s85
      %s103 = sphi 0, %s103
      %s105 = sphi 0, %s103
      %s106 = sphi 0, %s105
      %s120 = sphi 0, %s106
      %s124 = sphi 0, %s124
      %s126 = sphi 0, %s124
      %s127 = sphi 0, %s126
      %s141 = sphi 0, %s127
      %s145 = sphi 0, %s145
      %s147 = sphi 0, %s145
      %s148 = sphi 0, %s147
      %s162 = sphi 0, %s148
      %s166 = sphi 0, %s166
      %s168 = sphi 0, %s166
      %s169 = sphi 0, %s168
      %s183 = sphi 0, %s169
      %s187 = sphi 0, %s187
      %s189 = sphi 0, %s187
      %s190 = sphi 0, %s189
      %s204 = sphi 0, %s190
      %s208 = sphi 0, %s208
      %s210 = sphi 0, %s208
      %s211 = sphi 0, %s210
      %s225 = sphi 0, %s211
      %s229 = sphi 0, %s229
      %s231 = sphi 0, %s229
      %s232 = sphi 0, %s231
      %s246 = sphi 0, %s232
      %s250 = sphi 0, %s250
      %s252 = sphi 0, %s250
      %s253 = sphi 0, %s252
      %s267 = sphi 0, %s253
      %s271 = sphi 0, %s271
      %s273 = sphi 0, %s271
      %s274 = sphi 0, %s273
      %s288 = sphi 0, %s274
      %s292 = sphi 0, %s292
      %s294 = sphi 0, %s292
      %s295 = sphi 0, %s294
      %s309 = sphi 0, %s295
    $region4: #{_lambda_.1} parent=1 // loop_header_branch
      %25 = sbr.rel (%p23) target = $region8
    $region5: #{_lambda_.1} parent=1 // loop_body
      %s27 = ssub.s32 %s22, 1
      %s28 = ssub.s32 %s22, 2
      %s29 = sadd.s32 %s22, 1
      %s30 = ssub.s32 %s22, %s29
      %p31 = scmp.eq.s32.totalorder %s30, 0
      %s33 = sadd.s32 %s32, 1
      %s34 = scalar_select %p31, %s32, %s33
      %p37 = pneg %p31
      %p38 = scmp.eq.s32.totalorder %s22, 6
      %p39 = por %p37, %p38
      %p40 = scmp.ne.s32.totalorder %s32, %s35
      %p41 = scmp.eq.s32.totalorder %s22, 0
      %p42 = por %p40, %p41
      %p43 = scmp.ne.s32.totalorder %s32, %s35
      %p44 = scmp.eq.s32.totalorder %s27, 6
      %p45 = por %p43, %p44
      %p46 = scmp.ne.s32.totalorder %s35, %s36
      %p47 = scmp.eq.s32.totalorder %s27, 0
      %p48 = por %p46, %p47
      %p49 = scmp.ne.s32.totalorder %s35, %s36
      %p50 = scmp.eq.s32.totalorder %s28, 6
      %p51 = por %p49, %p50
      %p53 = scmp.ne.s32.totalorder %s36, %s52
      %p54 = scmp.eq.s32.totalorder %s28, 0
      %p55 = por %p53, %p54
      %s56 = ssub.s32 %s22, %s29
      %p57 = scmp.eq.s32.totalorder %s56, 0
      %s59 = sadd.s32 %s58, 1
      %s60 = scalar_select %p57, %s58, %s59
      %p63 = pneg %p57
      %p64 = scmp.eq.s32.totalorder %s22, 6
      %p65 = por %p63, %p64
      %p66 = scmp.ne.s32.totalorder %s58, %s61
      %p67 = scmp.eq.s32.totalorder %s22, 0
      %p68 = por %p66, %p67
      %p69 = scmp.ne.s32.totalorder %s58, %s61
      %p70 = scmp.eq.s32.totalorder %s27, 6
      %p71 = por %p69, %p70
      %p72 = scmp.ne.s32.totalorder %s61, %s62
      %p73 = scmp.eq.s32.totalorder %s27, 0
      %p74 = por %p72, %p73
      %p75 = scmp.ne.s32.totalorder %s61, %s62
      %p76 = scmp.eq.s32.totalorder %s28, 6
      %p77 = por %p75, %p76
      %p79 = scmp.ne.s32.totalorder %s62, %s78
      %p80 = scmp.eq.s32.totalorder %s28, 0
      %p81 = por %p79, %p80
      %s83 = sadd.s32 %s82, 1
      %p86 = scmp.eq.s32.totalorder %s22, 6
      %p87 = scmp.ne.s32.totalorder %s82, %s84
      %p88 = scmp.eq.s32.totalorder %s22, 0
      %p89 = por %p87, %p88
      %p90 = scmp.ne.s32.totalorder %s82, %s84
      %p91 = scmp.eq.s32.totalorder %s27, 6
      %p92 = por %p90, %p91
      %p93 = scmp.ne.s32.totalorder %s84, %s85
      %p94 = scmp.eq.s32.totalorder %s27, 0
      %p95 = por %p93, %p94
      %p96 = scmp.ne.s32.totalorder %s84, %s85
      %p97 = scmp.eq.s32.totalorder %s28, 6
      %p98 = por %p96, %p97
      %p100 = scmp.ne.s32.totalorder %s85, %s99
      %p101 = scmp.eq.s32.totalorder %s28, 0
      %p102 = por %p100, %p101
      %s104 = sadd.s32 %s103, 1
      %p107 = scmp.eq.s32.totalorder %s22, 6
      %p108 = scmp.ne.s32.totalorder %s103, %s105
      %p109 = scmp.eq.s32.totalorder %s22, 0
      %p110 = por %p108, %p109
      %p111 = scmp.ne.s32.totalorder %s103, %s105
      %p112 = scmp.eq.s32.totalorder %s27, 6
      %p113 = por %p111, %p112
      %p114 = scmp.ne.s32.totalorder %s105, %s106
      %p115 = scmp.eq.s32.totalorder %s27, 0
      %p116 = por %p114, %p115
      %p117 = scmp.ne.s32.totalorder %s105, %s106
      %p118 = scmp.eq.s32.totalorder %s28, 6
      %p119 = por %p117, %p118
      %p121 = scmp.ne.s32.totalorder %s106, %s120
      %p122 = scmp.eq.s32.totalorder %s28, 0
      %p123 = por %p121, %p122
      %s125 = sadd.s32 %s124, 1
      %p128 = scmp.eq.s32.totalorder %s22, 6
      %p129 = scmp.ne.s32.totalorder %s124, %s126
      %p130 = scmp.eq.s32.totalorder %s22, 0
      %p131 = por %p129, %p130
      %p132 = scmp.ne.s32.totalorder %s124, %s126
      %p133 = scmp.eq.s32.totalorder %s27, 6
      %p134 = por %p132, %p133
      %p135 = scmp.ne.s32.totalorder %s126, %s127
      %p136 = scmp.eq.s32.totalorder %s27, 0
      %p137 = por %p135, %p136
      %p138 = scmp.ne.s32.totalorder %s126, %s127
      %p139 = scmp.eq.s32.totalorder %s28, 6
      %p140 = por %p138, %p139
      %p142 = scmp.ne.s32.totalorder %s127, %s141
      %p143 = scmp.eq.s32.totalorder %s28, 0
      %p144 = por %p142, %p143
      %s146 = sadd.s32 %s145, 1
      %p149 = scmp.eq.s32.totalorder %s22, 6
      %p150 = scmp.ne.s32.totalorder %s145, %s147
      %p151 = scmp.eq.s32.totalorder %s22, 0
      %p152 = por %p150, %p151
      %p153 = scmp.ne.s32.totalorder %s145, %s147
      %p154 = scmp.eq.s32.totalorder %s27, 6
      %p155 = por %p153, %p154
      %p156 = scmp.ne.s32.totalorder %s147, %s148
      %p157 = scmp.eq.s32.totalorder %s27, 0
      %p158 = por %p156, %p157
      %p159 = scmp.ne.s32.totalorder %s147, %s148
      %p160 = scmp.eq.s32.totalorder %s28, 6
      %p161 = por %p159, %p160
      %p163 = scmp.ne.s32.totalorder %s148, %s162
      %p164 = scmp.eq.s32.totalorder %s28, 0
      %p165 = por %p163, %p164
      %s167 = sadd.s32 %s166, 1
      %p170 = scmp.eq.s32.totalorder %s22, 6
      %p171 = scmp.ne.s32.totalorder %s166, %s168
      %p172 = scmp.eq.s32.totalorder %s22, 0
      %p173 = por %p171, %p172
      %p174 = scmp.ne.s32.totalorder %s166, %s168
      %p175 = scmp.eq.s32.totalorder %s27, 6
      %p176 = por %p174, %p175
      %p177 = scmp.ne.s32.totalorder %s168, %s169
      %p178 = scmp.eq.s32.totalorder %s27, 0
      %p179 = por %p177, %p178
      %p180 = scmp.ne.s32.totalorder %s168, %s169
      %p181 = scmp.eq.s32.totalorder %s28, 6
      %p182 = por %p180, %p181
      %p184 = scmp.ne.s32.totalorder %s169, %s183
      %p185 = scmp.eq.s32.totalorder %s28, 0
      %p186 = por %p184, %p185
      %s188 = sadd.s32 %s187, 1
      %p191 = scmp.eq.s32.totalorder %s22, 6
      %p192 = scmp.ne.s32.totalorder %s187, %s189
      %p193 = scmp.eq.s32.totalorder %s22, 0
      %p194 = por %p192, %p193
      %p195 = scmp.ne.s32.totalorder %s187, %s189
      %p196 = scmp.eq.s32.totalorder %s27, 6
      %p197 = por %p195, %p196
      %p198 = scmp.ne.s32.totalorder %s189, %s190
      %p199 = scmp.eq.s32.totalorder %s27, 0
      %p200 = por %p198, %p199
      %p201 = scmp.ne.s32.totalorder %s189, %s190
      %p202 = scmp.eq.s32.totalorder %s28, 6
      %p203 = por %p201, %p202
      %p205 = scmp.ne.s32.totalorder %s190, %s204
      %p206 = scmp.eq.s32.totalorder %s28, 0
      %p207 = por %p205, %p206
      %s209 = sadd.s32 %s208, 1
      %p212 = scmp.eq.s32.totalorder %s22, 6
      %p213 = scmp.ne.s32.totalorder %s208, %s210
      %p214 = scmp.eq.s32.totalorder %s22, 0
      %p215 = por %p213, %p214
      %p216 = scmp.ne.s32.totalorder %s208, %s210
      %p217 = scmp.eq.s32.totalorder %s27, 6
      %p218 = por %p216, %p217
      %p219 = scmp.ne.s32.totalorder %s210, %s211
      %p220 = scmp.eq.s32.totalorder %s27, 0
      %p221 = por %p219, %p220
      %p222 = scmp.ne.s32.totalorder %s210, %s211
      %p223 = scmp.eq.s32.totalorder %s28, 6
      %p224 = por %p222, %p223
      %p226 = scmp.ne.s32.totalorder %s211, %s225
      %p227 = scmp.eq.s32.totalorder %s28, 0
      %p228 = por %p226, %p227
      %s230 = sadd.s32 %s229, 1
      %p233 = scmp.eq.s32.totalorder %s22, 6
      %p234 = scmp.ne.s32.totalorder %s229, %s231
      %p235 = scmp.eq.s32.totalorder %s22, 0
      %p236 = por %p234, %p235
      %p237 = scmp.ne.s32.totalorder %s229, %s231
      %p238 = scmp.eq.s32.totalorder %s27, 6
      %p239 = por %p237, %p238
      %p240 = scmp.ne.s32.totalorder %s231, %s232
      %p241 = scmp.eq.s32.totalorder %s27, 0
      %p242 = por %p240, %p241
      %p243 = scmp.ne.s32.totalorder %s231, %s232
      %p244 = scmp.eq.s32.totalorder %s28, 6
      %p245 = por %p243, %p244
      %p247 = scmp.ne.s32.totalorder %s232, %s246
      %p248 = scmp.eq.s32.totalorder %s28, 0
      %p249 = por %p247, %p248
      %s251 = sadd.s32 %s250, 1
      %p254 = scmp.eq.s32.totalorder %s22, 6
      %p255 = scmp.ne.s32.totalorder %s250, %s252
      %p256 = scmp.eq.s32.totalorder %s22, 0
      %p257 = por %p255, %p256
      %p258 = scmp.ne.s32.totalorder %s250, %s252
      %p259 = scmp.eq.s32.totalorder %s27, 6
      %p260 = por %p258, %p259
      %p261 = scmp.ne.s32.totalorder %s252, %s253
      %p262 = scmp.eq.s32.totalorder %s27, 0
      %p263 = por %p261, %p262
      %p264 = scmp.ne.s32.totalorder %s252, %s253
      %p265 = scmp.eq.s32.totalorder %s28, 6
      %p266 = por %p264, %p265
      %p268 = scmp.ne.s32.totalorder %s253, %s267
      %p269 = scmp.eq.s32.totalorder %s28, 0
      %p270 = por %p268, %p269
      %s272 = sadd.s32 %s271, 1
      %p275 = scmp.eq.s32.totalorder %s22, 6
      %p276 = scmp.ne.s32.totalorder %s271, %s273
      %p277 = scmp.eq.s32.totalorder %s22, 0
      %p278 = por %p276, %p277
      %p279 = scmp.ne.s32.totalorder %s271, %s273
      %p280 = scmp.eq.s32.totalorder %s27, 6
      %p281 = por %p279, %p280
      %p282 = scmp.ne.s32.totalorder %s273, %s274
      %p283 = scmp.eq.s32.totalorder %s27, 0
      %p284 = por %p282, %p283
      %p285 = scmp.ne.s32.totalorder %s273, %s274
      %p286 = scmp.eq.s32.totalorder %s28, 6
      %p287 = por %p285, %p286
      %p289 = scmp.ne.s32.totalorder %s274, %s288
      %p290 = scmp.eq.s32.totalorder %s28, 0
      %p291 = por %p289, %p290
      %s293 = sadd.s32 %s292, 1
      %p296 = scmp.eq.s32.totalorder %s22, 6
      %p297 = scmp.ne.s32.totalorder %s292, %s294
      %p298 = scmp.eq.s32.totalorder %s22, 0
      %p299 = por %p297, %p298
      %p300 = scmp.ne.s32.totalorder %s292, %s294
      %p301 = scmp.eq.s32.totalorder %s27, 6
      %p302 = por %p300, %p301
      %p303 = scmp.ne.s32.totalorder %s294, %s295
      %p304 = scmp.eq.s32.totalorder %s27, 0
      %p305 = por %p303, %p304
      %p306 = scmp.ne.s32.totalorder %s294, %s295
      %p307 = scmp.eq.s32.totalorder %s28, 6
      %p308 = por %p306, %p307
      %p310 = scmp.ne.s32.totalorder %s295, %s309
      %p311 = scmp.eq.s32.totalorder %s28, 0
      %p312 = por %p310, %p311
      %p313 = scmp.le.s32.totalorder 1, %s22
      %p314 = scmp.lt.s32.totalorder %s22, 8
      %p315 = pnand %p313, %p314
      %p316 = pneg %p315
      // Predicated region
      $region9: #{_lambda_.1} parent=5 // pred_check
        _
      $region10: #{_lambda_.1} parent=5 // pred_check_branch
        %318 = sbr.rel (%p315) target = $region12
      $region11: #{_lambda_.1} parent=5 // pred_region
        %s319 = ssub.s32 %s22, 1
        // Predicated region
        $region13: #{_lambda_.1} parent=11 // pred_check
          %p320 = pneg %p95
        $region14: #{_lambda_.1} parent=11 // pred_check_branch
          %322 = sbr.rel (%p320) target = $region16
        $region15: #{_lambda_.1} parent=11 // pred_region
          _
        $region16: #{_lambda_.1} parent=11 // pred_fallthru
          _
        // Predicated region
        $region17: #{_lambda_.1} parent=11 // pred_check
          %p323 = pneg %p116
        $region18: #{_lambda_.1} parent=11 // pred_check_branch
          %325 = sbr.rel (%p323) target = $region20
        $region19: #{_lambda_.1} parent=11 // pred_region
          _
        $region20: #{_lambda_.1} parent=11 // pred_fallthru
          _
        // Predicated region
        $region21: #{_lambda_.1} parent=11 // pred_check
          %p326 = pneg %p137
        $region22: #{_lambda_.1} parent=11 // pred_check_branch
          %328 = sbr.rel (%p326) target = $region24
        $region23: #{_lambda_.1} parent=11 // pred_region
          %s330 = ssub.s32 8192, 8192
          %331 = vsyncadd [#allocation5], %s330
          %s332 = sshll.u32 [#allocation4], 4
          %s333 = int_to_ptr.vmem [resolvable:$true] %s332
          %338 = dma.hbm_to_vmem [thread:$0]  %s4, 8192, %s333, [#allocation5], 256, 256, 16
        $region24: #{_lambda_.1} parent=11 // pred_fallthru
          _
        // Predicated region
        $region25: #{_lambda_.1} parent=11 // pred_check
          %p339 = pneg %p158
        $region26: #{_lambda_.1} parent=11 // pred_check_branch
          %341 = sbr.rel (%p339) target = $region28
        $region27: #{_lambda_.1} parent=11 // pred_region
          _
        $region28: #{_lambda_.1} parent=11 // pred_fallthru
          _
        // Predicated region
        $region29: #{_lambda_.1} parent=11 // pred_check
          %p342 = pneg %p179
        $region30: #{_lambda_.1} parent=11 // pred_check_branch
          %344 = sbr.rel (%p342) target = $region32
        $region31: #{_lambda_.1} parent=11 // pred_region
          %s346 = ssub.s32 24576, 24576
          %347 = vsyncadd [#allocation7], %s346
          %s348 = sshll.u32 [#allocation6], 4
          %s349 = int_to_ptr.vmem [resolvable:$true] %s348
          %354 = dma.hbm_to_vmem [thread:$0]  %s6, 24576, %s349, [#allocation7], 512, 512, 32
        $region32: #{_lambda_.1} parent=11 // pred_fallthru
          _
        // Predicated region
        $region33: #{_lambda_.1} parent=11 // pred_check
          %p355 = pneg %p200
        $region34: #{_lambda_.1} parent=11 // pred_check_branch
          %357 = sbr.rel (%p355) target = $region36
        $region35: #{_lambda_.1} parent=11 // pred_region
          %s359 = ssub.s32 8192, 8192
          %360 = vsyncadd [#allocation7], %s359
          %s361 = sshll.u32 [#allocation8], 4
          %s362 = int_to_ptr.vmem [resolvable:$true] %s361
          %367 = dma.hbm_to_vmem [thread:$0]  %s7, 8192, %s362, [#allocation7], 512, 512, 32
        $region36: #{_lambda_.1} parent=11 // pred_fallthru
          _
        // Predicated region
        $region37: #{_lambda_.1} parent=11 // pred_check
          %p368 = pneg %p221
        $region38: #{_lambda_.1} parent=11 // pred_check_branch
          %370 = sbr.rel (%p368) target = $region40
        $region39: #{_lambda_.1} parent=11 // pred_region
          _
        $region40: #{_lambda_.1} parent=11 // pred_fallthru
          _
        // Predicated region
        $region41: #{_lambda_.1} parent=11 // pred_check
          %p371 = pneg %p242
        $region42: #{_lambda_.1} parent=11 // pred_check_branch
          %373 = sbr.rel (%p371) target = $region44
        $region43: #{_lambda_.1} parent=11 // pred_region
          %s375 = ssub.s32 16384, 16384
          %376 = vsyncadd [#allocation10], %s375
          %s377 = sshll.u32 [#allocation9], 4
          %s378 = int_to_ptr.vmem [resolvable:$true] %s377
          %383 = dma.hbm_to_vmem [thread:$0]  %s9, 16384, %s378, [#allocation10], 1024, 1024, 64
        $region44: #{_lambda_.1} parent=11 // pred_fallthru
          _
        // Predicated region
        $region45: #{_lambda_.1} parent=11 // pred_check
          %p384 = pneg %p263
        $region46: #{_lambda_.1} parent=11 // pred_check_branch
          %386 = sbr.rel (%p384) target = $region48
        $region47: #{_lambda_.1} parent=11 // pred_region
          _
        $region48: #{_lambda_.1} parent=11 // pred_fallthru
          _
      $region12: #{_lambda_.1} parent=5 // pred_fallthru
        _
      %p387 = scmp.lt.s32.totalorder %s22, 7
      // Predicated region
      $region49: #{_lambda_.1} parent=5 // pred_check
        %p388 = pneg %p387
      $region50: #{_lambda_.1} parent=5 // pred_check_branch
        %390 = sbr.rel (%p388) target = $region52
      $region51: #{_lambda_.1} parent=5 // pred_region
        // Predicated region
        $region53: #{_lambda_.1} parent=51 // pred_check
          %p391 = pneg %p42
        $region54: #{_lambda_.1} parent=51 // pred_check_branch
          %393 = sbr.rel (%p391) target = $region56
        $region55: #{_lambda_.1} parent=51 // pred_region
          %p394 = scmp.lt.s32.totalorder %s22, 6
          %s395 = scalar_select %p394, %s22, 6
          %s396 = smul.addr %s395, 8
          %s397 = smul.addr %s396, 8
          %s398 = scalar_lea.vmem %s0, %s397
        $region56: #{_lambda_.1} parent=51 // pred_fallthru
          _
        // Predicated region
        $region57: #{_lambda_.1} parent=51 // pred_check
          %p399 = pneg %p68
        $region58: #{_lambda_.1} parent=51 // pred_check_branch
          %401 = sbr.rel (%p399) target = $region60
        $region59: #{_lambda_.1} parent=51 // pred_region
          %p402 = scmp.lt.s32.totalorder %s22, 6
          %s403 = scalar_select %p402, %s22, 6
          %s404 = smul.addr %s403, 8
          %s405 = scalar_lea.vmem %s1, %s404
        $region60: #{_lambda_.1} parent=51 // pred_fallthru
          _
      $region52: #{_lambda_.1} parent=5 // pred_fallthru
        _
      %p406 = scmp.le.s32.totalorder 1, %s22
      %p407 = scmp.lt.s32.totalorder %s22, 8
      %p408 = pnand %p406, %p407
      %p409 = pneg %p408
      // Predicated region
      $region61: #{_lambda_.1} parent=5 // pred_check
        _
      $region62: #{_lambda_.1} parent=5 // pred_check_branch
        %411 = sbr.rel (%p408) target = $region64
      $region63: #{_lambda_.1} parent=5 // pred_region
        %s412 = ssub.s32 %s22, 1
        // Predicated region
        $region65: #{_lambda_.1} parent=63 // pred_check
          %p413 = pneg %p137
        $region66: #{_lambda_.1} parent=63 // pred_check_branch
          %415 = sbr.rel (%p413) target = $region68
        $region67: #{_lambda_.1} parent=63 // pred_region
          %416 = dma.done [#allocation5], 8192
        $region68: #{_lambda_.1} parent=63 // pred_fallthru
          _
        // Predicated region
        $region69: #{_lambda_.1} parent=63 // pred_check
          %p417 = pneg %p179
        $region70: #{_lambda_.1} parent=63 // pred_check_branch
          %419 = sbr.rel (%p417) target = $region72
        $region71: #{_lambda_.1} parent=63 // pred_region
          %420 = dma.done [#allocation7], 24576
        $region72: #{_lambda_.1} parent=63 // pred_fallthru
          _
        // Predicated region
        $region73: #{_lambda_.1} parent=63 // pred_check
          %p421 = pneg %p200
        $region74: #{_lambda_.1} parent=63 // pred_check_branch
          %423 = sbr.rel (%p421) target = $region76
        $region75: #{_lambda_.1} parent=63 // pred_region
          %424 = dma.done [#allocation7], 8192
        $region76: #{_lambda_.1} parent=63 // pred_fallthru
          _
        // Predicated region
        $region77: #{_lambda_.1} parent=63 // pred_check
          %p425 = pneg %p242
        $region78: #{_lambda_.1} parent=63 // pred_check_branch
          %427 = sbr.rel (%p425) target = $region80
        $region79: #{_lambda_.1} parent=63 // pred_region
          %428 = dma.done [#allocation10], 16384
        $region80: #{_lambda_.1} parent=63 // pred_fallthru
          _
        %p429 = scmp.lt.s32.totalorder %s27, 6
        %s430 = scalar_select %p429, %s27, 6
        %s431 = smul.addr %s430, 8
        %s432 = smul.addr %s431, 8
        %s433 = scalar_lea.vmem %s0, %s432
        %p434 = pneg %p48
        %p435 = pneg %p45
        %p436 = scmp.lt.s32.totalorder %s27, 6
        %s437 = scalar_select %p436, %s27, 6
        %s438 = smul.addr %s437, 8
        %s439 = scalar_lea.vmem %s1, %s438
        %p440 = pneg %p74
        %p441 = pneg %p71
        %p442 = pneg %p95
        %p443 = pneg %p92
        %p444 = pneg %p116
        %p445 = pneg %p113
        %p446 = pneg %p137
        %p447 = pneg %p134
        %p448 = pneg %p158
        %p449 = pneg %p155
        %p450 = pneg %p179
        %p451 = pneg %p176
        %p452 = pneg %p200
        %p453 = pneg %p197
        %p454 = pneg %p221
        %p455 = pneg %p218
        %p456 = pneg %p242
        %p457 = pneg %p239
        %p458 = pneg %p263
        %p459 = pneg %p260
        %p460 = pneg %p284
        %p461 = pneg %p281
        %p462 = pneg %p305
        %p463 = pneg %p302
        %p464 = scmp.lt.s32.totalorder %s27, 6
        %s465 = scalar_select %p464, %s27, 6
        %s466 = smul.addr %s465, 8
        %s467 = smul.addr %s466, 8
        %s468 = scalar_lea.vmem %s0, %s467
        %p469 = scmp.lt.s32.totalorder %s27, 6
        %s470 = scalar_select %p469, %s27, 6
        %s471 = smul.addr %s470, 8
        %s472 = scalar_lea.vmem %s1, %s471
        %p473 = scmp.eq.s32.totalorder %s27, 0
        // Predicated region
        $region81: #{_lambda_.1} parent=63 // pred_check
          %p474 = pneg %p473
        $region82: #{_lambda_.1} parent=63 // pred_check_branch
          %476 = sbr.rel (%p474) target = $region84
        $region83: #{_lambda_.1} parent=63 // pred_region
          %477 = vst [vmem:[#allocation2] sm:$0xff] 0.0
          %478 = vst [vmem:[#allocation3] sm:$0xff] 0.0
        $region84: #{_lambda_.1} parent=63 // pred_fallthru
          _
        %v479 = vld [vmem:[%s468] sm:$0xff]
        %v480 = vld [vmem:[%s468 + $0x8] sm:$0xff]
        %v481 = vld [vmem:[%s468 + $0x10] sm:$0xff]
        %v482 = vld [vmem:[%s468 + $0x18] sm:$0xff]
        %v483 = vld [vmem:[%s468 + $0x20] sm:$0xff]
        %v484 = vld [vmem:[%s468 + $0x28] sm:$0xff]
        %v485 = vld [vmem:[%s468 + $0x30] sm:$0xff]
        %v486 = vld [vmem:[%s468 + $0x38] sm:$0xff]
        %v487 = vld [vmem:[%s472] sm:$0xff]
        %v488 = vld [vmem:[%s2] sm:$0xff]
        %v489 = vld [vmem:[%s2 + $0x8] sm:$0xff]
        %v490 = vld [vmem:[%s2 + $0x10] sm:$0xff]
        %v491 = vld [vmem:[%s2 + $0x18] sm:$0xff]
        %v492 = vld [vmem:[%s2 + $0x20] sm:$0xff]
        %v493 = vld [vmem:[%s2 + $0x28] sm:$0xff]
        %v494 = vld [vmem:[%s2 + $0x30] sm:$0xff]
        %v495 = vld [vmem:[%s2 + $0x38] sm:$0xff]
        %v496 = vld [vmem:[%s2 + $0x40] sm:$0xff]
        %v497 = vld [vmem:[%s2 + $0x48] sm:$0xff]
        %v498 = vld [vmem:[%s2 + $0x50] sm:$0xff]
        %v499 = vld [vmem:[%s2 + $0x58] sm:$0xff]
        %v500 = vld [vmem:[%s2 + $0x60] sm:$0xff]
        %v501 = vld [vmem:[%s2 + $0x68] sm:$0xff]
        %v502 = vld [vmem:[%s2 + $0x70] sm:$0xff]
        %v503 = vld [vmem:[%s2 + $0x78] sm:$0xff]
        %v504 = vld [vmem:[%s2 + $0x80] sm:$0xff]
        %v505 = vld [vmem:[%s2 + $0x88] sm:$0xff]
        %v506 = vld [vmem:[%s2 + $0x90] sm:$0xff]
        %v507 = vld [vmem:[%s2 + $0x98] sm:$0xff]
        %v508 = vld [vmem:[%s2 + $0xa0] sm:$0xff]
        %v509 = vld [vmem:[%s2 + $0xa8] sm:$0xff]
        %v510 = vld [vmem:[%s2 + $0xb0] sm:$0xff]
        %v511 = vld [vmem:[%s2 + $0xb8] sm:$0xff]
        %v512 = vld [vmem:[%s2 + $0xc0] sm:$0xff]
        %v513 = vld [vmem:[%s2 + $0xc8] sm:$0xff]
        %v514 = vld [vmem:[%s2 + $0xd0] sm:$0xff]
        %v515 = vld [vmem:[%s2 + $0xd8] sm:$0xff]
        %v516 = vld [vmem:[%s2 + $0xe0] sm:$0xff]
        %v517 = vld [vmem:[%s2 + $0xe8] sm:$0xff]
        %v518 = vld [vmem:[%s2 + $0xf0] sm:$0xff]
        %v519 = vld [vmem:[%s2 + $0xf8] sm:$0xff]
        %v520 = vld [vmem:[%s2 + $0x100] sm:$0xff]
        %v521 = vld [vmem:[%s2 + $0x108] sm:$0xff]
        %v522 = vld [vmem:[%s2 + $0x110] sm:$0xff]
        %v523 = vld [vmem:[%s2 + $0x118] sm:$0xff]
        %v524 = vld [vmem:[%s2 + $0x120] sm:$0xff]
        %v525 = vld [vmem:[%s2 + $0x128] sm:$0xff]
        %v526 = vld [vmem:[%s2 + $0x130] sm:$0xff]
        %v527 = vld [vmem:[%s2 + $0x138] sm:$0xff]
        %v528 = vld [vmem:[%s2 + $0x140] sm:$0xff]
        %v529 = vld [vmem:[%s2 + $0x148] sm:$0xff]
        %v530 = vld [vmem:[%s2 + $0x150] sm:$0xff]
        %v531 = vld [vmem:[%s2 + $0x158] sm:$0xff]
        %v532 = vld [vmem:[%s2 + $0x160] sm:$0xff]
        %v533 = vld [vmem:[%s2 + $0x168] sm:$0xff]
        %v534 = vld [vmem:[%s2 + $0x170] sm:$0xff]
        %v535 = vld [vmem:[%s2 + $0x178] sm:$0xff]
        %v536 = vld [vmem:[%s2 + $0x180] sm:$0xff]
        %v537 = vld [vmem:[%s2 + $0x188] sm:$0xff]
        %v538 = vld [vmem:[%s2 + $0x190] sm:$0xff]
        %v539 = vld [vmem:[%s2 + $0x198] sm:$0xff]
        %v540 = vld [vmem:[%s2 + $0x1a0] sm:$0xff]
        %v541 = vld [vmem:[%s2 + $0x1a8] sm:$0xff]
        %v542 = vld [vmem:[%s2 + $0x1b0] sm:$0xff]
        %v543 = vld [vmem:[%s2 + $0x1b8] sm:$0xff]
        %v544 = vld [vmem:[%s2 + $0x1c0] sm:$0xff]
        %v545 = vld [vmem:[%s2 + $0x1c8] sm:$0xff]
        %v546 = vld [vmem:[%s2 + $0x1d0] sm:$0xff]
        %v547 = vld [vmem:[%s2 + $0x1d8] sm:$0xff]
        %v548 = vld [vmem:[%s2 + $0x1e0] sm:$0xff]
        %v549 = vld [vmem:[%s2 + $0x1e8] sm:$0xff]
        %v550 = vld [vmem:[%s2 + $0x1f0] sm:$0xff]
        %v551 = vld [vmem:[%s2 + $0x1f8] sm:$0xff]
        %v552 = vld [vmem:[%s2 + $0x200] sm:$0xff]
        %v553 = vld [vmem:[%s2 + $0x208] sm:$0xff]
        %v554 = vld [vmem:[%s2 + $0x210] sm:$0xff]
        %v555 = vld [vmem:[%s2 + $0x218] sm:$0xff]
        %v556 = vld [vmem:[%s2 + $0x220] sm:$0xff]
        %v557 = vld [vmem:[%s2 + $0x228] sm:$0xff]
        %v558 = vld [vmem:[%s2 + $0x230] sm:$0xff]
        %v559 = vld [vmem:[%s2 + $0x238] sm:$0xff]
        %v560 = vld [vmem:[%s2 + $0x240] sm:$0xff]
        %v561 = vld [vmem:[%s2 + $0x248] sm:$0xff]
        %v562 = vld [vmem:[%s2 + $0x250] sm:$0xff]
        %v563 = vld [vmem:[%s2 + $0x258] sm:$0xff]
        %v564 = vld [vmem:[%s2 + $0x260] sm:$0xff]
        %v565 = vld [vmem:[%s2 + $0x268] sm:$0xff]
        %v566 = vld [vmem:[%s2 + $0x270] sm:$0xff]
        %v567 = vld [vmem:[%s2 + $0x278] sm:$0xff]
        %v568 = vld [vmem:[%s2 + $0x280] sm:$0xff]
        %v569 = vld [vmem:[%s2 + $0x288] sm:$0xff]
        %v570 = vld [vmem:[%s2 + $0x290] sm:$0xff]
        %v571 = vld [vmem:[%s2 + $0x298] sm:$0xff]
        %v572 = vld [vmem:[%s2 + $0x2a0] sm:$0xff]
        %v573 = vld [vmem:[%s2 + $0x2a8] sm:$0xff]
        %v574 = vld [vmem:[%s2 + $0x2b0] sm:$0xff]
        %v575 = vld [vmem:[%s2 + $0x2b8] sm:$0xff]
        %v576 = vld [vmem:[%s2 + $0x2c0] sm:$0xff]
        %v577 = vld [vmem:[%s2 + $0x2c8] sm:$0xff]
        %v578 = vld [vmem:[%s2 + $0x2d0] sm:$0xff]
        %v579 = vld [vmem:[%s2 + $0x2d8] sm:$0xff]
        %v580 = vld [vmem:[%s2 + $0x2e0] sm:$0xff]
        %v581 = vld [vmem:[%s2 + $0x2e8] sm:$0xff]
        %v582 = vld [vmem:[%s2 + $0x2f0] sm:$0xff]
        %v583 = vld [vmem:[%s2 + $0x2f8] sm:$0xff]
        %v584 = vld [vmem:[%s2 + $0x300] sm:$0xff]
        %v585 = vld [vmem:[%s2 + $0x308] sm:$0xff]
        %v586 = vld [vmem:[%s2 + $0x310] sm:$0xff]
        %v587 = vld [vmem:[%s2 + $0x318] sm:$0xff]
        %v588 = vld [vmem:[%s2 + $0x320] sm:$0xff]
        %v589 = vld [vmem:[%s2 + $0x328] sm:$0xff]
        %v590 = vld [vmem:[%s2 + $0x330] sm:$0xff]
        %v591 = vld [vmem:[%s2 + $0x338] sm:$0xff]
        %v592 = vld [vmem:[%s2 + $0x340] sm:$0xff]
        %v593 = vld [vmem:[%s2 + $0x348] sm:$0xff]
        %v594 = vld [vmem:[%s2 + $0x350] sm:$0xff]
        %v595 = vld [vmem:[%s2 + $0x358] sm:$0xff]
        %v596 = vld [vmem:[%s2 + $0x360] sm:$0xff]
        %v597 = vld [vmem:[%s2 + $0x368] sm:$0xff]
        %v598 = vld [vmem:[%s2 + $0x370] sm:$0xff]
        %v599 = vld [vmem:[%s2 + $0x378] sm:$0xff]
        %v600 = vld [vmem:[%s2 + $0x380] sm:$0xff]
        %v601 = vld [vmem:[%s2 + $0x388] sm:$0xff]
        %v602 = vld [vmem:[%s2 + $0x390] sm:$0xff]
        %v603 = vld [vmem:[%s2 + $0x398] sm:$0xff]
        %v604 = vld [vmem:[%s2 + $0x3a0] sm:$0xff]
        %v605 = vld [vmem:[%s2 + $0x3a8] sm:$0xff]
        %v606 = vld [vmem:[%s2 + $0x3b0] sm:$0xff]
        %v607 = vld [vmem:[%s2 + $0x3b8] sm:$0xff]
        %v608 = vld [vmem:[%s2 + $0x3c0] sm:$0xff]
        %v609 = vld [vmem:[%s2 + $0x3c8] sm:$0xff]
        %v610 = vld [vmem:[%s2 + $0x3d0] sm:$0xff]
        %v611 = vld [vmem:[%s2 + $0x3d8] sm:$0xff]
        %v612 = vld [vmem:[%s2 + $0x3e0] sm:$0xff]
        %v613 = vld [vmem:[%s2 + $0x3e8] sm:$0xff]
        %v614 = vld [vmem:[%s2 + $0x3f0] sm:$0xff]
        %v615 = vld [vmem:[%s2 + $0x3f8] sm:$0xff]
        %v616 = vld [vmem:[%s2 + $0x400] sm:$0xff]
        %v617 = vld [vmem:[%s2 + $0x408] sm:$0xff]
        %v618 = vld [vmem:[%s2 + $0x410] sm:$0xff]
        %v619 = vld [vmem:[%s2 + $0x418] sm:$0xff]
        %v620 = vld [vmem:[%s2 + $0x420] sm:$0xff]
        %v621 = vld [vmem:[%s2 + $0x428] sm:$0xff]
        %v622 = vld [vmem:[%s2 + $0x430] sm:$0xff]
        %v623 = vld [vmem:[%s2 + $0x438] sm:$0xff]
        %v624 = vld [vmem:[%s2 + $0x440] sm:$0xff]
        %v625 = vld [vmem:[%s2 + $0x448] sm:$0xff]
        %v626 = vld [vmem:[%s2 + $0x450] sm:$0xff]
        %v627 = vld [vmem:[%s2 + $0x458] sm:$0xff]
        %v628 = vld [vmem:[%s2 + $0x460] sm:$0xff]
        %v629 = vld [vmem:[%s2 + $0x468] sm:$0xff]
        %v630 = vld [vmem:[%s2 + $0x470] sm:$0xff]
        %v631 = vld [vmem:[%s2 + $0x478] sm:$0xff]
        %v632 = vld [vmem:[%s2 + $0x480] sm:$0xff]
        %v633 = vld [vmem:[%s2 + $0x488] sm:$0xff]
        %v634 = vld [vmem:[%s2 + $0x490] sm:$0xff]
        %v635 = vld [vmem:[%s2 + $0x498] sm:$0xff]
        %v636 = vld [vmem:[%s2 + $0x4a0] sm:$0xff]
        %v637 = vld [vmem:[%s2 + $0x4a8] sm:$0xff]
        %v638 = vld [vmem:[%s2 + $0x4b0] sm:$0xff]
        %v639 = vld [vmem:[%s2 + $0x4b8] sm:$0xff]
        %v640 = vld [vmem:[%s2 + $0x4c0] sm:$0xff]
        %v641 = vld [vmem:[%s2 + $0x4c8] sm:$0xff]
        %v642 = vld [vmem:[%s2 + $0x4d0] sm:$0xff]
        %v643 = vld [vmem:[%s2 + $0x4d8] sm:$0xff]
        %v644 = vld [vmem:[%s2 + $0x4e0] sm:$0xff]
        %v645 = vld [vmem:[%s2 + $0x4e8] sm:$0xff]
        %v646 = vld [vmem:[%s2 + $0x4f0] sm:$0xff]
        %v647 = vld [vmem:[%s2 + $0x4f8] sm:$0xff]
        %v648 = vld [vmem:[%s2 + $0x500] sm:$0xff]
        %v649 = vld [vmem:[%s2 + $0x508] sm:$0xff]
        %v650 = vld [vmem:[%s2 + $0x510] sm:$0xff]
        %v651 = vld [vmem:[%s2 + $0x518] sm:$0xff]
        %v652 = vld [vmem:[%s2 + $0x520] sm:$0xff]
        %v653 = vld [vmem:[%s2 + $0x528] sm:$0xff]
        %v654 = vld [vmem:[%s2 + $0x530] sm:$0xff]
        %v655 = vld [vmem:[%s2 + $0x538] sm:$0xff]
        %v656 = vld [vmem:[%s2 + $0x540] sm:$0xff]
        %v657 = vld [vmem:[%s2 + $0x548] sm:$0xff]
        %v658 = vld [vmem:[%s2 + $0x550] sm:$0xff]
        %v659 = vld [vmem:[%s2 + $0x558] sm:$0xff]
        %v660 = vld [vmem:[%s2 + $0x560] sm:$0xff]
        %v661 = vld [vmem:[%s2 + $0x568] sm:$0xff]
        %v662 = vld [vmem:[%s2 + $0x570] sm:$0xff]
        %v663 = vld [vmem:[%s2 + $0x578] sm:$0xff]
        %v664 = vld [vmem:[%s2 + $0x580] sm:$0xff]
        %v665 = vld [vmem:[%s2 + $0x588] sm:$0xff]
        %v666 = vld [vmem:[%s2 + $0x590] sm:$0xff]
        %v667 = vld [vmem:[%s2 + $0x598] sm:$0xff]
        %v668 = vld [vmem:[%s2 + $0x5a0] sm:$0xff]
        %v669 = vld [vmem:[%s2 + $0x5a8] sm:$0xff]
        %v670 = vld [vmem:[%s2 + $0x5b0] sm:$0xff]
        %v671 = vld [vmem:[%s2 + $0x5b8] sm:$0xff]
        %v672 = vld [vmem:[%s2 + $0x5c0] sm:$0xff]
        %v673 = vld [vmem:[%s2 + $0x5c8] sm:$0xff]
        %v674 = vld [vmem:[%s2 + $0x5d0] sm:$0xff]
        %v675 = vld [vmem:[%s2 + $0x5d8] sm:$0xff]
        %v676 = vld [vmem:[%s2 + $0x5e0] sm:$0xff]
        %v677 = vld [vmem:[%s2 + $0x5e8] sm:$0xff]
        %v678 = vld [vmem:[%s2 + $0x5f0] sm:$0xff]
        %v679 = vld [vmem:[%s2 + $0x5f8] sm:$0xff]
        %v680 = vld [vmem:[%s2 + $0x600] sm:$0xff]
        %v681 = vld [vmem:[%s2 + $0x608] sm:$0xff]
        %v682 = vld [vmem:[%s2 + $0x610] sm:$0xff]
        %v683 = vld [vmem:[%s2 + $0x618] sm:$0xff]
        %v684 = vld [vmem:[%s2 + $0x620] sm:$0xff]
        %v685 = vld [vmem:[%s2 + $0x628] sm:$0xff]
        %v686 = vld [vmem:[%s2 + $0x630] sm:$0xff]
        %v687 = vld [vmem:[%s2 + $0x638] sm:$0xff]
        %v688 = vld [vmem:[%s2 + $0x640] sm:$0xff]
        %v689 = vld [vmem:[%s2 + $0x648] sm:$0xff]
        %v690 = vld [vmem:[%s2 + $0x650] sm:$0xff]
        %v691 = vld [vmem:[%s2 + $0x658] sm:$0xff]
        %v692 = vld [vmem:[%s2 + $0x660] sm:$0xff]
        %v693 = vld [vmem:[%s2 + $0x668] sm:$0xff]
        %v694 = vld [vmem:[%s2 + $0x670] sm:$0xff]
        %v695 = vld [vmem:[%s2 + $0x678] sm:$0xff]
        %v696 = vld [vmem:[%s2 + $0x680] sm:$0xff]
        %v697 = vld [vmem:[%s2 + $0x688] sm:$0xff]
        %v698 = vld [vmem:[%s2 + $0x690] sm:$0xff]
        %v699 = vld [vmem:[%s2 + $0x698] sm:$0xff]
        %v700 = vld [vmem:[%s2 + $0x6a0] sm:$0xff]
        %v701 = vld [vmem:[%s2 + $0x6a8] sm:$0xff]
        %v702 = vld [vmem:[%s2 + $0x6b0] sm:$0xff]
        %v703 = vld [vmem:[%s2 + $0x6b8] sm:$0xff]
        %v704 = vld [vmem:[%s2 + $0x6c0] sm:$0xff]
        %v705 = vld [vmem:[%s2 + $0x6c8] sm:$0xff]
        %v706 = vld [vmem:[%s2 + $0x6d0] sm:$0xff]
        %v707 = vld [vmem:[%s2 + $0x6d8] sm:$0xff]
        %v708 = vld [vmem:[%s2 + $0x6e0] sm:$0xff]
        %v709 = vld [vmem:[%s2 + $0x6e8] sm:$0xff]
        %v710 = vld [vmem:[%s2 + $0x6f0] sm:$0xff]
        %v711 = vld [vmem:[%s2 + $0x6f8] sm:$0xff]
        %v712 = vld [vmem:[%s2 + $0x700] sm:$0xff]
        %v713 = vld [vmem:[%s2 + $0x708] sm:$0xff]
        %v714 = vld [vmem:[%s2 + $0x710] sm:$0xff]
        %v715 = vld [vmem:[%s2 + $0x718] sm:$0xff]
        %v716 = vld [vmem:[%s2 + $0x720] sm:$0xff]
        %v717 = vld [vmem:[%s2 + $0x728] sm:$0xff]
        %v718 = vld [vmem:[%s2 + $0x730] sm:$0xff]
        %v719 = vld [vmem:[%s2 + $0x738] sm:$0xff]
        %v720 = vld [vmem:[%s2 + $0x740] sm:$0xff]
        %v721 = vld [vmem:[%s2 + $0x748] sm:$0xff]
        %v722 = vld [vmem:[%s2 + $0x750] sm:$0xff]
        %v723 = vld [vmem:[%s2 + $0x758] sm:$0xff]
        %v724 = vld [vmem:[%s2 + $0x760] sm:$0xff]
        %v725 = vld [vmem:[%s2 + $0x768] sm:$0xff]
        %v726 = vld [vmem:[%s2 + $0x770] sm:$0xff]
        %v727 = vld [vmem:[%s2 + $0x778] sm:$0xff]
        %v728 = vld [vmem:[%s2 + $0x780] sm:$0xff]
        %v729 = vld [vmem:[%s2 + $0x788] sm:$0xff]
        %v730 = vld [vmem:[%s2 + $0x790] sm:$0xff]
        %v731 = vld [vmem:[%s2 + $0x798] sm:$0xff]
        %v732 = vld [vmem:[%s2 + $0x7a0] sm:$0xff]
        %v733 = vld [vmem:[%s2 + $0x7a8] sm:$0xff]
        %v734 = vld [vmem:[%s2 + $0x7b0] sm:$0xff]
        %v735 = vld [vmem:[%s2 + $0x7b8] sm:$0xff]
        %v736 = vld [vmem:[%s2 + $0x7c0] sm:$0xff]
        %v737 = vld [vmem:[%s2 + $0x7c8] sm:$0xff]
        %v738 = vld [vmem:[%s2 + $0x7d0] sm:$0xff]
        %v739 = vld [vmem:[%s2 + $0x7d8] sm:$0xff]
        %v740 = vld [vmem:[%s2 + $0x7e0] sm:$0xff]
        %v741 = vld [vmem:[%s2 + $0x7e8] sm:$0xff]
        %v742 = vld [vmem:[%s2 + $0x7f0] sm:$0xff]
        %v743 = vld [vmem:[%s2 + $0x7f8] sm:$0xff]
        %v744 = vld [vmem:[%s3] sm:$0x3]
        %v746 = vlaneseq
        %v747 = vshrl.u32 %v746, 7
        %v748 = vsub.s32 0, %v747
        %v749 = vrot.slane %v744, %v748
        %v750 = vlaneseq
        %v751 = vshrl.u32 %v750, 7
        %v752 = vsub.s32 1, %v751
        %v753 = vrot.slane %v744, %v752
        %756 = vmatprep.subr.mxu0 %v489
        %757 = vmatpush1.msra.mxu0 %v488
        %758 = vmatprep.subr.mxu0 %v491
        %759 = vmatpush1.msra.mxu0 %v490
        %760 = vmatprep.subr.mxu0 %v493
        %761 = vmatpush1.msra.mxu0 %v492
        %762 = vmatprep.subr.mxu0 %v495
        %763 = vmatpush1.msra.mxu0 %v494
        %764 = vmatprep.subr.mxu0 %v497
        %765 = vmatpush1.msra.mxu0 %v496
        %766 = vmatprep.subr.mxu0 %v499
        %767 = vmatpush1.msra.mxu0 %v498
        %768 = vmatprep.subr.mxu0 %v501
        %769 = vmatpush1.msra.mxu0 %v500
        %770 = vmatprep.subr.mxu0 %v503
        %771 = vmatpush1.msra.mxu0 %v502
        %772 = vmatprep.subr.mxu0 %v505
        %773 = vmatpush1.msra.mxu0 %v504
        %774 = vmatprep.subr.mxu0 %v507
        %775 = vmatpush1.msra.mxu0 %v506
        %776 = vmatprep.subr.mxu0 %v509
        %777 = vmatpush1.msra.mxu0 %v508
        %778 = vmatprep.subr.mxu0 %v511
        %779 = vmatpush1.msra.mxu0 %v510
        %780 = vmatprep.subr.mxu0 %v513
        %781 = vmatpush1.msra.mxu0 %v512
        %782 = vmatprep.subr.mxu0 %v515
        %783 = vmatpush1.msra.mxu0 %v514
        %784 = vmatprep.subr.mxu0 %v517
        %785 = vmatpush1.msra.mxu0 %v516
        %786 = vmatprep.subr.mxu0 %v519
        %787 = vmatpush1.msra.mxu0 %v518
        %788 = vmatprep.subr.mxu0 %v521
        %789 = vmatpush1.msra.mxu0 %v520
        %790 = vmatprep.subr.mxu0 %v523
        %791 = vmatpush1.msra.mxu0 %v522
        %792 = vmatprep.subr.mxu0 %v525
        %793 = vmatpush1.msra.mxu0 %v524
        %794 = vmatprep.subr.mxu0 %v527
        %795 = vmatpush1.msra.mxu0 %v526
        %796 = vmatprep.subr.mxu0 %v529
        %797 = vmatpush1.msra.mxu0 %v528
        %798 = vmatprep.subr.mxu0 %v531
        %799 = vmatpush1.msra.mxu0 %v530
        %800 = vmatprep.subr.mxu0 %v533
        %801 = vmatpush1.msra.mxu0 %v532
        %802 = vmatprep.subr.mxu0 %v535
        %803 = vmatpush1.msra.mxu0 %v534
        %804 = vmatprep.subr.mxu0 %v537
        %805 = vmatpush1.msra.mxu0 %v536
        %806 = vmatprep.subr.mxu0 %v539
        %807 = vmatpush1.msra.mxu0 %v538
        %808 = vmatprep.subr.mxu0 %v541
        %809 = vmatpush1.msra.mxu0 %v540
        %810 = vmatprep.subr.mxu0 %v543
        %811 = vmatpush1.msra.mxu0 %v542
        %812 = vmatprep.subr.mxu0 %v545
        %813 = vmatpush1.msra.mxu0 %v544
        %814 = vmatprep.subr.mxu0 %v547
        %815 = vmatpush1.msra.mxu0 %v546
        %816 = vmatprep.subr.mxu0 %v549
        %817 = vmatpush1.msra.mxu0 %v548
        %818 = vmatprep.subr.mxu0 %v551
        %819 = vmatpush1.msra.mxu0 %v550
        %820 = vmatprep.mubr.f32.mxu0 %v480
        %821 = vmatmul.mubr.f32.gmra.mrb[0].mxu0 %v479
        %v822 = vpop.f32.mrb[0].mxu0
        %v823 = vadd.f32 %v749, %v822
        %v824 = vpop.f32.mrb[0].mxu0
        %v825 = vadd.f32 %v753, %v824
        %826 = vdwg.mxu0
        %827 = vmatprep.subr.mxu0 %v553
        %828 = vmatpush1.msra.mxu0 %v552
        %829 = vmatprep.subr.mxu0 %v555
        %830 = vmatpush1.msra.mxu0 %v554
        %831 = vmatprep.subr.mxu0 %v557
        %832 = vmatpush1.msra.mxu0 %v556
        %833 = vmatprep.subr.mxu0 %v559
        %834 = vmatpush1.msra.mxu0 %v558
        %835 = vmatprep.subr.mxu0 %v561
        %836 = vmatpush1.msra.mxu0 %v560
        %837 = vmatprep.subr.mxu0 %v563
        %838 = vmatpush1.msra.mxu0 %v562
        %839 = vmatprep.subr.mxu0 %v565
        %840 = vmatpush1.msra.mxu0 %v564
        %841 = vmatprep.subr.mxu0 %v567
        %842 = vmatpush1.msra.mxu0 %v566
        %843 = vmatprep.subr.mxu0 %v569
        %844 = vmatpush1.msra.mxu0 %v568
        %845 = vmatprep.subr.mxu0 %v571
        %846 = vmatpush1.msra.mxu0 %v570
        %847 = vmatprep.subr.mxu0 %v573
        %848 = vmatpush1.msra.mxu0 %v572
        %849 = vmatprep.subr.mxu0 %v575
        %850 = vmatpush1.msra.mxu0 %v574
        %851 = vmatprep.subr.mxu0 %v577
        %852 = vmatpush1.msra.mxu0 %v576
        %853 = vmatprep.subr.mxu0 %v579
        %854 = vmatpush1.msra.mxu0 %v578
        %855 = vmatprep.subr.mxu0 %v581
        %856 = vmatpush1.msra.mxu0 %v580
        %857 = vmatprep.subr.mxu0 %v583
        %858 = vmatpush1.msra.mxu0 %v582
        %859 = vmatprep.subr.mxu0 %v585
        %860 = vmatpush1.msra.mxu0 %v584
        %861 = vmatprep.subr.mxu0 %v587
        %862 = vmatpush1.msra.mxu0 %v586
        %863 = vmatprep.subr.mxu0 %v589
        %864 = vmatpush1.msra.mxu0 %v588
        %865 = vmatprep.subr.mxu0 %v591
        %866 = vmatpush1.msra.mxu0 %v590
        %867 = vmatprep.subr.mxu0 %v593
        %868 = vmatpush1.msra.mxu0 %v592
        %869 = vmatprep.subr.mxu0 %v595
        %870 = vmatpush1.msra.mxu0 %v594
        %871 = vmatprep.subr.mxu0 %v597
        %872 = vmatpush1.msra.mxu0 %v596
        %873 = vmatprep.subr.mxu0 %v599
        %874 = vmatpush1.msra.mxu0 %v598
        %875 = vmatprep.subr.mxu0 %v601
        %876 = vmatpush1.msra.mxu0 %v600
        %877 = vmatprep.subr.mxu0 %v603
        %878 = vmatpush1.msra.mxu0 %v602
        %879 = vmatprep.subr.mxu0 %v605
        %880 = vmatpush1.msra.mxu0 %v604
        %881 = vmatprep.subr.mxu0 %v607
        %882 = vmatpush1.msra.mxu0 %v606
        %883 = vmatprep.subr.mxu0 %v609
        %884 = vmatpush1.msra.mxu0 %v608
        %885 = vmatprep.subr.mxu0 %v611
        %886 = vmatpush1.msra.mxu0 %v610
        %887 = vmatprep.subr.mxu0 %v613
        %888 = vmatpush1.msra.mxu0 %v612
        %889 = vmatprep.subr.mxu0 %v615
        %890 = vmatpush1.msra.mxu0 %v614
        %891 = vmatprep.mubr.f32.mxu0 %v482
        %892 = vmatmul.mubr.f32.gmra.mrb[0].mxu0 %v481
        %v893 = vpop.f32.mrb[0].mxu0
        %v894 = vadd.f32 %v823, %v893
        %v895 = vpop.f32.mrb[0].mxu0
        %v896 = vadd.f32 %v825, %v895
        %897 = vdwg.mxu0
        %898 = vmatprep.subr.mxu0 %v617
        %899 = vmatpush1.msra.mxu0 %v616
        %900 = vmatprep.subr.mxu0 %v619
        %901 = vmatpush1.msra.mxu0 %v618
        %902 = vmatprep.subr.mxu0 %v621
        %903 = vmatpush1.msra.mxu0 %v620
        %904 = vmatprep.subr.mxu0 %v623
        %905 = vmatpush1.msra.mxu0 %v622
        %906 = vmatprep.subr.mxu0 %v625
        %907 = vmatpush1.msra.mxu0 %v624
        %908 = vmatprep.subr.mxu0 %v627
        %909 = vmatpush1.msra.mxu0 %v626
        %910 = vmatprep.subr.mxu0 %v629
        %911 = vmatpush1.msra.mxu0 %v628
        %912 = vmatprep.subr.mxu0 %v631
        %913 = vmatpush1.msra.mxu0 %v630
        %914 = vmatprep.subr.mxu0 %v633
        %915 = vmatpush1.msra.mxu0 %v632
        %916 = vmatprep.subr.mxu0 %v635
        %917 = vmatpush1.msra.mxu0 %v634
        %918 = vmatprep.subr.mxu0 %v637
        %919 = vmatpush1.msra.mxu0 %v636
        %920 = vmatprep.subr.mxu0 %v639
        %921 = vmatpush1.msra.mxu0 %v638
        %922 = vmatprep.subr.mxu0 %v641
        %923 = vmatpush1.msra.mxu0 %v640
        %924 = vmatprep.subr.mxu0 %v643
        %925 = vmatpush1.msra.mxu0 %v642
        %926 = vmatprep.subr.mxu0 %v645
        %927 = vmatpush1.msra.mxu0 %v644
        %928 = vmatprep.subr.mxu0 %v647
        %929 = vmatpush1.msra.mxu0 %v646
        %930 = vmatprep.subr.mxu0 %v649
        %931 = vmatpush1.msra.mxu0 %v648
        %932 = vmatprep.subr.mxu0 %v651
        %933 = vmatpush1.msra.mxu0 %v650
        %934 = vmatprep.subr.mxu0 %v653
        %935 = vmatpush1.msra.mxu0 %v652
        %936 = vmatprep.subr.mxu0 %v655
        %937 = vmatpush1.msra.mxu0 %v654
        %938 = vmatprep.subr.mxu0 %v657
        %939 = vmatpush1.msra.mxu0 %v656
        %940 = vmatprep.subr.mxu0 %v659
        %941 = vmatpush1.msra.mxu0 %v658
        %942 = vmatprep.subr.mxu0 %v661
        %943 = vmatpush1.msra.mxu0 %v660
        %944 = vmatprep.subr.mxu0 %v663
        %945 = vmatpush1.msra.mxu0 %v662
        %946 = vmatprep.subr.mxu0 %v665
        %947 = vmatpush1.msra.mxu0 %v664
        %948 = vmatprep.subr.mxu0 %v667
        %949 = vmatpush1.msra.mxu0 %v666
        %950 = vmatprep.subr.mxu0 %v669
        %951 = vmatpush1.msra.mxu0 %v668
        %952 = vmatprep.subr.mxu0 %v671
        %953 = vmatpush1.msra.mxu0 %v670
        %954 = vmatprep.subr.mxu0 %v673
        %955 = vmatpush1.msra.mxu0 %v672
        %956 = vmatprep.subr.mxu0 %v675
        %957 = vmatpush1.msra.mxu0 %v674
        %958 = vmatprep.subr.mxu0 %v677
        %959 = vmatpush1.msra.mxu0 %v676
        %960 = vmatprep.subr.mxu0 %v679
        %961 = vmatpush1.msra.mxu0 %v678
        %962 = vmatprep.mubr.f32.mxu0 %v484
        %963 = vmatmul.mubr.f32.gmra.mrb[0].mxu0 %v483
        %v964 = vpop.f32.mrb[0].mxu0
        %v965 = vadd.f32 %v894, %v964
        %v966 = vpop.f32.mrb[0].mxu0
        %v967 = vadd.f32 %v896, %v966
        %968 = vdwg.mxu0
        %969 = vmatprep.subr.mxu0 %v681
        %970 = vmatpush1.msra.mxu0 %v680
        %971 = vmatprep.subr.mxu0 %v683
        %972 = vmatpush1.msra.mxu0 %v682
        %973 = vmatprep.subr.mxu0 %v685
        %974 = vmatpush1.msra.mxu0 %v684
        %975 = vmatprep.subr.mxu0 %v687
        %976 = vmatpush1.msra.mxu0 %v686
        %977 = vmatprep.subr.mxu0 %v689
        %978 = vmatpush1.msra.mxu0 %v688
        %979 = vmatprep.subr.mxu0 %v691
        %980 = vmatpush1.msra.mxu0 %v690
        %981 = vmatprep.subr.mxu0 %v693
        %982 = vmatpush1.msra.mxu0 %v692
        %983 = vmatprep.subr.mxu0 %v695
        %984 = vmatpush1.msra.mxu0 %v694
        %985 = vmatprep.subr.mxu0 %v697
        %986 = vmatpush1.msra.mxu0 %v696
        %987 = vmatprep.subr.mxu0 %v699
        %988 = vmatpush1.msra.mxu0 %v698
        %989 = vmatprep.subr.mxu0 %v701
        %990 = vmatpush1.msra.mxu0 %v700
        %991 = vmatprep.subr.mxu0 %v703
        %992 = vmatpush1.msra.mxu0 %v702
        %993 = vmatprep.subr.mxu0 %v705
        %994 = vmatpush1.msra.mxu0 %v704
        %995 = vmatprep.subr.mxu0 %v707
        %996 = vmatpush1.msra.mxu0 %v706
        %997 = vmatprep.subr.mxu0 %v709
        %998 = vmatpush1.msra.mxu0 %v708
        %999 = vmatprep.subr.mxu0 %v711
        %1000 = vmatpush1.msra.mxu0 %v710
        %1001 = vmatprep.subr.mxu0 %v713
        %1002 = vmatpush1.msra.mxu0 %v712
        %1003 = vmatprep.subr.mxu0 %v715
        %1004 = vmatpush1.msra.mxu0 %v714
        %1005 = vmatprep.subr.mxu0 %v717
        %1006 = vmatpush1.msra.mxu0 %v716
        %1007 = vmatprep.subr.mxu0 %v719
        %1008 = vmatpush1.msra.mxu0 %v718
        %1009 = vmatprep.subr.mxu0 %v721
        %1010 = vmatpush1.msra.mxu0 %v720
        %1011 = vmatprep.subr.mxu0 %v723
        %1012 = vmatpush1.msra.mxu0 %v722
        %1013 = vmatprep.subr.mxu0 %v725
        %1014 = vmatpush1.msra.mxu0 %v724
        %1015 = vmatprep.subr.mxu0 %v727
        %1016 = vmatpush1.msra.mxu0 %v726
        %1017 = vmatprep.subr.mxu0 %v729
        %1018 = vmatpush1.msra.mxu0 %v728
        %1019 = vmatprep.subr.mxu0 %v731
        %1020 = vmatpush1.msra.mxu0 %v730
        %1021 = vmatprep.subr.mxu0 %v733
        %1022 = vmatpush1.msra.mxu0 %v732
        %1023 = vmatprep.subr.mxu0 %v735
        %1024 = vmatpush1.msra.mxu0 %v734
        %1025 = vmatprep.subr.mxu0 %v737
        %1026 = vmatpush1.msra.mxu0 %v736
        %1027 = vmatprep.subr.mxu0 %v739
        %1028 = vmatpush1.msra.mxu0 %v738
        %1029 = vmatprep.subr.mxu0 %v741
        %1030 = vmatpush1.msra.mxu0 %v740
        %1031 = vmatprep.subr.mxu0 %v743
        %1032 = vmatpush1.msra.mxu0 %v742
        %1033 = vmatprep.mubr.f32.mxu0 %v486
        %1034 = vmatmul.mubr.f32.gmra.mrb[0].mxu0 %v485
        %v1035 = vpop.f32.mrb[0].mxu0
        %v1036 = vadd.f32 %v965, %v1035
        %v1037 = vpop.f32.mrb[0].mxu0
        %v1038 = vadd.f32 %v967, %v1037
        %1039 = vdwg.mxu0
        %v1040 = vtanh.pop %v1036
        %v1041 = vtanh.pop %v1038
        %v1042 = vld [vmem:[#allocation4] sm:$0xff]
        %v1043 = vld [vmem:[#allocation4 + $0x8] sm:$0xff]
        %v1044 = vld [vmem:[#allocation4 + $0x10] sm:$0xff]
        %v1045 = vld [vmem:[#allocation4 + $0x18] sm:$0xff]
        %v1046 = vld [vmem:[#allocation4 + $0x20] sm:$0xff]
        %v1047 = vld [vmem:[#allocation4 + $0x28] sm:$0xff]
        %v1048 = vld [vmem:[#allocation4 + $0x30] sm:$0xff]
        %v1049 = vld [vmem:[#allocation4 + $0x38] sm:$0xff]
        %v1050 = vld [vmem:[#allocation4 + $0x40] sm:$0xff]
        %v1051 = vld [vmem:[#allocation4 + $0x48] sm:$0xff]
        %v1052 = vld [vmem:[#allocation4 + $0x50] sm:$0xff]
        %v1053 = vld [vmem:[#allocation4 + $0x58] sm:$0xff]
        %v1054 = vld [vmem:[#allocation4 + $0x60] sm:$0xff]
        %v1055 = vld [vmem:[#allocation4 + $0x68] sm:$0xff]
        %v1056 = vld [vmem:[#allocation4 + $0x70] sm:$0xff]
        %v1057 = vld [vmem:[#allocation4 + $0x78] sm:$0xff]
        %v1058 = vld [vmem:[#allocation4 + $0x80] sm:$0xff]
        %v1059 = vld [vmem:[#allocation4 + $0x88] sm:$0xff]
        %v1060 = vld [vmem:[#allocation4 + $0x90] sm:$0xff]
        %v1061 = vld [vmem:[#allocation4 + $0x98] sm:$0xff]
        %v1062 = vld [vmem:[#allocation4 + $0xa0] sm:$0xff]
        %v1063 = vld [vmem:[#allocation4 + $0xa8] sm:$0xff]
        %v1064 = vld [vmem:[#allocation4 + $0xb0] sm:$0xff]
        %v1065 = vld [vmem:[#allocation4 + $0xb8] sm:$0xff]
        %v1066 = vld [vmem:[#allocation4 + $0xc0] sm:$0xff]
        %v1067 = vld [vmem:[#allocation4 + $0xc8] sm:$0xff]
        %v1068 = vld [vmem:[#allocation4 + $0xd0] sm:$0xff]
        %v1069 = vld [vmem:[#allocation4 + $0xd8] sm:$0xff]
        %v1070 = vld [vmem:[#allocation4 + $0xe0] sm:$0xff]
        %v1071 = vld [vmem:[#allocation4 + $0xe8] sm:$0xff]
        %v1072 = vld [vmem:[#allocation4 + $0xf0] sm:$0xff]
        %v1073 = vld [vmem:[#allocation4 + $0xf8] sm:$0xff]
        %v1074 = vld [vmem:[#allocation4 + $0x100] sm:$0xff]
        %v1075 = vld [vmem:[#allocation4 + $0x108] sm:$0xff]
        %v1076 = vld [vmem:[#allocation4 + $0x110] sm:$0xff]
        %v1077 = vld [vmem:[#allocation4 + $0x118] sm:$0xff]
        %v1078 = vld [vmem:[#allocation4 + $0x120] sm:$0xff]
        %v1079 = vld [vmem:[#allocation4 + $0x128] sm:$0xff]
        %v1080 = vld [vmem:[#allocation4 + $0x130] sm:$0xff]
        %v1081 = vld [vmem:[#allocation4 + $0x138] sm:$0xff]
        %v1082 = vld [vmem:[#allocation4 + $0x140] sm:$0xff]
        %v1083 = vld [vmem:[#allocation4 + $0x148] sm:$0xff]
        %v1084 = vld [vmem:[#allocation4 + $0x150] sm:$0xff]
        %v1085 = vld [vmem:[#allocation4 + $0x158] sm:$0xff]
        %v1086 = vld [vmem:[#allocation4 + $0x160] sm:$0xff]
        %v1087 = vld [vmem:[#allocation4 + $0x168] sm:$0xff]
        %v1088 = vld [vmem:[#allocation4 + $0x170] sm:$0xff]
        %v1089 = vld [vmem:[#allocation4 + $0x178] sm:$0xff]
        %v1090 = vld [vmem:[#allocation4 + $0x180] sm:$0xff]
        %v1091 = vld [vmem:[#allocation4 + $0x188] sm:$0xff]
        %v1092 = vld [vmem:[#allocation4 + $0x190] sm:$0xff]
        %v1093 = vld [vmem:[#allocation4 + $0x198] sm:$0xff]
        %v1094 = vld [vmem:[#allocation4 + $0x1a0] sm:$0xff]
        %v1095 = vld [vmem:[#allocation4 + $0x1a8] sm:$0xff]
        %v1096 = vld [vmem:[#allocation4 + $0x1b0] sm:$0xff]
        %v1097 = vld [vmem:[#allocation4 + $0x1b8] sm:$0xff]
        %v1098 = vld [vmem:[#allocation4 + $0x1c0] sm:$0xff]
        %v1099 = vld [vmem:[#allocation4 + $0x1c8] sm:$0xff]
        %v1100 = vld [vmem:[#allocation4 + $0x1d0] sm:$0xff]
        %v1101 = vld [vmem:[#allocation4 + $0x1d8] sm:$0xff]
        %v1102 = vld [vmem:[#allocation4 + $0x1e0] sm:$0xff]
        %v1103 = vld [vmem:[#allocation4 + $0x1e8] sm:$0xff]
        %v1104 = vld [vmem:[#allocation4 + $0x1f0] sm:$0xff]
        %v1105 = vld [vmem:[#allocation4 + $0x1f8] sm:$0xff]
        %v1106 = vld [vmem:[%s5] sm:$0x3]
        %v1108 = vlaneseq
        %v1109 = vshrl.u32 %v1108, 7
        %v1110 = vsub.s32 0, %v1109
        %v1111 = vrot.slane %v1106, %v1110
        %v1112 = vlaneseq
        %v1113 = vshrl.u32 %v1112, 7
        %v1114 = vsub.s32 1, %v1113
        %v1115 = vrot.slane %v1106, %v1114
        %1118 = vmatprep.subr.mxu0 %v1043
        %1119 = vmatpush1.msra.mxu0 %v1042
        %1120 = vmatprep.subr.mxu0 %v1045
        %1121 = vmatpush1.msra.mxu0 %v1044
        %1122 = vmatprep.subr.mxu0 %v1047
        %1123 = vmatpush1.msra.mxu0 %v1046
        %1124 = vmatprep.subr.mxu0 %v1049
        %1125 = vmatpush1.msra.mxu0 %v1048
        %1126 = vmatprep.subr.mxu0 %v1051
        %1127 = vmatpush1.msra.mxu0 %v1050
        %1128 = vmatprep.subr.mxu0 %v1053
        %1129 = vmatpush1.msra.mxu0 %v1052
        %1130 = vmatprep.subr.mxu0 %v1055
        %1131 = vmatpush1.msra.mxu0 %v1054
        %1132 = vmatprep.subr.mxu0 %v1057
        %1133 = vmatpush1.msra.mxu0 %v1056
        %1134 = vmatprep.subr.mxu0 %v1059
        %1135 = vmatpush1.msra.mxu0 %v1058
        %1136 = vmatprep.subr.mxu0 %v1061
        %1137 = vmatpush1.msra.mxu0 %v1060
        %1138 = vmatprep.subr.mxu0 %v1063
        %1139 = vmatpush1.msra.mxu0 %v1062
        %1140 = vmatprep.subr.mxu0 %v1065
        %1141 = vmatpush1.msra.mxu0 %v1064
        %1142 = vmatprep.subr.mxu0 %v1067
        %1143 = vmatpush1.msra.mxu0 %v1066
        %1144 = vmatprep.subr.mxu0 %v1069
        %1145 = vmatpush1.msra.mxu0 %v1068
        %1146 = vmatprep.subr.mxu0 %v1071
        %1147 = vmatpush1.msra.mxu0 %v1070
        %1148 = vmatprep.subr.mxu0 %v1073
        %1149 = vmatpush1.msra.mxu0 %v1072
        %1150 = vmatprep.subr.mxu0 %v1075
        %1151 = vmatpush1.msra.mxu0 %v1074
        %1152 = vmatprep.subr.mxu0 %v1077
        %1153 = vmatpush1.msra.mxu0 %v1076
        %1154 = vmatprep.subr.mxu0 %v1079
        %1155 = vmatpush1.msra.mxu0 %v1078
        %1156 = vmatprep.subr.mxu0 %v1081
        %1157 = vmatpush1.msra.mxu0 %v1080
        %1158 = vmatprep.subr.mxu0 %v1083
        %1159 = vmatpush1.msra.mxu0 %v1082
        %1160 = vmatprep.subr.mxu0 %v1085
        %1161 = vmatpush1.msra.mxu0 %v1084
        %1162 = vmatprep.subr.mxu0 %v1087
        %1163 = vmatpush1.msra.mxu0 %v1086
        %1164 = vmatprep.subr.mxu0 %v1089
        %1165 = vmatpush1.msra.mxu0 %v1088
        %1166 = vmatprep.subr.mxu0 %v1091
        %1167 = vmatpush1.msra.mxu0 %v1090
        %1168 = vmatprep.subr.mxu0 %v1093
        %1169 = vmatpush1.msra.mxu0 %v1092
        %1170 = vmatprep.subr.mxu0 %v1095
        %1171 = vmatpush1.msra.mxu0 %v1094
        %1172 = vmatprep.subr.mxu0 %v1097
        %1173 = vmatpush1.msra.mxu0 %v1096
        %1174 = vmatprep.subr.mxu0 %v1099
        %1175 = vmatpush1.msra.mxu0 %v1098
        %1176 = vmatprep.subr.mxu0 %v1101
        %1177 = vmatpush1.msra.mxu0 %v1100
        %1178 = vmatprep.subr.mxu0 %v1103
        %1179 = vmatpush1.msra.mxu0 %v1102
        %1180 = vmatprep.subr.mxu0 %v1105
        %1181 = vmatpush1.msra.mxu0 %v1104
        %1182 = vmatprep.mubr.f32.mxu0 %v1041
        %1183 = vmatmul.mubr.f32.gmra.mrb[0].mxu0 %v1040
        %v1184 = vpop.f32.mrb[0].mxu0
        %v1185 = vadd.f32 %v1111, %v1184
        %v1186 = vpop.f32.mrb[0].mxu0
        %v1187 = vadd.f32 %v1115, %v1186
        %1188 = vdwg.mxu0
        %v1189 = vlaneseq
        %v1190 = vand.u32 %v1189, 127
        %vm1191 = vcmp.lt.s32.totalorder %v1190, 10
        %v1192 = vsel %vm1191, %v1187, -1e+30
        %1193 = vmax.xlane.f32.xlu0 %v1192
        %v1194 = vpop.xlane.xlu0 %1193
        %v1195 = vsub.f32 %v1192, %v1194
        %v1196 = vmul.f32 %v1195, 1.442695
        %v1197 = vpow.pop %v1196
        %v1198 = vsel %vm1191, %v1197, 0.0
        %1199 = vadd.xlane.f32.xlu0 %v1198
        %v1200 = vpop.xlane.xlu0 %1199
        %v1201 = vrcp.pop %v1200
        %v1202 = vmul.f32 %v1198, %v1201
        %v1203 = vld [vmem:[#allocation6] sm:$0xff]
        %v1204 = vld [vmem:[#allocation6 + $0x8] sm:$0xff]
        %v1205 = vld [vmem:[#allocation6 + $0x10] sm:$0xff]
        %v1206 = vld [vmem:[#allocation6 + $0x18] sm:$0xff]
        %v1207 = vld [vmem:[#allocation6 + $0x20] sm:$0xff]
        %v1208 = vld [vmem:[#allocation6 + $0x28] sm:$0xff]
        %v1209 = vld [vmem:[#allocation6 + $0x30] sm:$0xff]
        %v1210 = vld [vmem:[#allocation6 + $0x38] sm:$0xff]
        %v1211 = vld [vmem:[#allocation6 + $0x40] sm:$0xff]
        %v1212 = vld [vmem:[#allocation6 + $0x48] sm:$0xff]
        %v1213 = vld [vmem:[#allocation6 + $0x50] sm:$0xff]
        %v1214 = vld [vmem:[#allocation6 + $0x58] sm:$0xff]
        %v1215 = vld [vmem:[#allocation6 + $0x60] sm:$0xff]
        %v1216 = vld [vmem:[#allocation6 + $0x68] sm:$0xff]
        %v1217 = vld [vmem:[#allocation6 + $0x70] sm:$0xff]
        %v1218 = vld [vmem:[#allocation6 + $0x78] sm:$0xff]
        %v1219 = vld [vmem:[#allocation6 + $0x80] sm:$0xff]
        %v1220 = vld [vmem:[#allocation6 + $0x88] sm:$0xff]
        %v1221 = vld [vmem:[#allocation6 + $0x90] sm:$0xff]
        %v1222 = vld [vmem:[#allocation6 + $0x98] sm:$0xff]
        %v1223 = vld [vmem:[#allocation6 + $0xa0] sm:$0xff]
        %v1224 = vld [vmem:[#allocation6 + $0xa8] sm:$0xff]
        %v1225 = vld [vmem:[#allocation6 + $0xb0] sm:$0xff]
        %v1226 = vld [vmem:[#allocation6 + $0xb8] sm:$0xff]
        %v1227 = vld [vmem:[#allocation6 + $0xc0] sm:$0xff]
        %v1228 = vld [vmem:[#allocation6 + $0xc8] sm:$0xff]
        %v1229 = vld [vmem:[#allocation6 + $0xd0] sm:$0xff]
        %v1230 = vld [vmem:[#allocation6 + $0xd8] sm:$0xff]
        %v1231 = vld [vmem:[#allocation6 + $0xe0] sm:$0xff]
        %v1232 = vld [vmem:[#allocation6 + $0xe8] sm:$0xff]
        %v1233 = vld [vmem:[#allocation6 + $0xf0] sm:$0xff]
        %v1234 = vld [vmem:[#allocation6 + $0xf8] sm:$0xff]
        %v1235 = vld [vmem:[#allocation6 + $0x100] sm:$0xff]
        %v1236 = vld [vmem:[#allocation6 + $0x108] sm:$0xff]
        %v1237 = vld [vmem:[#allocation6 + $0x110] sm:$0xff]
        %v1238 = vld [vmem:[#allocation6 + $0x118] sm:$0xff]
        %v1239 = vld [vmem:[#allocation6 + $0x120] sm:$0xff]
        %v1240 = vld [vmem:[#allocation6 + $0x128] sm:$0xff]
        %v1241 = vld [vmem:[#allocation6 + $0x130] sm:$0xff]
        %v1242 = vld [vmem:[#allocation6 + $0x138] sm:$0xff]
        %v1243 = vld [vmem:[#allocation6 + $0x140] sm:$0xff]
        %v1244 = vld [vmem:[#allocation6 + $0x148] sm:$0xff]
        %v1245 = vld [vmem:[#allocation6 + $0x150] sm:$0xff]
        %v1246 = vld [vmem:[#allocation6 + $0x158] sm:$0xff]
        %v1247 = vld [vmem:[#allocation6 + $0x160] sm:$0xff]
        %v1248 = vld [vmem:[#allocation6 + $0x168] sm:$0xff]
        %v1249 = vld [vmem:[#allocation6 + $0x170] sm:$0xff]
        %v1250 = vld [vmem:[#allocation6 + $0x178] sm:$0xff]
        %v1251 = vld [vmem:[#allocation6 + $0x180] sm:$0xff]
        %v1252 = vld [vmem:[#allocation6 + $0x188] sm:$0xff]
        %v1253 = vld [vmem:[#allocation6 + $0x190] sm:$0xff]
        %v1254 = vld [vmem:[#allocation6 + $0x198] sm:$0xff]
        %v1255 = vld [vmem:[#allocation6 + $0x1a0] sm:$0xff]
        %v1256 = vld [vmem:[#allocation6 + $0x1a8] sm:$0xff]
        %v1257 = vld [vmem:[#allocation6 + $0x1b0] sm:$0xff]
        %v1258 = vld [vmem:[#allocation6 + $0x1b8] sm:$0xff]
        %v1259 = vld [vmem:[#allocation6 + $0x1c0] sm:$0xff]
        %v1260 = vld [vmem:[#allocation6 + $0x1c8] sm:$0xff]
        %v1261 = vld [vmem:[#allocation6 + $0x1d0] sm:$0xff]
        %v1262 = vld [vmem:[#allocation6 + $0x1d8] sm:$0xff]
        %v1263 = vld [vmem:[#allocation6 + $0x1e0] sm:$0xff]
        %v1264 = vld [vmem:[#allocation6 + $0x1e8] sm:$0xff]
        %v1265 = vld [vmem:[#allocation6 + $0x1f0] sm:$0xff]
        %v1266 = vld [vmem:[#allocation6 + $0x1f8] sm:$0xff]
        %v1267 = vld [vmem:[#allocation6 + $0x200] sm:$0xff]
        %v1268 = vld [vmem:[#allocation6 + $0x208] sm:$0xff]
        %v1269 = vld [vmem:[#allocation6 + $0x210] sm:$0xff]
        %v1270 = vld [vmem:[#allocation6 + $0x218] sm:$0xff]
        %v1271 = vld [vmem:[#allocation6 + $0x220] sm:$0xff]
        %v1272 = vld [vmem:[#allocation6 + $0x228] sm:$0xff]
        %v1273 = vld [vmem:[#allocation6 + $0x230] sm:$0xff]
        %v1274 = vld [vmem:[#allocation6 + $0x238] sm:$0xff]
        %v1275 = vld [vmem:[#allocation6 + $0x240] sm:$0xff]
        %v1276 = vld [vmem:[#allocation6 + $0x248] sm:$0xff]
        %v1277 = vld [vmem:[#allocation6 + $0x250] sm:$0xff]
        %v1278 = vld [vmem:[#allocation6 + $0x258] sm:$0xff]
        %v1279 = vld [vmem:[#allocation6 + $0x260] sm:$0xff]
        %v1280 = vld [vmem:[#allocation6 + $0x268] sm:$0xff]
        %v1281 = vld [vmem:[#allocation6 + $0x270] sm:$0xff]
        %v1282 = vld [vmem:[#allocation6 + $0x278] sm:$0xff]
        %v1283 = vld [vmem:[#allocation6 + $0x280] sm:$0xff]
        %v1284 = vld [vmem:[#allocation6 + $0x288] sm:$0xff]
        %v1285 = vld [vmem:[#allocation6 + $0x290] sm:$0xff]
        %v1286 = vld [vmem:[#allocation6 + $0x298] sm:$0xff]
        %v1287 = vld [vmem:[#allocation6 + $0x2a0] sm:$0xff]
        %v1288 = vld [vmem:[#allocation6 + $0x2a8] sm:$0xff]
        %v1289 = vld [vmem:[#allocation6 + $0x2b0] sm:$0xff]
        %v1290 = vld [vmem:[#allocation6 + $0x2b8] sm:$0xff]
        %v1291 = vld [vmem:[#allocation6 + $0x2c0] sm:$0xff]
        %v1292 = vld [vmem:[#allocation6 + $0x2c8] sm:$0xff]
        %v1293 = vld [vmem:[#allocation6 + $0x2d0] sm:$0xff]
        %v1294 = vld [vmem:[#allocation6 + $0x2d8] sm:$0xff]
        %v1295 = vld [vmem:[#allocation6 + $0x2e0] sm:$0xff]
        %v1296 = vld [vmem:[#allocation6 + $0x2e8] sm:$0xff]
        %v1297 = vld [vmem:[#allocation6 + $0x2f0] sm:$0xff]
        %v1298 = vld [vmem:[#allocation6 + $0x2f8] sm:$0xff]
        %v1299 = vld [vmem:[#allocation6 + $0x300] sm:$0xff]
        %v1300 = vld [vmem:[#allocation6 + $0x308] sm:$0xff]
        %v1301 = vld [vmem:[#allocation6 + $0x310] sm:$0xff]
        %v1302 = vld [vmem:[#allocation6 + $0x318] sm:$0xff]
        %v1303 = vld [vmem:[#allocation6 + $0x320] sm:$0xff]
        %v1304 = vld [vmem:[#allocation6 + $0x328] sm:$0xff]
        %v1305 = vld [vmem:[#allocation6 + $0x330] sm:$0xff]
        %v1306 = vld [vmem:[#allocation6 + $0x338] sm:$0xff]
        %v1307 = vld [vmem:[#allocation6 + $0x340] sm:$0xff]
        %v1308 = vld [vmem:[#allocation6 + $0x348] sm:$0xff]
        %v1309 = vld [vmem:[#allocation6 + $0x350] sm:$0xff]
        %v1310 = vld [vmem:[#allocation6 + $0x358] sm:$0xff]
        %v1311 = vld [vmem:[#allocation6 + $0x360] sm:$0xff]
        %v1312 = vld [vmem:[#allocation6 + $0x368] sm:$0xff]
        %v1313 = vld [vmem:[#allocation6 + $0x370] sm:$0xff]
        %v1314 = vld [vmem:[#allocation6 + $0x378] sm:$0xff]
        %v1315 = vld [vmem:[#allocation6 + $0x380] sm:$0xff]
        %v1316 = vld [vmem:[#allocation6 + $0x388] sm:$0xff]
        %v1317 = vld [vmem:[#allocation6 + $0x390] sm:$0xff]
        %v1318 = vld [vmem:[#allocation6 + $0x398] sm:$0xff]
        %v1319 = vld [vmem:[#allocation6 + $0x3a0] sm:$0xff]
        %v1320 = vld [vmem:[#allocation6 + $0x3a8] sm:$0xff]
        %v1321 = vld [vmem:[#allocation6 + $0x3b0] sm:$0xff]
        %v1322 = vld [vmem:[#allocation6 + $0x3b8] sm:$0xff]
        %v1323 = vld [vmem:[#allocation6 + $0x3c0] sm:$0xff]
        %v1324 = vld [vmem:[#allocation6 + $0x3c8] sm:$0xff]
        %v1325 = vld [vmem:[#allocation6 + $0x3d0] sm:$0xff]
        %v1326 = vld [vmem:[#allocation6 + $0x3d8] sm:$0xff]
        %v1327 = vld [vmem:[#allocation6 + $0x3e0] sm:$0xff]
        %v1328 = vld [vmem:[#allocation6 + $0x3e8] sm:$0xff]
        %v1329 = vld [vmem:[#allocation6 + $0x3f0] sm:$0xff]
        %v1330 = vld [vmem:[#allocation6 + $0x3f8] sm:$0xff]
        %v1331 = vld [vmem:[#allocation6 + $0x400] sm:$0xff]
        %v1332 = vld [vmem:[#allocation6 + $0x408] sm:$0xff]
        %v1333 = vld [vmem:[#allocation6 + $0x410] sm:$0xff]
        %v1334 = vld [vmem:[#allocation6 + $0x418] sm:$0xff]
        %v1335 = vld [vmem:[#allocation6 + $0x420] sm:$0xff]
        %v1336 = vld [vmem:[#allocation6 + $0x428] sm:$0xff]
        %v1337 = vld [vmem:[#allocation6 + $0x430] sm:$0xff]
        %v1338 = vld [vmem:[#allocation6 + $0x438] sm:$0xff]
        %v1339 = vld [vmem:[#allocation6 + $0x440] sm:$0xff]
        %v1340 = vld [vmem:[#allocation6 + $0x448] sm:$0xff]
        %v1341 = vld [vmem:[#allocation6 + $0x450] sm:$0xff]
        %v1342 = vld [vmem:[#allocation6 + $0x458] sm:$0xff]
        %v1343 = vld [vmem:[#allocation6 + $0x460] sm:$0xff]
        %v1344 = vld [vmem:[#allocation6 + $0x468] sm:$0xff]
        %v1345 = vld [vmem:[#allocation6 + $0x470] sm:$0xff]
        %v1346 = vld [vmem:[#allocation6 + $0x478] sm:$0xff]
        %v1347 = vld [vmem:[#allocation6 + $0x480] sm:$0xff]
        %v1348 = vld [vmem:[#allocation6 + $0x488] sm:$0xff]
        %v1349 = vld [vmem:[#allocation6 + $0x490] sm:$0xff]
        %v1350 = vld [vmem:[#allocation6 + $0x498] sm:$0xff]
        %v1351 = vld [vmem:[#allocation6 + $0x4a0] sm:$0xff]
        %v1352 = vld [vmem:[#allocation6 + $0x4a8] sm:$0xff]
        %v1353 = vld [vmem:[#allocation6 + $0x4b0] sm:$0xff]
        %v1354 = vld [vmem:[#allocation6 + $0x4b8] sm:$0xff]
        %v1355 = vld [vmem:[#allocation6 + $0x4c0] sm:$0xff]
        %v1356 = vld [vmem:[#allocation6 + $0x4c8] sm:$0xff]
        %v1357 = vld [vmem:[#allocation6 + $0x4d0] sm:$0xff]
        %v1358 = vld [vmem:[#allocation6 + $0x4d8] sm:$0xff]
        %v1359 = vld [vmem:[#allocation6 + $0x4e0] sm:$0xff]
        %v1360 = vld [vmem:[#allocation6 + $0x4e8] sm:$0xff]
        %v1361 = vld [vmem:[#allocation6 + $0x4f0] sm:$0xff]
        %v1362 = vld [vmem:[#allocation6 + $0x4f8] sm:$0xff]
        %v1363 = vld [vmem:[#allocation6 + $0x500] sm:$0xff]
        %v1364 = vld [vmem:[#allocation6 + $0x508] sm:$0xff]
        %v1365 = vld [vmem:[#allocation6 + $0x510] sm:$0xff]
        %v1366 = vld [vmem:[#allocation6 + $0x518] sm:$0xff]
        %v1367 = vld [vmem:[#allocation6 + $0x520] sm:$0xff]
        %v1368 = vld [vmem:[#allocation6 + $0x528] sm:$0xff]
        %v1369 = vld [vmem:[#allocation6 + $0x530] sm:$0xff]
        %v1370 = vld [vmem:[#allocation6 + $0x538] sm:$0xff]
        %v1371 = vld [vmem:[#allocation6 + $0x540] sm:$0xff]
        %v1372 = vld [vmem:[#allocation6 + $0x548] sm:$0xff]
        %v1373 = vld [vmem:[#allocation6 + $0x550] sm:$0xff]
        %v1374 = vld [vmem:[#allocation6 + $0x558] sm:$0xff]
        %v1375 = vld [vmem:[#allocation6 + $0x560] sm:$0xff]
        %v1376 = vld [vmem:[#allocation6 + $0x568] sm:$0xff]
        %v1377 = vld [vmem:[#allocation6 + $0x570] sm:$0xff]
        %v1378 = vld [vmem:[#allocation6 + $0x578] sm:$0xff]
        %v1379 = vld [vmem:[#allocation6 + $0x580] sm:$0xff]
        %v1380 = vld [vmem:[#allocation6 + $0x588] sm:$0xff]
        %v1381 = vld [vmem:[#allocation6 + $0x590] sm:$0xff]
        %v1382 = vld [vmem:[#allocation6 + $0x598] sm:$0xff]
        %v1383 = vld [vmem:[#allocation6 + $0x5a0] sm:$0xff]
        %v1384 = vld [vmem:[#allocation6 + $0x5a8] sm:$0xff]
        %v1385 = vld [vmem:[#allocation6 + $0x5b0] sm:$0xff]
        %v1386 = vld [vmem:[#allocation6 + $0x5b8] sm:$0xff]
        %v1387 = vld [vmem:[#allocation6 + $0x5c0] sm:$0xff]
        %v1388 = vld [vmem:[#allocation6 + $0x5c8] sm:$0xff]
        %v1389 = vld [vmem:[#allocation6 + $0x5d0] sm:$0xff]
        %v1390 = vld [vmem:[#allocation6 + $0x5d8] sm:$0xff]
        %v1391 = vld [vmem:[#allocation6 + $0x5e0] sm:$0xff]
        %v1392 = vld [vmem:[#allocation6 + $0x5e8] sm:$0xff]
        %v1393 = vld [vmem:[#allocation6 + $0x5f0] sm:$0xff]
        %v1394 = vld [vmem:[#allocation6 + $0x5f8] sm:$0xff]
        %v1395 = vld [vmem:[#allocation2] sm:$0xff]
        %v1396 = vld [vmem:[#allocation8] sm:$0xff]
        %v1397 = vld [vmem:[#allocation8 + $0x8] sm:$0xff]
        %v1398 = vld [vmem:[#allocation8 + $0x10] sm:$0xff]
        %v1399 = vld [vmem:[#allocation8 + $0x18] sm:$0xff]
        %v1400 = vld [vmem:[#allocation8 + $0x20] sm:$0xff]
        %v1401 = vld [vmem:[#allocation8 + $0x28] sm:$0xff]
        %v1402 = vld [vmem:[#allocation8 + $0x30] sm:$0xff]
        %v1403 = vld [vmem:[#allocation8 + $0x38] sm:$0xff]
        %v1404 = vld [vmem:[#allocation8 + $0x40] sm:$0xff]
        %v1405 = vld [vmem:[#allocation8 + $0x48] sm:$0xff]
        %v1406 = vld [vmem:[#allocation8 + $0x50] sm:$0xff]
        %v1407 = vld [vmem:[#allocation8 + $0x58] sm:$0xff]
        %v1408 = vld [vmem:[#allocation8 + $0x60] sm:$0xff]
        %v1409 = vld [vmem:[#allocation8 + $0x68] sm:$0xff]
        %v1410 = vld [vmem:[#allocation8 + $0x70] sm:$0xff]
        %v1411 = vld [vmem:[#allocation8 + $0x78] sm:$0xff]
        %v1412 = vld [vmem:[#allocation8 + $0x80] sm:$0xff]
        %v1413 = vld [vmem:[#allocation8 + $0x88] sm:$0xff]
        %v1414 = vld [vmem:[#allocation8 + $0x90] sm:$0xff]
        %v1415 = vld [vmem:[#allocation8 + $0x98] sm:$0xff]
        %v1416 = vld [vmem:[#allocation8 + $0xa0] sm:$0xff]
        %v1417 = vld [vmem:[#allocation8 + $0xa8] sm:$0xff]
        %v1418 = vld [vmem:[#allocation8 + $0xb0] sm:$0xff]
        %v1419 = vld [vmem:[#allocation8 + $0xb8] sm:$0xff]
        %v1420 = vld [vmem:[#allocation8 + $0xc0] sm:$0xff]
        %v1421 = vld [vmem:[#allocation8 + $0xc8] sm:$0xff]
        %v1422 = vld [vmem:[#allocation8 + $0xd0] sm:$0xff]
        %v1423 = vld [vmem:[#allocation8 + $0xd8] sm:$0xff]
        %v1424 = vld [vmem:[#allocation8 + $0xe0] sm:$0xff]
        %v1425 = vld [vmem:[#allocation8 + $0xe8] sm:$0xff]
        %v1426 = vld [vmem:[#allocation8 + $0xf0] sm:$0xff]
        %v1427 = vld [vmem:[#allocation8 + $0xf8] sm:$0xff]
        %v1428 = vld [vmem:[#allocation8 + $0x100] sm:$0xff]
        %v1429 = vld [vmem:[#allocation8 + $0x108] sm:$0xff]
        %v1430 = vld [vmem:[#allocation8 + $0x110] sm:$0xff]
        %v1431 = vld [vmem:[#allocation8 + $0x118] sm:$0xff]
        %v1432 = vld [vmem:[#allocation8 + $0x120] sm:$0xff]
        %v1433 = vld [vmem:[#allocation8 + $0x128] sm:$0xff]
        %v1434 = vld [vmem:[#allocation8 + $0x130] sm:$0xff]
        %v1435 = vld [vmem:[#allocation8 + $0x138] sm:$0xff]
        %v1436 = vld [vmem:[#allocation8 + $0x140] sm:$0xff]
        %v1437 = vld [vmem:[#allocation8 + $0x148] sm:$0xff]
        %v1438 = vld [vmem:[#allocation8 + $0x150] sm:$0xff]
        %v1439 = vld [vmem:[#allocation8 + $0x158] sm:$0xff]
        %v1440 = vld [vmem:[#allocation8 + $0x160] sm:$0xff]
        %v1441 = vld [vmem:[#allocation8 + $0x168] sm:$0xff]
        %v1442 = vld [vmem:[#allocation8 + $0x170] sm:$0xff]
        %v1443 = vld [vmem:[#allocation8 + $0x178] sm:$0xff]
        %v1444 = vld [vmem:[#allocation8 + $0x180] sm:$0xff]
        %v1445 = vld [vmem:[#allocation8 + $0x188] sm:$0xff]
        %v1446 = vld [vmem:[#allocation8 + $0x190] sm:$0xff]
        %v1447 = vld [vmem:[#allocation8 + $0x198] sm:$0xff]
        %v1448 = vld [vmem:[#allocation8 + $0x1a0] sm:$0xff]
        %v1449 = vld [vmem:[#allocation8 + $0x1a8] sm:$0xff]
        %v1450 = vld [vmem:[#allocation8 + $0x1b0] sm:$0xff]
        %v1451 = vld [vmem:[#allocation8 + $0x1b8] sm:$0xff]
        %v1452 = vld [vmem:[#allocation8 + $0x1c0] sm:$0xff]
        %v1453 = vld [vmem:[#allocation8 + $0x1c8] sm:$0xff]
        %v1454 = vld [vmem:[#allocation8 + $0x1d0] sm:$0xff]
        %v1455 = vld [vmem:[#allocation8 + $0x1d8] sm:$0xff]
        %v1456 = vld [vmem:[#allocation8 + $0x1e0] sm:$0xff]
        %v1457 = vld [vmem:[#allocation8 + $0x1e8] sm:$0xff]
        %v1458 = vld [vmem:[#allocation8 + $0x1f0] sm:$0xff]
        %v1459 = vld [vmem:[#allocation8 + $0x1f8] sm:$0xff]
        %1460 = vmatprep.subr.mxu0 %v1397
        %1461 = vmatpush1.msra.mxu0 %v1396
        %1462 = vmatprep.subr.mxu0 %v1401
        %1463 = vmatpush1.msra.mxu0 %v1400
        %1464 = vmatprep.subr.mxu0 %v1405
        %1465 = vmatpush1.msra.mxu0 %v1404
        %1466 = vmatprep.subr.mxu0 %v1409
        %1467 = vmatpush1.msra.mxu0 %v1408
        %1468 = vmatprep.subr.mxu0 %v1413
        %1469 = vmatpush1.msra.mxu0 %v1412
        %1470 = vmatprep.subr.mxu0 %v1417
        %1471 = vmatpush1.msra.mxu0 %v1416
        %1472 = vmatprep.subr.mxu0 %v1421
        %1473 = vmatpush1.msra.mxu0 %v1420
        %1474 = vmatprep.subr.mxu0 %v1425
        %1475 = vmatpush1.msra.mxu0 %v1424
        %1476 = vmatprep.subr.mxu0 %v1429
        %1477 = vmatpush1.msra.mxu0 %v1428
        %1478 = vmatprep.subr.mxu0 %v1433
        %1479 = vmatpush1.msra.mxu0 %v1432
        %1480 = vmatprep.subr.mxu0 %v1437
        %1481 = vmatpush1.msra.mxu0 %v1436
        %1482 = vmatprep.subr.mxu0 %v1441
        %1483 = vmatpush1.msra.mxu0 %v1440
        %1484 = vmatprep.subr.mxu0 %v1445
        %1485 = vmatpush1.msra.mxu0 %v1444
        %1486 = vmatprep.subr.mxu0 %v1449
        %1487 = vmatpush1.msra.mxu0 %v1448
        %1488 = vmatprep.subr.mxu0 %v1453
        %1489 = vmatpush1.msra.mxu0 %v1452
        %1490 = vmatprep.subr.mxu0 %v1457
        %1491 = vmatpush1.msra.mxu0 %v1456
        %1492 = vmatprep.subr.mxu0 0.0
        %1493 = vmatpush1.msra.mxu0 0.0
        %1494 = vmatprep.subr.mxu0 0.0
        %1495 = vmatpush1.msra.mxu0 0.0
        %1496 = vmatprep.subr.mxu0 0.0
        %1497 = vmatpush1.msra.mxu0 0.0
        %1498 = vmatprep.subr.mxu0 0.0
        %1499 = vmatpush1.msra.mxu0 0.0
        %1500 = vmatprep.subr.mxu0 0.0
        %1501 = vmatpush1.msra.mxu0 0.0
        %1502 = vmatprep.subr.mxu0 0.0
        %1503 = vmatpush1.msra.mxu0 0.0
        %1504 = vmatprep.subr.mxu0 0.0
        %1505 = vmatpush1.msra.mxu0 0.0
        %1506 = vmatprep.subr.mxu0 0.0
        %1507 = vmatpush1.msra.mxu0 0.0
        %1508 = vmatprep.subr.mxu0 0.0
        %1509 = vmatpush1.msra.mxu0 0.0
        %1510 = vmatprep.subr.mxu0 0.0
        %1511 = vmatpush1.msra.mxu0 0.0
        %1512 = vmatprep.subr.mxu0 0.0
        %1513 = vmatpush1.msra.mxu0 0.0
        %1514 = vmatprep.subr.mxu0 0.0
        %1515 = vmatpush1.msra.mxu0 0.0
        %1516 = vmatprep.subr.mxu0 0.0
        %1517 = vmatpush1.msra.mxu0 0.0
        %1518 = vmatprep.subr.mxu0 0.0
        %1519 = vmatpush1.msra.mxu0 0.0
        %1520 = vmatprep.subr.mxu0 0.0
        %1521 = vmatpush1.msra.mxu0 0.0
        %1522 = vmatprep.subr.mxu0 0.0
        %1523 = vmatpush1.msra.mxu0 0.0
        %1524 = vmatprep.mubr.f32.mxu0 0.0
        %1525 = vmatmul.mubr.f32.gmra.mrb[0].mxu0 %v1395
        %v1526 = vpop.f32.mrb[0].mxu0
        %v1527 = vadd.f32 0.0, %v1526
        %v1528 = vpop.f32.mrb[0].mxu0
        %v1529 = vadd.f32 0.0, %v1528
        %1530 = vdwg.mxu0
        %1531 = vmatprep.subr.mxu0 %v1399
        %1532 = vmatpush1.msra.mxu0 %v1398
        %1533 = vmatprep.subr.mxu0 %v1403
        %1534 = vmatpush1.msra.mxu0 %v1402
        %1535 = vmatprep.subr.mxu0 %v1407
        %1536 = vmatpush1.msra.mxu0 %v1406
        %1537 = vmatprep.subr.mxu0 %v1411
        %1538 = vmatpush1.msra.mxu0 %v1410
        %1539 = vmatprep.subr.mxu0 %v1415
        %1540 = vmatpush1.msra.mxu0 %v1414
        %1541 = vmatprep.subr.mxu0 %v1419
        %1542 = vmatpush1.msra.mxu0 %v1418
        %1543 = vmatprep.subr.mxu0 %v1423
        %1544 = vmatpush1.msra.mxu0 %v1422
        %1545 = vmatprep.subr.mxu0 %v1427
        %1546 = vmatpush1.msra.mxu0 %v1426
        %1547 = vmatprep.subr.mxu0 %v1431
        %1548 = vmatpush1.msra.mxu0 %v1430
        %1549 = vmatprep.subr.mxu0 %v1435
        %1550 = vmatpush1.msra.mxu0 %v1434
        %1551 = vmatprep.subr.mxu0 %v1439
        %1552 = vmatpush1.msra.mxu0 %v1438
        %1553 = vmatprep.subr.mxu0 %v1443
        %1554 = vmatpush1.msra.mxu0 %v1442
        %1555 = vmatprep.subr.mxu0 %v1447
        %1556 = vmatpush1.msra.mxu0 %v1446
        %1557 = vmatprep.subr.mxu0 %v1451
        %1558 = vmatpush1.msra.mxu0 %v1450
        %1559 = vmatprep.subr.mxu0 %v1455
        %1560 = vmatpush1.msra.mxu0 %v1454
        %1561 = vmatprep.subr.mxu0 %v1459
        %1562 = vmatpush1.msra.mxu0 %v1458
        %1563 = vmatprep.subr.mxu0 0.0
        %1564 = vmatpush1.msra.mxu0 0.0
        %1565 = vmatprep.subr.mxu0 0.0
        %1566 = vmatpush1.msra.mxu0 0.0
        %1567 = vmatprep.subr.mxu0 0.0
        %1568 = vmatpush1.msra.mxu0 0.0
        %1569 = vmatprep.subr.mxu0 0.0
        %1570 = vmatpush1.msra.mxu0 0.0
        %1571 = vmatprep.subr.mxu0 0.0
        %1572 = vmatpush1.msra.mxu0 0.0
        %1573 = vmatprep.subr.mxu0 0.0
        %1574 = vmatpush1.msra.mxu0 0.0
        %1575 = vmatprep.subr.mxu0 0.0
        %1576 = vmatpush1.msra.mxu0 0.0
        %1577 = vmatprep.subr.mxu0 0.0
        %1578 = vmatpush1.msra.mxu0 0.0
        %1579 = vmatprep.subr.mxu0 0.0
        %1580 = vmatpush1.msra.mxu0 0.0
        %1581 = vmatprep.subr.mxu0 0.0
        %1582 = vmatpush1.msra.mxu0 0.0
        %1583 = vmatprep.subr.mxu0 0.0
        %1584 = vmatpush1.msra.mxu0 0.0
        %1585 = vmatprep.subr.mxu0 0.0
        %1586 = vmatpush1.msra.mxu0 0.0
        %1587 = vmatprep.subr.mxu0 0.0
        %1588 = vmatpush1.msra.mxu0 0.0
        %1589 = vmatprep.subr.mxu0 0.0
        %1590 = vmatpush1.msra.mxu0 0.0
        %1591 = vmatprep.subr.mxu0 0.0
        %1592 = vmatpush1.msra.mxu0 0.0
        %1593 = vmatprep.subr.mxu0 0.0
        %1594 = vmatpush1.msra.mxu0 0.0
        %1595 = vmatprep.mubr.f32.mxu0 0.0
        %1596 = vmatmul.mubr.f32.gmra.mrb[0].mxu0 %v1395
        %v1597 = vpop.f32.mrb[0].mxu0
        %v1598 = vadd.f32 0.0, %v1597
        %v1599 = vpop.f32.mrb[0].mxu0
        %v1600 = vadd.f32 0.0, %v1599
        %1601 = vdwg.mxu0
        %1602 = vmatprep.subr.mxu0 %v1204
        %1603 = vmatpush1.msra.mxu0 %v1203
        %1604 = vmatprep.subr.mxu0 %v1208
        %1605 = vmatpush1.msra.mxu0 %v1207
        %1606 = vmatprep.subr.mxu0 %v1212
        %1607 = vmatpush1.msra.mxu0 %v1211
        %1608 = vmatprep.subr.mxu0 %v1216
        %1609 = vmatpush1.msra.mxu0 %v1215
        %1610 = vmatprep.subr.mxu0 %v1220
        %1611 = vmatpush1.msra.mxu0 %v1219
        %1612 = vmatprep.subr.mxu0 %v1224
        %1613 = vmatpush1.msra.mxu0 %v1223
        %1614 = vmatprep.subr.mxu0 %v1228
        %1615 = vmatpush1.msra.mxu0 %v1227
        %1616 = vmatprep.subr.mxu0 %v1232
        %1617 = vmatpush1.msra.mxu0 %v1231
        %1618 = vmatprep.subr.mxu0 %v1236
        %1619 = vmatpush1.msra.mxu0 %v1235
        %1620 = vmatprep.subr.mxu0 %v1240
        %1621 = vmatpush1.msra.mxu0 %v1239
        %1622 = vmatprep.subr.mxu0 %v1244
        %1623 = vmatpush1.msra.mxu0 %v1243
        %1624 = vmatprep.subr.mxu0 %v1248
        %1625 = vmatpush1.msra.mxu0 %v1247
        %1626 = vmatprep.subr.mxu0 %v1252
        %1627 = vmatpush1.msra.mxu0 %v1251
        %1628 = vmatprep.subr.mxu0 %v1256
        %1629 = vmatpush1.msra.mxu0 %v1255
        %1630 = vmatprep.subr.mxu0 %v1260
        %1631 = vmatpush1.msra.mxu0 %v1259
        %1632 = vmatprep.subr.mxu0 %v1264
        %1633 = vmatpush1.msra.mxu0 %v1263
        %1634 = vmatprep.subr.mxu0 %v1268
        %1635 = vmatpush1.msra.mxu0 %v1267
        %1636 = vmatprep.subr.mxu0 %v1272
        %1637 = vmatpush1.msra.mxu0 %v1271
        %1638 = vmatprep.subr.mxu0 %v1276
        %1639 = vmatpush1.msra.mxu0 %v1275
        %1640 = vmatprep.subr.mxu0 %v1280
        %1641 = vmatpush1.msra.mxu0 %v1279
        %1642 = vmatprep.subr.mxu0 %v1284
        %1643 = vmatpush1.msra.mxu0 %v1283
        %1644 = vmatprep.subr.mxu0 %v1288
        %1645 = vmatpush1.msra.mxu0 %v1287
        %1646 = vmatprep.subr.mxu0 %v1292
        %1647 = vmatpush1.msra.mxu0 %v1291
        %1648 = vmatprep.subr.mxu0 %v1296
        %1649 = vmatpush1.msra.mxu0 %v1295
        %1650 = vmatprep.subr.mxu0 %v1300
        %1651 = vmatpush1.msra.mxu0 %v1299
        %1652 = vmatprep.subr.mxu0 %v1304
        %1653 = vmatpush1.msra.mxu0 %v1303
        %1654 = vmatprep.subr.mxu0 %v1308
        %1655 = vmatpush1.msra.mxu0 %v1307
        %1656 = vmatprep.subr.mxu0 %v1312
        %1657 = vmatpush1.msra.mxu0 %v1311
        %1658 = vmatprep.subr.mxu0 %v1316
        %1659 = vmatpush1.msra.mxu0 %v1315
        %1660 = vmatprep.subr.mxu0 %v1320
        %1661 = vmatpush1.msra.mxu0 %v1319
        %1662 = vmatprep.subr.mxu0 %v1324
        %1663 = vmatpush1.msra.mxu0 %v1323
        %1664 = vmatprep.subr.mxu0 %v1328
        %1665 = vmatpush1.msra.mxu0 %v1327
        %1666 = vmatprep.mubr.f32.mxu0 %v1202
        %1667 = vmatmul.mubr.f32.gmra.mrb[0].mxu0 %v1185
        %v1668 = vpop.f32.mrb[0].mxu0
        %v1669 = vadd.f32 %v1527, %v1668
        %v1670 = vpop.f32.mrb[0].mxu0
        %v1671 = vadd.f32 %v1529, %v1670
        %1672 = vdwg.mxu0
        %1673 = vmatprep.subr.mxu0 %v1332
        %1674 = vmatpush1.msra.mxu0 %v1331
        %1675 = vmatprep.subr.mxu0 %v1336
        %1676 = vmatpush1.msra.mxu0 %v1335
        %1677 = vmatprep.subr.mxu0 %v1340
        %1678 = vmatpush1.msra.mxu0 %v1339
        %1679 = vmatprep.subr.mxu0 %v1344
        %1680 = vmatpush1.msra.mxu0 %v1343
        %1681 = vmatprep.subr.mxu0 %v1348
        %1682 = vmatpush1.msra.mxu0 %v1347
        %1683 = vmatprep.subr.mxu0 %v1352
        %1684 = vmatpush1.msra.mxu0 %v1351
        %1685 = vmatprep.subr.mxu0 %v1356
        %1686 = vmatpush1.msra.mxu0 %v1355
        %1687 = vmatprep.subr.mxu0 %v1360
        %1688 = vmatpush1.msra.mxu0 %v1359
        %1689 = vmatprep.subr.mxu0 %v1364
        %1690 = vmatpush1.msra.mxu0 %v1363
        %1691 = vmatprep.subr.mxu0 %v1368
        %1692 = vmatpush1.msra.mxu0 %v1367
        %1693 = vmatprep.subr.mxu0 %v1372
        %1694 = vmatpush1.msra.mxu0 %v1371
        %1695 = vmatprep.subr.mxu0 %v1376
        %1696 = vmatpush1.msra.mxu0 %v1375
        %1697 = vmatprep.subr.mxu0 %v1380
        %1698 = vmatpush1.msra.mxu0 %v1379
        %1699 = vmatprep.subr.mxu0 %v1384
        %1700 = vmatpush1.msra.mxu0 %v1383
        %1701 = vmatprep.subr.mxu0 %v1388
        %1702 = vmatpush1.msra.mxu0 %v1387
        %1703 = vmatprep.subr.mxu0 %v1392
        %1704 = vmatpush1.msra.mxu0 %v1391
        %1705 = vmatprep.subr.mxu0 0.0
        %1706 = vmatpush1.msra.mxu0 0.0
        %1707 = vmatprep.subr.mxu0 0.0
        %1708 = vmatpush1.msra.mxu0 0.0
        %1709 = vmatprep.subr.mxu0 0.0
        %1710 = vmatpush1.msra.mxu0 0.0
        %1711 = vmatprep.subr.mxu0 0.0
        %1712 = vmatpush1.msra.mxu0 0.0
        %1713 = vmatprep.subr.mxu0 0.0
        %1714 = vmatpush1.msra.mxu0 0.0
        %1715 = vmatprep.subr.mxu0 0.0
        %1716 = vmatpush1.msra.mxu0 0.0
        %1717 = vmatprep.subr.mxu0 0.0
        %1718 = vmatpush1.msra.mxu0 0.0
        %1719 = vmatprep.subr.mxu0 0.0
        %1720 = vmatpush1.msra.mxu0 0.0
        %1721 = vmatprep.subr.mxu0 0.0
        %1722 = vmatpush1.msra.mxu0 0.0
        %1723 = vmatprep.subr.mxu0 0.0
        %1724 = vmatpush1.msra.mxu0 0.0
        %1725 = vmatprep.subr.mxu0 0.0
        %1726 = vmatpush1.msra.mxu0 0.0
        %1727 = vmatprep.subr.mxu0 0.0
        %1728 = vmatpush1.msra.mxu0 0.0
        %1729 = vmatprep.subr.mxu0 0.0
        %1730 = vmatpush1.msra.mxu0 0.0
        %1731 = vmatprep.subr.mxu0 0.0
        %1732 = vmatpush1.msra.mxu0 0.0
        %1733 = vmatprep.subr.mxu0 0.0
        %1734 = vmatpush1.msra.mxu0 0.0
        %1735 = vmatprep.subr.mxu0 0.0
        %1736 = vmatpush1.msra.mxu0 0.0
        %1737 = vmatprep.mubr.f32.mxu0 0.0
        %1738 = vmatmul.mubr.f32.gmra.mrb[0].mxu0 %v487
        %v1739 = vpop.f32.mrb[0].mxu0
        %v1740 = vadd.f32 %v1669, %v1739
        %v1741 = vpop.f32.mrb[0].mxu0
        %v1742 = vadd.f32 %v1671, %v1741
        %1743 = vdwg.mxu0
        %1744 = vmatprep.subr.mxu0 %v1206
        %1745 = vmatpush1.msra.mxu0 %v1205
        %1746 = vmatprep.subr.mxu0 %v1210
        %1747 = vmatpush1.msra.mxu0 %v1209
        %1748 = vmatprep.subr.mxu0 %v1214
        %1749 = vmatpush1.msra.mxu0 %v1213
        %1750 = vmatprep.subr.mxu0 %v1218
        %1751 = vmatpush1.msra.mxu0 %v1217
        %1752 = vmatprep.subr.mxu0 %v1222
        %1753 = vmatpush1.msra.mxu0 %v1221
        %1754 = vmatprep.subr.mxu0 %v1226
        %1755 = vmatpush1.msra.mxu0 %v1225
        %1756 = vmatprep.subr.mxu0 %v1230
        %1757 = vmatpush1.msra.mxu0 %v1229
        %1758 = vmatprep.subr.mxu0 %v1234
        %1759 = vmatpush1.msra.mxu0 %v1233
        %1760 = vmatprep.subr.mxu0 %v1238
        %1761 = vmatpush1.msra.mxu0 %v1237
        %1762 = vmatprep.subr.mxu0 %v1242
        %1763 = vmatpush1.msra.mxu0 %v1241
        %1764 = vmatprep.subr.mxu0 %v1246
        %1765 = vmatpush1.msra.mxu0 %v1245
        %1766 = vmatprep.subr.mxu0 %v1250
        %1767 = vmatpush1.msra.mxu0 %v1249
        %1768 = vmatprep.subr.mxu0 %v1254
        %1769 = vmatpush1.msra.mxu0 %v1253
        %1770 = vmatprep.subr.mxu0 %v1258
        %1771 = vmatpush1.msra.mxu0 %v1257
        %1772 = vmatprep.subr.mxu0 %v1262
        %1773 = vmatpush1.msra.mxu0 %v1261
        %1774 = vmatprep.subr.mxu0 %v1266
        %1775 = vmatpush1.msra.mxu0 %v1265
        %1776 = vmatprep.subr.mxu0 %v1270
        %1777 = vmatpush1.msra.mxu0 %v1269
        %1778 = vmatprep.subr.mxu0 %v1274
        %1779 = vmatpush1.msra.mxu0 %v1273
        %1780 = vmatprep.subr.mxu0 %v1278
        %1781 = vmatpush1.msra.mxu0 %v1277
        %1782 = vmatprep.subr.mxu0 %v1282
        %1783 = vmatpush1.msra.mxu0 %v1281
        %1784 = vmatprep.subr.mxu0 %v1286
        %1785 = vmatpush1.msra.mxu0 %v1285
        %1786 = vmatprep.subr.mxu0 %v1290
        %1787 = vmatpush1.msra.mxu0 %v1289
        %1788 = vmatprep.subr.mxu0 %v1294
        %1789 = vmatpush1.msra.mxu0 %v1293
        %1790 = vmatprep.subr.mxu0 %v1298
        %1791 = vmatpush1.msra.mxu0 %v1297
        %1792 = vmatprep.subr.mxu0 %v1302
        %1793 = vmatpush1.msra.mxu0 %v1301
        %1794 = vmatprep.subr.mxu0 %v1306
        %1795 = vmatpush1.msra.mxu0 %v1305
        %1796 = vmatprep.subr.mxu0 %v1310
        %1797 = vmatpush1.msra.mxu0 %v1309
        %1798 = vmatprep.subr.mxu0 %v1314
        %1799 = vmatpush1.msra.mxu0 %v1313
        %1800 = vmatprep.subr.mxu0 %v1318
        %1801 = vmatpush1.msra.mxu0 %v1317
        %1802 = vmatprep.subr.mxu0 %v1322
        %1803 = vmatpush1.msra.mxu0 %v1321
        %1804 = vmatprep.subr.mxu0 %v1326
        %1805 = vmatpush1.msra.mxu0 %v1325
        %1806 = vmatprep.subr.mxu0 %v1330
        %1807 = vmatpush1.msra.mxu0 %v1329
        %1808 = vmatprep.mubr.f32.mxu0 %v1202
        %1809 = vmatmul.mubr.f32.gmra.mrb[0].mxu0 %v1185
        %v1810 = vpop.f32.mrb[0].mxu0
        %v1811 = vadd.f32 %v1598, %v1810
        %v1812 = vpop.f32.mrb[0].mxu0
        %v1813 = vadd.f32 %v1600, %v1812
        %1814 = vdwg.mxu0
        %1815 = vmatprep.subr.mxu0 %v1334
        %1816 = vmatpush1.msra.mxu0 %v1333
        %1817 = vmatprep.subr.mxu0 %v1338
        %1818 = vmatpush1.msra.mxu0 %v1337
        %1819 = vmatprep.subr.mxu0 %v1342
        %1820 = vmatpush1.msra.mxu0 %v1341
        %1821 = vmatprep.subr.mxu0 %v1346
        %1822 = vmatpush1.msra.mxu0 %v1345
        %1823 = vmatprep.subr.mxu0 %v1350
        %1824 = vmatpush1.msra.mxu0 %v1349
        %1825 = vmatprep.subr.mxu0 %v1354
        %1826 = vmatpush1.msra.mxu0 %v1353
        %1827 = vmatprep.subr.mxu0 %v1358
        %1828 = vmatpush1.msra.mxu0 %v1357
        %1829 = vmatprep.subr.mxu0 %v1362
        %1830 = vmatpush1.msra.mxu0 %v1361
        %1831 = vmatprep.subr.mxu0 %v1366
        %1832 = vmatpush1.msra.mxu0 %v1365
        %1833 = vmatprep.subr.mxu0 %v1370
        %1834 = vmatpush1.msra.mxu0 %v1369
        %1835 = vmatprep.subr.mxu0 %v1374
        %1836 = vmatpush1.msra.mxu0 %v1373
        %1837 = vmatprep.subr.mxu0 %v1378
        %1838 = vmatpush1.msra.mxu0 %v1377
        %1839 = vmatprep.subr.mxu0 %v1382
        %1840 = vmatpush1.msra.mxu0 %v1381
        %1841 = vmatprep.subr.mxu0 %v1386
        %1842 = vmatpush1.msra.mxu0 %v1385
        %1843 = vmatprep.subr.mxu0 %v1390
        %1844 = vmatpush1.msra.mxu0 %v1389
        %1845 = vmatprep.subr.mxu0 %v1394
        %1846 = vmatpush1.msra.mxu0 %v1393
        %1847 = vmatprep.subr.mxu0 0.0
        %1848 = vmatpush1.msra.mxu0 0.0
        %1849 = vmatprep.subr.mxu0 0.0
        %1850 = vmatpush1.msra.mxu0 0.0
        %1851 = vmatprep.subr.mxu0 0.0
        %1852 = vmatpush1.msra.mxu0 0.0
        %1853 = vmatprep.subr.mxu0 0.0
        %1854 = vmatpush1.msra.mxu0 0.0
        %1855 = vmatprep.subr.mxu0 0.0
        %1856 = vmatpush1.msra.mxu0 0.0
        %1857 = vmatprep.subr.mxu0 0.0
        %1858 = vmatpush1.msra.mxu0 0.0
        %1859 = vmatprep.subr.mxu0 0.0
        %1860 = vmatpush1.msra.mxu0 0.0
        %1861 = vmatprep.subr.mxu0 0.0
        %1862 = vmatpush1.msra.mxu0 0.0
        %1863 = vmatprep.subr.mxu0 0.0
        %1864 = vmatpush1.msra.mxu0 0.0
        %1865 = vmatprep.subr.mxu0 0.0
        %1866 = vmatpush1.msra.mxu0 0.0
        %1867 = vmatprep.subr.mxu0 0.0
        %1868 = vmatpush1.msra.mxu0 0.0
        %1869 = vmatprep.subr.mxu0 0.0
        %1870 = vmatpush1.msra.mxu0 0.0
        %1871 = vmatprep.subr.mxu0 0.0
        %1872 = vmatpush1.msra.mxu0 0.0
        %1873 = vmatprep.subr.mxu0 0.0
        %1874 = vmatpush1.msra.mxu0 0.0
        %1875 = vmatprep.subr.mxu0 0.0
        %1876 = vmatpush1.msra.mxu0 0.0
        %1877 = vmatprep.subr.mxu0 0.0
        %1878 = vmatpush1.msra.mxu0 0.0
        %1879 = vmatprep.mubr.f32.mxu0 0.0
        %1880 = vmatmul.mubr.f32.gmra.mrb[0].mxu0 %v487
        %v1881 = vpop.f32.mrb[0].mxu0
        %v1882 = vadd.f32 %v1811, %v1881
        %v1883 = vpop.f32.mrb[0].mxu0
        %v1884 = vadd.f32 %v1813, %v1883
        %1885 = vdwg.mxu0
        %v1886 = vld [vmem:[%s8] sm:$0xf]
        %v1888 = vlaneseq
        %v1889 = vshrl.u32 %v1888, 7
        %v1890 = vsub.s32 0, %v1889
        %v1891 = vrot.slane %v1886, %v1890
        %v1892 = vlaneseq
        %v1893 = vshrl.u32 %v1892, 7
        %v1894 = vsub.s32 1, %v1893
        %v1895 = vrot.slane %v1886, %v1894
        %v1896 = vlaneseq
        %v1897 = vshrl.u32 %v1896, 7
        %v1898 = vsub.s32 2, %v1897
        %v1899 = vrot.slane %v1886, %v1898
        %v1900 = vlaneseq
        %v1901 = vshrl.u32 %v1900, 7
        %v1902 = vsub.s32 3, %v1901
        %v1903 = vrot.slane %v1886, %v1902
        %v1908 = vadd.f32 %v1740, %v1891
        %v1909 = vadd.f32 %v1742, %v1895
        %v1910 = vadd.f32 %v1882, %v1899
        %v1911 = vadd.f32 %v1884, %v1903
        %v1912 = vxor.u32 %v1908, 2147483648
        %v1913 = vmul.f32 %v1912, 1.442695
        %v1914 = vpow.pop %v1913
        %v1915 = vadd.f32 %v1914, 1.0
        %v1916 = vrcp.pop %v1915
        %v1917 = vmul.f32 1.0, %v1916
        %v1918 = vxor.u32 %v1909, 2147483648
        %v1919 = vmul.f32 %v1918, 1.442695
        %v1920 = vpow.pop %v1919
        %v1921 = vadd.f32 %v1920, 1.0
        %v1922 = vrcp.pop %v1921
        %v1923 = vmul.f32 1.0, %v1922
        %v1924 = vtanh.pop %v1910
        %v1925 = vxor.u32 %v1911, 2147483648
        %v1926 = vmul.f32 %v1925, 1.442695
        %v1927 = vpow.pop %v1926
        %v1928 = vadd.f32 %v1927, 1.0
        %v1929 = vrcp.pop %v1928
        %v1930 = vmul.f32 1.0, %v1929
        %v1931 = vld [vmem:[#allocation3] sm:$0xff]
        %v1932 = vmul.f32 %v1923, %v1931
        %v1933 = vmul.f32 %v1917, %v1924
        %v1934 = vadd.f32 %v1932, %v1933
        %v1935 = vtanh.pop %v1934
        %v1936 = vmul.f32 %v1930, %v1935
        %1937 = vst [vmem:[#allocation3] sm:$0xff] %v1934
        %1938 = vst [vmem:[#allocation2] sm:$0xff] %v1936
        %v1939 = vld [vmem:[#allocation9] sm:$0xff]
        %v1940 = vld [vmem:[#allocation9 + $0x8] sm:$0xff]
        %v1941 = vld [vmem:[#allocation9 + $0x10] sm:$0xff]
        %v1942 = vld [vmem:[#allocation9 + $0x18] sm:$0xff]
        %v1943 = vld [vmem:[#allocation9 + $0x20] sm:$0xff]
        %v1944 = vld [vmem:[#allocation9 + $0x28] sm:$0xff]
        %v1945 = vld [vmem:[#allocation9 + $0x30] sm:$0xff]
        %v1946 = vld [vmem:[#allocation9 + $0x38] sm:$0xff]
        %v1947 = vld [vmem:[#allocation9 + $0x40] sm:$0xff]
        %v1948 = vld [vmem:[#allocation9 + $0x48] sm:$0xff]
        %v1949 = vld [vmem:[#allocation9 + $0x50] sm:$0xff]
        %v1950 = vld [vmem:[#allocation9 + $0x58] sm:$0xff]
        %v1951 = vld [vmem:[#allocation9 + $0x60] sm:$0xff]
        %v1952 = vld [vmem:[#allocation9 + $0x68] sm:$0xff]
        %v1953 = vld [vmem:[#allocation9 + $0x70] sm:$0xff]
        %v1954 = vld [vmem:[#allocation9 + $0x78] sm:$0xff]
        %v1955 = vld [vmem:[#allocation9 + $0x80] sm:$0xff]
        %v1956 = vld [vmem:[#allocation9 + $0x88] sm:$0xff]
        %v1957 = vld [vmem:[#allocation9 + $0x90] sm:$0xff]
        %v1958 = vld [vmem:[#allocation9 + $0x98] sm:$0xff]
        %v1959 = vld [vmem:[#allocation9 + $0xa0] sm:$0xff]
        %v1960 = vld [vmem:[#allocation9 + $0xa8] sm:$0xff]
        %v1961 = vld [vmem:[#allocation9 + $0xb0] sm:$0xff]
        %v1962 = vld [vmem:[#allocation9 + $0xb8] sm:$0xff]
        %v1963 = vld [vmem:[#allocation9 + $0xc0] sm:$0xff]
        %v1964 = vld [vmem:[#allocation9 + $0xc8] sm:$0xff]
        %v1965 = vld [vmem:[#allocation9 + $0xd0] sm:$0xff]
        %v1966 = vld [vmem:[#allocation9 + $0xd8] sm:$0xff]
        %v1967 = vld [vmem:[#allocation9 + $0xe0] sm:$0xff]
        %v1968 = vld [vmem:[#allocation9 + $0xe8] sm:$0xff]
        %v1969 = vld [vmem:[#allocation9 + $0xf0] sm:$0xff]
        %v1970 = vld [vmem:[#allocation9 + $0xf8] sm:$0xff]
        %v1971 = vld [vmem:[#allocation9 + $0x100] sm:$0xff]
        %v1972 = vld [vmem:[#allocation9 + $0x108] sm:$0xff]
        %v1973 = vld [vmem:[#allocation9 + $0x110] sm:$0xff]
        %v1974 = vld [vmem:[#allocation9 + $0x118] sm:$0xff]
        %v1975 = vld [vmem:[#allocation9 + $0x120] sm:$0xff]
        %v1976 = vld [vmem:[#allocation9 + $0x128] sm:$0xff]
        %v1977 = vld [vmem:[#allocation9 + $0x130] sm:$0xff]
        %v1978 = vld [vmem:[#allocation9 + $0x138] sm:$0xff]
        %v1979 = vld [vmem:[#allocation9 + $0x140] sm:$0xff]
        %v1980 = vld [vmem:[#allocation9 + $0x148] sm:$0xff]
        %v1981 = vld [vmem:[#allocation9 + $0x150] sm:$0xff]
        %v1982 = vld [vmem:[#allocation9 + $0x158] sm:$0xff]
        %v1983 = vld [vmem:[#allocation9 + $0x160] sm:$0xff]
        %v1984 = vld [vmem:[#allocation9 + $0x168] sm:$0xff]
        %v1985 = vld [vmem:[#allocation9 + $0x170] sm:$0xff]
        %v1986 = vld [vmem:[#allocation9 + $0x178] sm:$0xff]
        %v1987 = vld [vmem:[#allocation9 + $0x180] sm:$0xff]
        %v1988 = vld [vmem:[#allocation9 + $0x188] sm:$0xff]
        %v1989 = vld [vmem:[#allocation9 + $0x190] sm:$0xff]
        %v1990 = vld [vmem:[#allocation9 + $0x198] sm:$0xff]
        %v1991 = vld [vmem:[#allocation9 + $0x1a0] sm:$0xff]
        %v1992 = vld [vmem:[#allocation9 + $0x1a8] sm:$0xff]
        %v1993 = vld [vmem:[#allocation9 + $0x1b0] sm:$0xff]
        %v1994 = vld [vmem:[#allocation9 + $0x1b8] sm:$0xff]
        %v1995 = vld [vmem:[#allocation9 + $0x1c0] sm:$0xff]
        %v1996 = vld [vmem:[#allocation9 + $0x1c8] sm:$0xff]
        %v1997 = vld [vmem:[#allocation9 + $0x1d0] sm:$0xff]
        %v1998 = vld [vmem:[#allocation9 + $0x1d8] sm:$0xff]
        %v1999 = vld [vmem:[#allocation9 + $0x1e0] sm:$0xff]
        %v2000 = vld [vmem:[#allocation9 + $0x1e8] sm:$0xff]
        %v2001 = vld [vmem:[#allocation9 + $0x1f0] sm:$0xff]
        %v2002 = vld [vmem:[#allocation9 + $0x1f8] sm:$0xff]
        %v2003 = vld [vmem:[#allocation9 + $0x200] sm:$0xff]
        %v2004 = vld [vmem:[#allocation9 + $0x208] sm:$0xff]
        %v2005 = vld [vmem:[#allocation9 + $0x210] sm:$0xff]
        %v2006 = vld [vmem:[#allocation9 + $0x218] sm:$0xff]
        %v2007 = vld [vmem:[#allocation9 + $0x220] sm:$0xff]
        %v2008 = vld [vmem:[#allocation9 + $0x228] sm:$0xff]
        %v2009 = vld [vmem:[#allocation9 + $0x230] sm:$0xff]
        %v2010 = vld [vmem:[#allocation9 + $0x238] sm:$0xff]
        %v2011 = vld [vmem:[#allocation9 + $0x240] sm:$0xff]
        %v2012 = vld [vmem:[#allocation9 + $0x248] sm:$0xff]
        %v2013 = vld [vmem:[#allocation9 + $0x250] sm:$0xff]
        %v2014 = vld [vmem:[#allocation9 + $0x258] sm:$0xff]
        %v2015 = vld [vmem:[#allocation9 + $0x260] sm:$0xff]
        %v2016 = vld [vmem:[#allocation9 + $0x268] sm:$0xff]
        %v2017 = vld [vmem:[#allocation9 + $0x270] sm:$0xff]
        %v2018 = vld [vmem:[#allocation9 + $0x278] sm:$0xff]
        %v2019 = vld [vmem:[#allocation9 + $0x280] sm:$0xff]
        %v2020 = vld [vmem:[#allocation9 + $0x288] sm:$0xff]
        %v2021 = vld [vmem:[#allocation9 + $0x290] sm:$0xff]
        %v2022 = vld [vmem:[#allocation9 + $0x298] sm:$0xff]
        %v2023 = vld [vmem:[#allocation9 + $0x2a0] sm:$0xff]
        %v2024 = vld [vmem:[#allocation9 + $0x2a8] sm:$0xff]
        %v2025 = vld [vmem:[#allocation9 + $0x2b0] sm:$0xff]
        %v2026 = vld [vmem:[#allocation9 + $0x2b8] sm:$0xff]
        %v2027 = vld [vmem:[#allocation9 + $0x2c0] sm:$0xff]
        %v2028 = vld [vmem:[#allocation9 + $0x2c8] sm:$0xff]
        %v2029 = vld [vmem:[#allocation9 + $0x2d0] sm:$0xff]
        %v2030 = vld [vmem:[#allocation9 + $0x2d8] sm:$0xff]
        %v2031 = vld [vmem:[#allocation9 + $0x2e0] sm:$0xff]
        %v2032 = vld [vmem:[#allocation9 + $0x2e8] sm:$0xff]
        %v2033 = vld [vmem:[#allocation9 + $0x2f0] sm:$0xff]
        %v2034 = vld [vmem:[#allocation9 + $0x2f8] sm:$0xff]
        %v2035 = vld [vmem:[#allocation9 + $0x300] sm:$0xff]
        %v2036 = vld [vmem:[#allocation9 + $0x308] sm:$0xff]
        %v2037 = vld [vmem:[#allocation9 + $0x310] sm:$0xff]
        %v2038 = vld [vmem:[#allocation9 + $0x318] sm:$0xff]
        %v2039 = vld [vmem:[#allocation9 + $0x320] sm:$0xff]
        %v2040 = vld [vmem:[#allocation9 + $0x328] sm:$0xff]
        %v2041 = vld [vmem:[#allocation9 + $0x330] sm:$0xff]
        %v2042 = vld [vmem:[#allocation9 + $0x338] sm:$0xff]
        %v2043 = vld [vmem:[#allocation9 + $0x340] sm:$0xff]
        %v2044 = vld [vmem:[#allocation9 + $0x348] sm:$0xff]
        %v2045 = vld [vmem:[#allocation9 + $0x350] sm:$0xff]
        %v2046 = vld [vmem:[#allocation9 + $0x358] sm:$0xff]
        %v2047 = vld [vmem:[#allocation9 + $0x360] sm:$0xff]
        %v2048 = vld [vmem:[#allocation9 + $0x368] sm:$0xff]
        %v2049 = vld [vmem:[#allocation9 + $0x370] sm:$0xff]
        %v2050 = vld [vmem:[#allocation9 + $0x378] sm:$0xff]
        %v2051 = vld [vmem:[#allocation9 + $0x380] sm:$0xff]
        %v2052 = vld [vmem:[#allocation9 + $0x388] sm:$0xff]
        %v2053 = vld [vmem:[#allocation9 + $0x390] sm:$0xff]
        %v2054 = vld [vmem:[#allocation9 + $0x398] sm:$0xff]
        %v2055 = vld [vmem:[#allocation9 + $0x3a0] sm:$0xff]
        %v2056 = vld [vmem:[#allocation9 + $0x3a8] sm:$0xff]
        %v2057 = vld [vmem:[#allocation9 + $0x3b0] sm:$0xff]
        %v2058 = vld [vmem:[#allocation9 + $0x3b8] sm:$0xff]
        %v2059 = vld [vmem:[#allocation9 + $0x3c0] sm:$0xff]
        %v2060 = vld [vmem:[#allocation9 + $0x3c8] sm:$0xff]
        %v2061 = vld [vmem:[#allocation9 + $0x3d0] sm:$0xff]
        %v2062 = vld [vmem:[#allocation9 + $0x3d8] sm:$0xff]
        %v2063 = vld [vmem:[#allocation9 + $0x3e0] sm:$0xff]
        %v2064 = vld [vmem:[#allocation9 + $0x3e8] sm:$0xff]
        %v2065 = vld [vmem:[#allocation9 + $0x3f0] sm:$0xff]
        %v2066 = vld [vmem:[#allocation9 + $0x3f8] sm:$0xff]
        %v2067 = vld [vmem:[%s10] sm:$0xff]
        %v2069 = vlaneseq
        %v2070 = vshrl.u32 %v2069, 7
        %v2071 = vsub.s32 0, %v2070
        %v2072 = vrot.slane %v2067, %v2071
        %v2073 = vlaneseq
        %v2074 = vshrl.u32 %v2073, 7
        %v2075 = vsub.s32 1, %v2074
        %v2076 = vrot.slane %v2067, %v2075
        %v2077 = vlaneseq
        %v2078 = vshrl.u32 %v2077, 7
        %v2079 = vsub.s32 2, %v2078
        %v2080 = vrot.slane %v2067, %v2079
        %v2081 = vlaneseq
        %v2082 = vshrl.u32 %v2081, 7
        %v2083 = vsub.s32 3, %v2082
        %v2084 = vrot.slane %v2067, %v2083
        %v2085 = vlaneseq
        %v2086 = vshrl.u32 %v2085, 7
        %v2087 = vsub.s32 4, %v2086
        %v2088 = vrot.slane %v2067, %v2087
        %v2089 = vlaneseq
        %v2090 = vshrl.u32 %v2089, 7
        %v2091 = vsub.s32 5, %v2090
        %v2092 = vrot.slane %v2067, %v2091
        %v2093 = vlaneseq
        %v2094 = vshrl.u32 %v2093, 7
        %v2095 = vsub.s32 6, %v2094
        %v2096 = vrot.slane %v2067, %v2095
        %v2097 = vlaneseq
        %v2098 = vshrl.u32 %v2097, 7
        %v2099 = vsub.s32 7, %v2098
        %v2100 = vrot.slane %v2067, %v2099
        %2109 = vmatprep.subr.mxu0 %v1940
        %2110 = vmatpush1.msra.mxu0 %v1939
        %2111 = vmatprep.subr.mxu0 %v1948
        %2112 = vmatpush1.msra.mxu0 %v1947
        %2113 = vmatprep.subr.mxu0 %v1956
        %2114 = vmatpush1.msra.mxu0 %v1955
        %2115 = vmatprep.subr.mxu0 %v1964
        %2116 = vmatpush1.msra.mxu0 %v1963
        %2117 = vmatprep.subr.mxu0 %v1972
        %2118 = vmatpush1.msra.mxu0 %v1971
        %2119 = vmatprep.subr.mxu0 %v1980
        %2120 = vmatpush1.msra.mxu0 %v1979
        %2121 = vmatprep.subr.mxu0 %v1988
        %2122 = vmatpush1.msra.mxu0 %v1987
        %2123 = vmatprep.subr.mxu0 %v1996
        %2124 = vmatpush1.msra.mxu0 %v1995
        %2125 = vmatprep.subr.mxu0 %v2004
        %2126 = vmatpush1.msra.mxu0 %v2003
        %2127 = vmatprep.subr.mxu0 %v2012
        %2128 = vmatpush1.msra.mxu0 %v2011
        %2129 = vmatprep.subr.mxu0 %v2020
        %2130 = vmatpush1.msra.mxu0 %v2019
        %2131 = vmatprep.subr.mxu0 %v2028
        %2132 = vmatpush1.msra.mxu0 %v2027
        %2133 = vmatprep.subr.mxu0 %v2036
        %2134 = vmatpush1.msra.mxu0 %v2035
        %2135 = vmatprep.subr.mxu0 %v2044
        %2136 = vmatpush1.msra.mxu0 %v2043
        %2137 = vmatprep.subr.mxu0 %v2052
        %2138 = vmatpush1.msra.mxu0 %v2051
        %2139 = vmatprep.subr.mxu0 %v2060
        %2140 = vmatpush1.msra.mxu0 %v2059
        %2141 = vmatprep.subr.mxu0 0.0
        %2142 = vmatpush1.msra.mxu0 0.0
        %2143 = vmatprep.subr.mxu0 0.0
        %2144 = vmatpush1.msra.mxu0 0.0
        %2145 = vmatprep.subr.mxu0 0.0
        %2146 = vmatpush1.msra.mxu0 0.0
        %2147 = vmatprep.subr.mxu0 0.0
        %2148 = vmatpush1.msra.mxu0 0.0
        %2149 = vmatprep.subr.mxu0 0.0
        %2150 = vmatpush1.msra.mxu0 0.0
        %2151 = vmatprep.subr.mxu0 0.0
        %2152 = vmatpush1.msra.mxu0 0.0
        %2153 = vmatprep.subr.mxu0 0.0
        %2154 = vmatpush1.msra.mxu0 0.0
        %2155 = vmatprep.subr.mxu0 0.0
        %2156 = vmatpush1.msra.mxu0 0.0
        %2157 = vmatprep.subr.mxu0 0.0
        %2158 = vmatpush1.msra.mxu0 0.0
        %2159 = vmatprep.subr.mxu0 0.0
        %2160 = vmatpush1.msra.mxu0 0.0
        %2161 = vmatprep.subr.mxu0 0.0
        %2162 = vmatpush1.msra.mxu0 0.0
        %2163 = vmatprep.subr.mxu0 0.0
        %2164 = vmatpush1.msra.mxu0 0.0
        %2165 = vmatprep.subr.mxu0 0.0
        %2166 = vmatpush1.msra.mxu0 0.0
        %2167 = vmatprep.subr.mxu0 0.0
        %2168 = vmatpush1.msra.mxu0 0.0
        %2169 = vmatprep.subr.mxu0 0.0
        %2170 = vmatpush1.msra.mxu0 0.0
        %2171 = vmatprep.subr.mxu0 0.0
        %2172 = vmatpush1.msra.mxu0 0.0
        %2173 = vmatprep.mubr.f32.mxu0 0.0
        %2174 = vmatmul.mubr.f32.gmra.mrb[0].mxu0 %v1936
        %v2175 = vpop.f32.mrb[0].mxu0
        %v2176 = vadd.f32 %v2072, %v2175
        %v2177 = vpop.f32.mrb[0].mxu0
        %v2178 = vadd.f32 %v2076, %v2177
        %2179 = vdwg.mxu0
        %2180 = vmatprep.subr.mxu0 %v1942
        %2181 = vmatpush1.msra.mxu0 %v1941
        %2182 = vmatprep.subr.mxu0 %v1950
        %2183 = vmatpush1.msra.mxu0 %v1949
        %2184 = vmatprep.subr.mxu0 %v1958
        %2185 = vmatpush1.msra.mxu0 %v1957
        %2186 = vmatprep.subr.mxu0 %v1966
        %2187 = vmatpush1.msra.mxu0 %v1965
        %2188 = vmatprep.subr.mxu0 %v1974
        %2189 = vmatpush1.msra.mxu0 %v1973
        %2190 = vmatprep.subr.mxu0 %v1982
        %2191 = vmatpush1.msra.mxu0 %v1981
        %2192 = vmatprep.subr.mxu0 %v1990
        %2193 = vmatpush1.msra.mxu0 %v1989
        %2194 = vmatprep.subr.mxu0 %v1998
        %2195 = vmatpush1.msra.mxu0 %v1997
        %2196 = vmatprep.subr.mxu0 %v2006
        %2197 = vmatpush1.msra.mxu0 %v2005
        %2198 = vmatprep.subr.mxu0 %v2014
        %2199 = vmatpush1.msra.mxu0 %v2013
        %2200 = vmatprep.subr.mxu0 %v2022
        %2201 = vmatpush1.msra.mxu0 %v2021
        %2202 = vmatprep.subr.mxu0 %v2030
        %2203 = vmatpush1.msra.mxu0 %v2029
        %2204 = vmatprep.subr.mxu0 %v2038
        %2205 = vmatpush1.msra.mxu0 %v2037
        %2206 = vmatprep.subr.mxu0 %v2046
        %2207 = vmatpush1.msra.mxu0 %v2045
        %2208 = vmatprep.subr.mxu0 %v2054
        %2209 = vmatpush1.msra.mxu0 %v2053
        %2210 = vmatprep.subr.mxu0 %v2062
        %2211 = vmatpush1.msra.mxu0 %v2061
        %2212 = vmatprep.subr.mxu0 0.0
        %2213 = vmatpush1.msra.mxu0 0.0
        %2214 = vmatprep.subr.mxu0 0.0
        %2215 = vmatpush1.msra.mxu0 0.0
        %2216 = vmatprep.subr.mxu0 0.0
        %2217 = vmatpush1.msra.mxu0 0.0
        %2218 = vmatprep.subr.mxu0 0.0
        %2219 = vmatpush1.msra.mxu0 0.0
        %2220 = vmatprep.subr.mxu0 0.0
        %2221 = vmatpush1.msra.mxu0 0.0
        %2222 = vmatprep.subr.mxu0 0.0
        %2223 = vmatpush1.msra.mxu0 0.0
        %2224 = vmatprep.subr.mxu0 0.0
        %2225 = vmatpush1.msra.mxu0 0.0
        %2226 = vmatprep.subr.mxu0 0.0
        %2227 = vmatpush1.msra.mxu0 0.0
        %2228 = vmatprep.subr.mxu0 0.0
        %2229 = vmatpush1.msra.mxu0 0.0
        %2230 = vmatprep.subr.mxu0 0.0
        %2231 = vmatpush1.msra.mxu0 0.0
        %2232 = vmatprep.subr.mxu0 0.0
        %2233 = vmatpush1.msra.mxu0 0.0
        %2234 = vmatprep.subr.mxu0 0.0
        %2235 = vmatpush1.msra.mxu0 0.0
        %2236 = vmatprep.subr.mxu0 0.0
        %2237 = vmatpush1.msra.mxu0 0.0
        %2238 = vmatprep.subr.mxu0 0.0
        %2239 = vmatpush1.msra.mxu0 0.0
        %2240 = vmatprep.subr.mxu0 0.0
        %2241 = vmatpush1.msra.mxu0 0.0
        %2242 = vmatprep.subr.mxu0 0.0
        %2243 = vmatpush1.msra.mxu0 0.0
        %2244 = vmatprep.mubr.f32.mxu0 0.0
        %2245 = vmatmul.mubr.f32.gmra.mrb[0].mxu0 %v1936
        %v2246 = vpop.f32.mrb[0].mxu0
        %v2247 = vadd.f32 %v2080, %v2246
        %v2248 = vpop.f32.mrb[0].mxu0
        %v2249 = vadd.f32 %v2084, %v2248
        %2250 = vdwg.mxu0
        %2251 = vmatprep.subr.mxu0 %v1944
        %2252 = vmatpush1.msra.mxu0 %v1943
        %2253 = vmatprep.subr.mxu0 %v1952
        %2254 = vmatpush1.msra.mxu0 %v1951
        %2255 = vmatprep.subr.mxu0 %v1960
        %2256 = vmatpush1.msra.mxu0 %v1959
        %2257 = vmatprep.subr.mxu0 %v1968
        %2258 = vmatpush1.msra.mxu0 %v1967
        %2259 = vmatprep.subr.mxu0 %v1976
        %2260 = vmatpush1.msra.mxu0 %v1975
        %2261 = vmatprep.subr.mxu0 %v1984
        %2262 = vmatpush1.msra.mxu0 %v1983
        %2263 = vmatprep.subr.mxu0 %v1992
        %2264 = vmatpush1.msra.mxu0 %v1991
        %2265 = vmatprep.subr.mxu0 %v2000
        %2266 = vmatpush1.msra.mxu0 %v1999
        %2267 = vmatprep.subr.mxu0 %v2008
        %2268 = vmatpush1.msra.mxu0 %v2007
        %2269 = vmatprep.subr.mxu0 %v2016
        %2270 = vmatpush1.msra.mxu0 %v2015
        %2271 = vmatprep.subr.mxu0 %v2024
        %2272 = vmatpush1.msra.mxu0 %v2023
        %2273 = vmatprep.subr.mxu0 %v2032
        %2274 = vmatpush1.msra.mxu0 %v2031
        %2275 = vmatprep.subr.mxu0 %v2040
        %2276 = vmatpush1.msra.mxu0 %v2039
        %2277 = vmatprep.subr.mxu0 %v2048
        %2278 = vmatpush1.msra.mxu0 %v2047
        %2279 = vmatprep.subr.mxu0 %v2056
        %2280 = vmatpush1.msra.mxu0 %v2055
        %2281 = vmatprep.subr.mxu0 %v2064
        %2282 = vmatpush1.msra.mxu0 %v2063
        %2283 = vmatprep.subr.mxu0 0.0
        %2284 = vmatpush1.msra.mxu0 0.0
        %2285 = vmatprep.subr.mxu0 0.0
        %2286 = vmatpush1.msra.mxu0 0.0
        %2287 = vmatprep.subr.mxu0 0.0
        %2288 = vmatpush1.msra.mxu0 0.0
        %2289 = vmatprep.subr.mxu0 0.0
        %2290 = vmatpush1.msra.mxu0 0.0
        %2291 = vmatprep.subr.mxu0 0.0
        %2292 = vmatpush1.msra.mxu0 0.0
        %2293 = vmatprep.subr.mxu0 0.0
        %2294 = vmatpush1.msra.mxu0 0.0
        %2295 = vmatprep.subr.mxu0 0.0
        %2296 = vmatpush1.msra.mxu0 0.0
        %2297 = vmatprep.subr.mxu0 0.0
        %2298 = vmatpush1.msra.mxu0 0.0
        %2299 = vmatprep.subr.mxu0 0.0
        %2300 = vmatpush1.msra.mxu0 0.0
        %2301 = vmatprep.subr.mxu0 0.0
        %2302 = vmatpush1.msra.mxu0 0.0
        %2303 = vmatprep.subr.mxu0 0.0
        %2304 = vmatpush1.msra.mxu0 0.0
        %2305 = vmatprep.subr.mxu0 0.0
        %2306 = vmatpush1.msra.mxu0 0.0
        %2307 = vmatprep.subr.mxu0 0.0
        %2308 = vmatpush1.msra.mxu0 0.0
        %2309 = vmatprep.subr.mxu0 0.0
        %2310 = vmatpush1.msra.mxu0 0.0
        %2311 = vmatprep.subr.mxu0 0.0
        %2312 = vmatpush1.msra.mxu0 0.0
        %2313 = vmatprep.subr.mxu0 0.0
        %2314 = vmatpush1.msra.mxu0 0.0
        %2315 = vmatprep.mubr.f32.mxu0 0.0
        %2316 = vmatmul.mubr.f32.gmra.mrb[0].mxu0 %v1936
        %v2317 = vpop.f32.mrb[0].mxu0
        %v2318 = vadd.f32 %v2088, %v2317
        %v2319 = vpop.f32.mrb[0].mxu0
        %v2320 = vadd.f32 %v2092, %v2319
        %2321 = vdwg.mxu0
        %2322 = vmatprep.subr.mxu0 %v1946
        %2323 = vmatpush1.msra.mxu0 %v1945
        %2324 = vmatprep.subr.mxu0 %v1954
        %2325 = vmatpush1.msra.mxu0 %v1953
        %2326 = vmatprep.subr.mxu0 %v1962
        %2327 = vmatpush1.msra.mxu0 %v1961
        %2328 = vmatprep.subr.mxu0 %v1970
        %2329 = vmatpush1.msra.mxu0 %v1969
        %2330 = vmatprep.subr.mxu0 %v1978
        %2331 = vmatpush1.msra.mxu0 %v1977
        %2332 = vmatprep.subr.mxu0 %v1986
        %2333 = vmatpush1.msra.mxu0 %v1985
        %2334 = vmatprep.subr.mxu0 %v1994
        %2335 = vmatpush1.msra.mxu0 %v1993
        %2336 = vmatprep.subr.mxu0 %v2002
        %2337 = vmatpush1.msra.mxu0 %v2001
        %2338 = vmatprep.subr.mxu0 %v2010
        %2339 = vmatpush1.msra.mxu0 %v2009
        %2340 = vmatprep.subr.mxu0 %v2018
        %2341 = vmatpush1.msra.mxu0 %v2017
        %2342 = vmatprep.subr.mxu0 %v2026
        %2343 = vmatpush1.msra.mxu0 %v2025
        %2344 = vmatprep.subr.mxu0 %v2034
        %2345 = vmatpush1.msra.mxu0 %v2033
        %2346 = vmatprep.subr.mxu0 %v2042
        %2347 = vmatpush1.msra.mxu0 %v2041
        %2348 = vmatprep.subr.mxu0 %v2050
        %2349 = vmatpush1.msra.mxu0 %v2049
        %2350 = vmatprep.subr.mxu0 %v2058
        %2351 = vmatpush1.msra.mxu0 %v2057
        %2352 = vmatprep.subr.mxu0 %v2066
        %2353 = vmatpush1.msra.mxu0 %v2065
        %2354 = vmatprep.subr.mxu0 0.0
        %2355 = vmatpush1.msra.mxu0 0.0
        %2356 = vmatprep.subr.mxu0 0.0
        %2357 = vmatpush1.msra.mxu0 0.0
        %2358 = vmatprep.subr.mxu0 0.0
        %2359 = vmatpush1.msra.mxu0 0.0
        %2360 = vmatprep.subr.mxu0 0.0
        %2361 = vmatpush1.msra.mxu0 0.0
        %2362 = vmatprep.subr.mxu0 0.0
        %2363 = vmatpush1.msra.mxu0 0.0
        %2364 = vmatprep.subr.mxu0 0.0
        %2365 = vmatpush1.msra.mxu0 0.0
        %2366 = vmatprep.subr.mxu0 0.0
        %2367 = vmatpush1.msra.mxu0 0.0
        %2368 = vmatprep.subr.mxu0 0.0
        %2369 = vmatpush1.msra.mxu0 0.0
        %2370 = vmatprep.subr.mxu0 0.0
        %2371 = vmatpush1.msra.mxu0 0.0
        %2372 = vmatprep.subr.mxu0 0.0
        %2373 = vmatpush1.msra.mxu0 0.0
        %2374 = vmatprep.subr.mxu0 0.0
        %2375 = vmatpush1.msra.mxu0 0.0
        %2376 = vmatprep.subr.mxu0 0.0
        %2377 = vmatpush1.msra.mxu0 0.0
        %2378 = vmatprep.subr.mxu0 0.0
        %2379 = vmatpush1.msra.mxu0 0.0
        %2380 = vmatprep.subr.mxu0 0.0
        %2381 = vmatpush1.msra.mxu0 0.0
        %2382 = vmatprep.subr.mxu0 0.0
        %2383 = vmatpush1.msra.mxu0 0.0
        %2384 = vmatprep.subr.mxu0 0.0
        %2385 = vmatpush1.msra.mxu0 0.0
        %2386 = vmatprep.mubr.f32.mxu0 0.0
        %2387 = vmatmul.mubr.f32.gmra.mrb[0].mxu0 %v1936
        %v2388 = vpop.f32.mrb[0].mxu0
        %v2389 = vadd.f32 %v2096, %v2388
        %v2390 = vpop.f32.mrb[0].mxu0
        %v2391 = vadd.f32 %v2100, %v2390
        %2392 = vdwg.mxu0
        %v2393 = vxor.u32 %v2176, 2147483648
        %v2394 = vxor.u32 %v2178, 2147483648
        %v2395 = vxor.u32 %v2247, 2147483648
        %v2396 = vxor.u32 %v2249, 2147483648
        %v2397 = vxor.u32 %v2318, 2147483648
        %v2398 = vxor.u32 %v2320, 2147483648
        %v2399 = vxor.u32 %v2389, 2147483648
        %v2400 = vxor.u32 %v2391, 2147483648
        %v2401 = vmul.f32 %v2393, 1.442695
        %v2402 = vpow.pop %v2401
        %v2403 = vmul.f32 %v2394, 1.442695
        %v2404 = vpow.pop %v2403
        %v2405 = vmul.f32 %v2395, 1.442695
        %v2406 = vpow.pop %v2405
        %v2407 = vmul.f32 %v2396, 1.442695
        %v2408 = vpow.pop %v2407
        %v2409 = vmul.f32 %v2397, 1.442695
        %v2410 = vpow.pop %v2409
        %v2411 = vmul.f32 %v2398, 1.442695
        %v2412 = vpow.pop %v2411
        %v2413 = vmul.f32 %v2399, 1.442695
        %v2414 = vpow.pop %v2413
        %v2415 = vmul.f32 %v2400, 1.442695
        %v2416 = vpow.pop %v2415
        %v2417 = vadd.f32 %v2402, 1.0
        %v2418 = vadd.f32 %v2404, 1.0
        %v2419 = vadd.f32 %v2406, 1.0
        %v2420 = vadd.f32 %v2408, 1.0
        %v2421 = vadd.f32 %v2410, 1.0
        %v2422 = vadd.f32 %v2412, 1.0
        %v2423 = vadd.f32 %v2414, 1.0
        %v2424 = vadd.f32 %v2416, 1.0
        %v2425 = vrcp.pop %v2417
        %v2426 = vmul.f32 1.0, %v2425
        %v2427 = vrcp.pop %v2418
        %v2428 = vmul.f32 1.0, %v2427
        %v2429 = vrcp.pop %v2419
        %v2430 = vmul.f32 1.0, %v2429
        %v2431 = vrcp.pop %v2420
        %v2432 = vmul.f32 1.0, %v2431
        %v2433 = vrcp.pop %v2421
        %v2434 = vmul.f32 1.0, %v2433
        %v2435 = vrcp.pop %v2422
        %v2436 = vmul.f32 1.0, %v2435
        %v2437 = vrcp.pop %v2423
        %v2438 = vmul.f32 1.0, %v2437
        %v2439 = vrcp.pop %v2424
        %v2440 = vmul.f32 1.0, %v2439
        %2441 = vst [vmem:[%s11] sm:$0xff] %v1185
        %2442 = vst [vmem:[%s11 + $0x8] sm:$0xff] %v1202
        %2443 = vst [vmem:[%s12] sm:$0xff] %v2426
        %2444 = vst [vmem:[%s12 + $0x8] sm:$0xff] %v2428
        %2445 = vst [vmem:[%s12 + $0x10] sm:$0xff] %v2430
        %2446 = vst [vmem:[%s12 + $0x18] sm:$0xff] %v2432
        %2447 = vst [vmem:[%s12 + $0x20] sm:$0xff] %v2434
        %2448 = vst [vmem:[%s12 + $0x28] sm:$0xff] %v2436
        %2449 = vst [vmem:[%s12 + $0x30] sm:$0xff] %v2438
        %2450 = vst [vmem:[%s12 + $0x38] sm:$0xff] %v2440
        // Predicated region
        $region85: #{_lambda_.1} parent=63 // pred_check
          %p2451 = pneg %p281
        $region86: #{_lambda_.1} parent=63 // pred_check_branch
          %2453 = sbr.rel (%p2451) target = $region88
        $region87: #{_lambda_.1} parent=63 // pred_region
          _
        $region88: #{_lambda_.1} parent=63 // pred_fallthru
          _
        // Predicated region
        $region89: #{_lambda_.1} parent=63 // pred_check
          %p2454 = pneg %p302
        $region90: #{_lambda_.1} parent=63 // pred_check_branch
          %2456 = sbr.rel (%p2454) target = $region92
        $region91: #{_lambda_.1} parent=63 // pred_region
          _
        $region92: #{_lambda_.1} parent=63 // pred_fallthru
          _
        // Predicated region
        $region93: #{_lambda_.1} parent=63 // pred_check
          %p2457 = pneg %p281
        $region94: #{_lambda_.1} parent=63 // pred_check_branch
          %2459 = sbr.rel (%p2457) target = $region96
        $region95: #{_lambda_.1} parent=63 // pred_region
          _
        $region96: #{_lambda_.1} parent=63 // pred_fallthru
          _
        // Predicated region
        $region97: #{_lambda_.1} parent=63 // pred_check
          %p2460 = pneg %p302
        $region98: #{_lambda_.1} parent=63 // pred_check_branch
          %2462 = sbr.rel (%p2460) target = $region100
        $region99: #{_lambda_.1} parent=63 // pred_region
          _
        $region100: #{_lambda_.1} parent=63 // pred_fallthru
          _
      $region64: #{_lambda_.1} parent=5 // pred_fallthru
        _
      %p2463 = scmp.le.s32.totalorder 2, %s22
      // Predicated region
      $region101: #{_lambda_.1} parent=5 // pred_check
        %p2464 = pneg %p2463
      $region102: #{_lambda_.1} parent=5 // pred_check_branch
        %2466 = sbr.rel (%p2464) target = $region104
      $region103: #{_lambda_.1} parent=5 // pred_region
        %s2467 = ssub.s32 %s22, 2
      $region104: #{_lambda_.1} parent=5 // pred_fallthru
        _
    $region6: #{_lambda_.1} parent=1 // loop_footer
      %s26 = sadd.s32 1, %s22
    $region7: #{_lambda_.1} parent=1 // loop_footer_branch
      %21 = sbr.rel target = $region3
    $region8: #{_lambda_.1} parent=1 // loop_exit
      _
    %2468 = vsyncpa [#allocation5], 1
    %s2469 = scalar_lea.sflag [#allocation5], 1
    %2470 = vsyncpa %s2469, 1
    %2471 = vsyncpa [#allocation7], 1
    %2472 = vsyncpa [#allocation10], 1

</llo_original>
